<compile_context>
chip_gen: v7x
topology: tpu7x:2x2x1
jax: 0.10.0
libtpu: 0.0.40
codegen_flags: <defaults>
</compile_context>

<pallas_src>
import functools

import jax
import jax.numpy as jnp
import numpy as np
from jax import lax
from jax.experimental import pallas as pl
from jax.experimental.pallas import tpu as pltpu


def _round_up(x, m):
    return (x + m - 1) // m * m


# ----------------------------------------------------------------------------
# Pallas kernel: tiled matmul + bias + LeakyReLU, f32 VMEM accumulator.
# ----------------------------------------------------------------------------
def _mm_bias_act_kernel(x_ref, w_ref, b_ref, o_ref, acc_ref, *, alpha, has_bias):
    k = pl.program_id(2)

    @pl.when(k == 0)
    def _():
        acc_ref[...] = jnp.zeros_like(acc_ref)

    acc_ref[...] += jnp.dot(
        x_ref[...], w_ref[...], preferred_element_type=jnp.float32
    )

    @pl.when(k == pl.num_programs(2) - 1)
    def _():
        acc = acc_ref[...]
        if has_bias:                       # static: middle convs skip the add
            acc = acc + b_ref[...]
        if alpha != 1.0:                   # static: final conv skips the select
            acc = jnp.where(acc >= 0, acc, alpha * acc)
        o_ref[...] = acc.astype(o_ref.dtype)


def matmul_bias_act(patches, w_mat, bias, *, cout, alpha, has_bias, out_dtype):
    """patches: [M, Kp] bf16; w_mat: [Kp, Cp] bf16 (Kp, Cp multiples of 128);
    bias: [1, Cp] f32.  Returns [M, cout] in out_dtype."""
    M, K = patches.shape
    Kp, Cp = w_mat.shape
    assert K == Kp and Kp % 128 == 0 and Cp % 128 == 0

    # Tile sizes: MXU-friendly, lane-dense output (tn multiple of 128).
    tm = min(256, _round_up(M, 8))
    Mp = _round_up(M, tm)
    tn = 256 if (Cp % 256 == 0) else 128
    if Kp <= 512:
        tk = Kp
    elif Kp % 512 == 0:
        tk = 512
    elif Kp % 256 == 0:
        tk = 256
    else:
        tk = 128

    if Mp != M:
        patches = jnp.pad(patches, ((0, Mp - M), (0, 0)))

    grid = (Mp // tm, Cp // tn, Kp // tk)
    kernel = functools.partial(_mm_bias_act_kernel, alpha=alpha, has_bias=has_bias)

    out_bytes = jnp.dtype(out_dtype).itemsize
    cost = pl.CostEstimate(
        flops=2 * Mp * Kp * Cp,
        transcendentals=0,
        bytes_accessed=Mp * Kp * 2 + Kp * Cp * 2 + Cp * 4 + Mp * Cp * out_bytes,
    )

    out = pl.pallas_call(
        kernel,
        out_shape=jax.ShapeDtypeStruct((Mp, Cp), out_dtype),
        grid_spec=pltpu.PrefetchScalarGridSpec(
            num_scalar_prefetch=0,
            grid=grid,
            in_specs=[
                pl.BlockSpec((tm, tk), lambda i, j, k: (i, k)),
                pl.BlockSpec((tk, tn), lambda i, j, k: (k, j)),
                pl.BlockSpec((1, tn), lambda i, j, k: (0, j)),
            ],
            out_specs=pl.BlockSpec((tm, tn), lambda i, j, k: (i, j)),
            scratch_shapes=[pltpu.VMEM((tm, tn), jnp.float32)],
        ),
        compiler_params=pltpu.CompilerParams(
            dimension_semantics=("parallel", "parallel", "arbitrary"),
            vmem_limit_bytes=32 * 1024 * 1024,
        ),
        cost_estimate=cost,
    )(patches, w_mat, bias)
    return out[:M, :cout]


# ----------------------------------------------------------------------------
# Glue: NHWC im2col (layout only), spectral norm, layer driver.
# ----------------------------------------------------------------------------
# TODO(synk): build the kh*kw patch taps inside the kernel (input tile + halo
# DMA'd to VMEM, static shifted slices before the dot) to avoid materializing
# the 16x im2col slab in HBM.
def _im2col_nhwc(x, kh, kw, stride, pad):
    n, h, w, c = x.shape
    xp = jnp.pad(x, ((0, 0), (pad, pad), (pad, pad), (0, 0)))
    ho = (h + 2 * pad - kh) // stride + 1
    wo = (w + 2 * pad - kw) // stride + 1
    taps = []
    for i in range(kh):
        for j in range(kw):
            taps.append(xp[:, i:i + stride * ho:stride, j:j + stride * wo:stride, :])
    # [N, Ho, Wo, kh*kw, C] -> [M, K]; K order = tap-major, channel-minor
    p = jnp.stack(taps, axis=3).reshape(n * ho * wo, kh * kw * c)
    return p, ho, wo


def spectral_normalize(w, u, eps=1e-12):
    # One power iteration (torch.nn.utils.spectral_norm semantics).
    # TODO(synk): updated `u` is not persisted (inference-style single step).
    w_mat = w.reshape(w.shape[0], -1)

    def l2n(v):
        return v / (jnp.linalg.norm(v) + eps)

    v = l2n(w_mat.T @ u)
    u = l2n(w_mat @ v)
    sigma = u @ (w_mat @ v)
    return w / sigma


def conv_layer_nhwc(x, layer):
    n = x.shape[0]
    kh = kw = 4
    patches, ho, wo = _im2col_nhwc(x, kh, kw, layer["stride"], 1)
    K = patches.shape[1]
    Kp = layer["w_mat"].shape[0]
    if Kp != K:
        patches = jnp.pad(patches, ((0, 0), (0, Kp - K)))
    out = matmul_bias_act(
        patches, layer["w_mat"], layer["b_pad"],
        cout=layer["cout"], alpha=layer["alpha"],
        has_bias=layer["has_bias"], out_dtype=layer["out_dtype"],
    )
    return out.reshape(n, ho, wo, layer["cout"])


# ----------------------------------------------------------------------------
# Parameters: deterministic construction + one-time matmul-ready preparation.
# ----------------------------------------------------------------------------
def init_params(key, input_nc, ndf, n_layers):
    kwsz = 4
    layers = []

    def mk_w(k, cout, cin):
        return jax.random.normal(k, (cout, cin, kwsz, kwsz), jnp.float32) * 0.02

    keys = jax.random.split(key, 2 * (n_layers + 2))
    ki = 0

    # first conv: bias, no spectral norm, stride 2, LeakyReLU(0.2)
    c_in, c_out = input_nc, ndf
    layers.append(dict(w=mk_w(keys[ki], c_out, c_in),
                       b=jnp.zeros((c_out,), jnp.float32),
                       stride=2, spectral=False, u=None,
                       alpha=0.2, has_bias=True))
    ki += 1

    nf_mult = 1
    for n in range(1, n_layers):
        nf_mult_prev, nf_mult = nf_mult, min(2 ** n, 8)
        c_in, c_out = ndf * nf_mult_prev, ndf * nf_mult
        layers.append(dict(w=mk_w(keys[ki], c_out, c_in),
                           b=jnp.zeros((c_out,), jnp.float32),
                           stride=2, spectral=True,
                           u=jax.random.normal(keys[ki + n_layers + 2],
                                               (c_out,), jnp.float32),
                           alpha=0.2, has_bias=False))
        ki += 1

    nf_mult_prev, nf_mult = nf_mult, min(2 ** n_layers, 8)
    c_in, c_out = ndf * nf_mult_prev, ndf * nf_mult
    layers.append(dict(w=mk_w(keys[ki], c_out, c_in),
                       b=jnp.zeros((c_out,), jnp.float32),
                       stride=1, spectral=True,
                       u=jax.random.normal(keys[ki + n_layers + 2],
                                           (c_out,), jnp.float32),
                       alpha=0.2, has_bias=False))
    ki += 1

    # final conv: bias, no spectral norm, stride 1, no activation
    layers.append(dict(w=mk_w(keys[ki], 1, ndf * nf_mult),
                       b=jnp.zeros((1,), jnp.float32),
                       stride=1, spectral=False, u=None,
                       alpha=1.0, has_bias=True))
    return layers


def prepare_layers(raw_layers):
    """One-time: spectral norm, K reorder, padding to 128-aligned K/Cout, bf16."""
    prepared = []
    n_last = len(raw_layers) - 1
    for idx, lyr in enumerate(raw_layers):
        w = lyr["w"]
        if lyr["spectral"]:
            w = spectral_normalize(w, lyr["u"])
        cout, cin, kh, kw = w.shape
        K = kh * kw * cin
        Kp = _round_up(K, 128)
        Cp = _round_up(cout, 128)
        # (kh, kw, cin)-major K order matches the NHWC im2col patches.
        w_mat = jnp.transpose(w, (2, 3, 1, 0)).reshape(K, cout)
        w_mat = jnp.pad(w_mat, ((0, Kp - K), (0, Cp - cout))).astype(jnp.bfloat16)
        b_pad = jnp.pad(lyr["b"], (0, Cp - cout)).reshape(1, Cp).astype(jnp.float32)
        prepared.append(dict(
            w_mat=w_mat, b_pad=b_pad, cout=cout, stride=lyr["stride"],
            alpha=lyr["alpha"], has_bias=lyr["has_bias"],
            out_dtype=jnp.float32 if idx == n_last else jnp.bfloat16,
            w_f32=w, b_f32=lyr["b"]))   # f32 copies for the pure-JAX reference
    return prepared


# ----------------------------------------------------------------------------
# Forward passes
# ----------------------------------------------------------------------------
def nlayer_discriminator_forward(x_nchw, layers):
    x = jnp.transpose(x_nchw, (0, 2, 3, 1)).astype(jnp.bfloat16)  # NCHW -> NHWC
    for lyr in layers:
        x = conv_layer_nhwc(x, lyr)
    return jnp.transpose(x, (0, 3, 1, 2))                         # NHWC -> NCHW


def reference_forward(x_nchw, layers):
    """Pure-JAX f32 reference (lax.conv) with identical weights."""
    x = jnp.transpose(x_nchw, (0, 2, 3, 1))
    for lyr in layers:
        w_hwio = jnp.transpose(lyr["w_f32"], (2, 3, 1, 0))
        x = lax.conv_general_dilated(
            x, w_hwio, window_strides=(lyr["stride"],) * 2,
            padding=[(1, 1), (1, 1)],
            dimension_numbers=("NHWC", "HWIO", "NHWC"),
            precision=lax.Precision.HIGHEST)
        if lyr["has_bias"]:
            x = x + lyr["b_f32"]
        if lyr["alpha"] != 1.0:
            x = jnp.where(x >= 0, x, lyr["alpha"] * x)
    return jnp.transpose(x, (0, 3, 1, 2))


# ----------------------------------------------------------------------------
if __name__ == "__main__":
    key = jax.random.PRNGKey(0)
    k_x, k_p = jax.random.split(key)

    # small shapes consistent with the module: batch=2, input_nc=4, ndf=8,
    # spatial=32 (minimum that survives 5 k4 convs: 32->16->8->4->3->2)
    input_nc, ndf, n_layers = 4, 8, 3
    x = jax.random.normal(k_x, (2, input_nc, 32, 32), jnp.float32)

    raw = init_params(k_p, input_nc, ndf, n_layers)
    layers = prepare_layers(raw)

    fwd = jax.jit(lambda xx: nlayer_discriminator_forward(xx, layers))
    y = jax.block_until_ready(fwd(x))
    assert y.shape == (2, 1, 2, 2), y.shape

    # correctness check against a pure-JAX f32 reference (loose tol: bf16 path)
    y_ref = jax.block_until_ready(reference_forward(x, layers))
    np.testing.assert_allclose(np.asarray(y), np.asarray(y_ref),
                               rtol=2e-1, atol=5e-2)

    print("KERNEL_OK")
</pallas_src>

<mosaic_0001>
module attributes {stable_mosaic.version = 11 : i64} {
  func.func @_mm_bias_act_kernel(%arg0: i32, %arg1: i32, %arg2: i32, %arg3: memref<256x128xbf16, #tpu.memory_space<vmem>>, %arg4: memref<128x128xbf16, #tpu.memory_space<vmem>>, %arg5: memref<1x128xf32, #tpu.memory_space<vmem>>, %arg6: memref<256x128xbf16, #tpu.memory_space<vmem>>, %arg7: memref<256x128xf32, #tpu.memory_space<vmem>>) attributes {dimension_semantics = [#tpu.dimension_semantics<parallel>, #tpu.dimension_semantics<parallel>, #tpu.dimension_semantics<arbitrary>], iteration_bounds = array<i64: 2, 1, 1>, scalar_prefetch = 0 : i64, scratch_operands = 1 : i64, tpu.core_type = #tpu.core_type<tc>, window_params = [{transform_indices = @transform_0, window_bounds = array<i64: 256, 128>}, {transform_indices = @transform_1, window_bounds = array<i64: 128, 128>}, {transform_indices = @transform_2, window_bounds = array<i64: 1, 128>}, {transform_indices = @transform_3, window_bounds = array<i64: 256, 128>}]} {
    %c0_i32 = arith.constant 0 : i32
    %0 = arith.cmpi eq, %arg2, %c0_i32 : i32
    %1 = arith.extui %0 : i1 to i32
    %c0_i32_0 = arith.constant 0 : i32
    %2 = arith.cmpi ne, %1, %c0_i32_0 : i32
    scf.if %2 {
      %cst_10 = arith.constant 0.000000e+00 : f32
      %12 = vector.broadcast %cst_10 : f32 to vector<256x128xf32>
      %c0_11 = arith.constant 0 : index
      %c0_12 = arith.constant 0 : index
      %13 = vector.load %arg7[%c0_11, %c0_12] : memref<256x128xf32, #tpu.memory_space<vmem>>, vector<256x128xf32>
      tpu.vector_store %arg7[%c0_11, %c0_12], %12 {strides = array<i32>} : memref<256x128xf32, #tpu.memory_space<vmem>>, vector<256x128xf32>,
    } else {
    }
    %c0 = arith.constant 0 : index
    %c0_1 = arith.constant 0 : index
    %3 = vector.load %arg7[%c0, %c0_1] : memref<256x128xf32, #tpu.memory_space<vmem>>, vector<256x128xf32>
    %c0_2 = arith.constant 0 : index
    %c0_3 = arith.constant 0 : index
    %4 = vector.load %arg3[%c0_2, %c0_3] : memref<256x128xbf16, #tpu.memory_space<vmem>>, vector<256x128xbf16>
    %c0_4 = arith.constant 0 : index
    %c0_5 = arith.constant 0 : index
    %5 = vector.load %arg4[%c0_4, %c0_5] : memref<128x128xbf16, #tpu.memory_space<vmem>>, vector<128x128xbf16>
    %cst = arith.constant dense<0.000000e+00> : vector<256x128xf32>
    %6 = tpu.matmul %4, %5, %cst {dimension_numbers = #tpu.dot_dimension_numbers<[1], [0], [0], [1], [0, 0, 1, 1], [], []>} : vector<256x128xbf16>, vector<128x128xbf16>, vector<256x128xf32> -> vector<256x128xf32>
    %7 = arith.addf %3, %6 : vector<256x128xf32>
    %c0_6 = arith.constant 0 : index
    %c0_7 = arith.constant 0 : index
    %8 = vector.load %arg7[%c0_6, %c0_7] : memref<256x128xf32, #tpu.memory_space<vmem>>, vector<256x128xf32>
    tpu.vector_store %arg7[%c0_6, %c0_7], %7 {strides = array<i32>} : memref<256x128xf32, #tpu.memory_space<vmem>>, vector<256x128xf32>,
    %c0_i32_8 = arith.constant 0 : i32
    %9 = arith.cmpi eq, %arg2, %c0_i32_8 : i32
    %10 = arith.extui %9 : i1 to i32
    %c0_i32_9 = arith.constant 0 : i32
    %11 = arith.cmpi ne, %10, %c0_i32_9 : i32
    scf.if %11 {
      %c0_10 = arith.constant 0 : index
      %c0_11 = arith.constant 0 : index
      %12 = vector.load %arg7[%c0_10, %c0_11] : memref<256x128xf32, #tpu.memory_space<vmem>>, vector<256x128xf32>
      %c0_12 = arith.constant 0 : index
      %c0_13 = arith.constant 0 : index
      %13 = vector.load %arg5[%c0_12, %c0_13] : memref<1x128xf32, #tpu.memory_space<vmem>>, vector<1x128xf32>
      %14 = vector.broadcast %13 : vector<1x128xf32> to vector<256x128xf32>
      %15 = arith.addf %12, %14 : vector<256x128xf32>
      %cst_14 = arith.constant 0.000000e+00 : f32
      %16 = vector.broadcast %cst_14 : f32 to vector<256x128xf32>
      %17 = arith.cmpf oge, %15, %16 : vector<256x128xf32>
      %cst_15 = arith.constant 2.000000e-01 : f32
      %18 = vector.broadcast %cst_15 : f32 to vector<256x128xf32>
      %19 = arith.mulf %18, %15 : vector<256x128xf32>
      %20 = arith.select %17, %15, %19 : vector<256x128xi1>, vector<256x128xf32>
      %21 = arith.truncf %20 : vector<256x128xf32> to vector<256x128xbf16>
      %c0_16 = arith.constant 0 : index
      %c0_17 = arith.constant 0 : index
      %22 = vector.load %arg6[%c0_16, %c0_17] : memref<256x128xbf16, #tpu.memory_space<vmem>>, vector<256x128xbf16>
      tpu.vector_store %arg6[%c0_16, %c0_17], %21 {strides = array<i32>} : memref<256x128xbf16, #tpu.memory_space<vmem>>, vector<256x128xbf16>,
    } else {
    }
    return
  }
  func.func @transform_0(%arg0: i32, %arg1: i32, %arg2: i32) -> (i32, i32) {
    %c0_i32 = arith.constant 0 : i32
    return %arg0, %arg2 : i32, i32
  }
  func.func @transform_1(%arg0: i32, %arg1: i32, %arg2: i32) -> (i32, i32) {
    %c0_i32 = arith.constant 0 : i32
    return %arg2, %arg1 : i32, i32
  }
  func.func @transform_2(%arg0: i32, %arg1: i32, %arg2: i32) -> (i32, i32) {
    %c0_i32 = arith.constant 0 : i32
    %c0_i32_0 = arith.constant 0 : i32
    return %c0_i32, %arg1 : i32, i32
  }
  func.func @transform_3(%arg0: i32, %arg1: i32, %arg2: i32) -> (i32, i32) {
    %c0_i32 = arith.constant 0 : i32
    return %arg0, %arg1 : i32, i32
  }
}

module attributes {stable_mosaic.version = 11 : i64} {
  func.func @_mm_bias_act_kernel(%arg0: i32, %arg1: i32, %arg2: i32, %arg3: memref<128x128xbf16, #tpu.memory_space<vmem>>, %arg4: memref<128x128xbf16, #tpu.memory_space<vmem>>, %arg5: memref<1x128xf32, #tpu.memory_space<vmem>>, %arg6: memref<128x128xbf16, #tpu.memory_space<vmem>>, %arg7: memref<128x128xf32, #tpu.memory_space<vmem>>) attributes {dimension_semantics = [#tpu.dimension_semantics<parallel>, #tpu.dimension_semantics<parallel>, #tpu.dimension_semantics<arbitrary>], iteration_bounds = array<i64: 1, 1, 1>, scalar_prefetch = 0 : i64, scratch_operands = 1 : i64, tpu.core_type = #tpu.core_type<tc>, window_params = [{transform_indices = @transform_0, window_bounds = array<i64: 128, 128>}, {transform_indices = @transform_1, window_bounds = array<i64: 128, 128>}, {transform_indices = @transform_2, window_bounds = array<i64: 1, 128>}, {transform_indices = @transform_3, window_bounds = array<i64: 128, 128>}]} {
    %c0_i32 = arith.constant 0 : i32
    %0 = arith.cmpi eq, %arg2, %c0_i32 : i32
    %1 = arith.extui %0 : i1 to i32
    %c0_i32_0 = arith.constant 0 : i32
    %2 = arith.cmpi ne, %1, %c0_i32_0 : i32
    scf.if %2 {
      %cst_10 = arith.constant 0.000000e+00 : f32
      %12 = vector.broadcast %cst_10 : f32 to vector<128x128xf32>
      %c0_11 = arith.constant 0 : index
      %c0_12 = arith.constant 0 : index
      %13 = vector.load %arg7[%c0_11, %c0_12] : memref<128x128xf32, #tpu.memory_space<vmem>>, vector<128x128xf32>
      tpu.vector_store %arg7[%c0_11, %c0_12], %12 {strides = array<i32>} : memref<128x128xf32, #tpu.memory_space<vmem>>, vector<128x128xf32>,
    } else {
    }
    %c0 = arith.constant 0 : index
    %c0_1 = arith.constant 0 : index
    %3 = vector.load %arg7[%c0, %c0_1] : memref<128x128xf32, #tpu.memory_space<vmem>>, vector<128x128xf32>
    %c0_2 = arith.constant 0 : index
    %c0_3 = arith.constant 0 : index
    %4 = vector.load %arg3[%c0_2, %c0_3] : memref<128x128xbf16, #tpu.memory_space<vmem>>, vector<128x128xbf16>
    %c0_4 = arith.constant 0 : index
    %c0_5 = arith.constant 0 : index
    %5 = vector.load %arg4[%c0_4, %c0_5] : memref<128x128xbf16, #tpu.memory_space<vmem>>, vector<128x128xbf16>
    %cst = arith.constant dense<0.000000e+00> : vector<128x128xf32>
    %6 = tpu.matmul %4, %5, %cst {dimension_numbers = #tpu.dot_dimension_numbers<[1], [0], [0], [1], [0, 0, 1, 1], [], []>} : vector<128x128xbf16>, vector<128x128xbf16>, vector<128x128xf32> -> vector<128x128xf32>
    %7 = arith.addf %3, %6 : vector<128x128xf32>
    %c0_6 = arith.constant 0 : index
    %c0_7 = arith.constant 0 : index
    %8 = vector.load %arg7[%c0_6, %c0_7] : memref<128x128xf32, #tpu.memory_space<vmem>>, vector<128x128xf32>
    tpu.vector_store %arg7[%c0_6, %c0_7], %7 {strides = array<i32>} : memref<128x128xf32, #tpu.memory_space<vmem>>, vector<128x128xf32>,
    %c0_i32_8 = arith.constant 0 : i32
    %9 = arith.cmpi eq, %arg2, %c0_i32_8 : i32
    %10 = arith.extui %9 : i1 to i32
    %c0_i32_9 = arith.constant 0 : i32
    %11 = arith.cmpi ne, %10, %c0_i32_9 : i32
    scf.if %11 {
      %c0_10 = arith.constant 0 : index
      %c0_11 = arith.constant 0 : index
      %12 = vector.load %arg7[%c0_10, %c0_11] : memref<128x128xf32, #tpu.memory_space<vmem>>, vector<128x128xf32>
      %cst_12 = arith.constant 0.000000e+00 : f32
      %13 = vector.broadcast %cst_12 : f32 to vector<128x128xf32>
      %14 = arith.cmpf oge, %12, %13 : vector<128x128xf32>
      %cst_13 = arith.constant 2.000000e-01 : f32
      %15 = vector.broadcast %cst_13 : f32 to vector<128x128xf32>
      %16 = arith.mulf %15, %12 : vector<128x128xf32>
      %17 = arith.select %14, %12, %16 : vector<128x128xi1>, vector<128x128xf32>
      %18 = arith.truncf %17 : vector<128x128xf32> to vector<128x128xbf16>
      %c0_14 = arith.constant 0 : index
      %c0_15 = arith.constant 0 : index
      %19 = vector.load %arg6[%c0_14, %c0_15] : memref<128x128xbf16, #tpu.memory_space<vmem>>, vector<128x128xbf16>
      tpu.vector_store %arg6[%c0_14, %c0_15], %18 {strides = array<i32>} : memref<128x128xbf16, #tpu.memory_space<vmem>>, vector<128x128xbf16>,
    } else {
    }
    return
  }
  func.func @transform_0(%arg0: i32, %arg1: i32, %arg2: i32) -> (i32, i32) {
    %c0_i32 = arith.constant 0 : i32
    return %arg0, %arg2 : i32, i32
  }
  func.func @transform_1(%arg0: i32, %arg1: i32, %arg2: i32) -> (i32, i32) {
    %c0_i32 = arith.constant 0 : i32
    return %arg2, %arg1 : i32, i32
  }
  func.func @transform_2(%arg0: i32, %arg1: i32, %arg2: i32) -> (i32, i32) {
    %c0_i32 = arith.constant 0 : i32
    %c0_i32_0 = arith.constant 0 : i32
    return %c0_i32, %arg1 : i32, i32
  }
  func.func @transform_3(%arg0: i32, %arg1: i32, %arg2: i32) -> (i32, i32) {
    %c0_i32 = arith.constant 0 : i32
    return %arg0, %arg1 : i32, i32
  }
}

module attributes {stable_mosaic.version = 11 : i64} {
  func.func @_mm_bias_act_kernel(%arg0: i32, %arg1: i32, %arg2: i32, %arg3: memref<32x256xbf16, #tpu.memory_space<vmem>>, %arg4: memref<256x128xbf16, #tpu.memory_space<vmem>>, %arg5: memref<1x128xf32, #tpu.memory_space<vmem>>, %arg6: memref<32x128xbf16, #tpu.memory_space<vmem>>, %arg7: memref<32x128xf32, #tpu.memory_space<vmem>>) attributes {dimension_semantics = [#tpu.dimension_semantics<parallel>, #tpu.dimension_semantics<parallel>, #tpu.dimension_semantics<arbitrary>], iteration_bounds = array<i64: 1, 1, 1>, scalar_prefetch = 0 : i64, scratch_operands = 1 : i64, tpu.core_type = #tpu.core_type<tc>, window_params = [{transform_indices = @transform_0, window_bounds = array<i64: 32, 256>}, {transform_indices = @transform_1, window_bounds = array<i64: 256, 128>}, {transform_indices = @transform_2, window_bounds = array<i64: 1, 128>}, {transform_indices = @transform_3, window_bounds = array<i64: 32, 128>}]} {
    %c0_i32 = arith.constant 0 : i32
    %0 = arith.cmpi eq, %arg2, %c0_i32 : i32
    %1 = arith.extui %0 : i1 to i32
    %c0_i32_0 = arith.constant 0 : i32
    %2 = arith.cmpi ne, %1, %c0_i32_0 : i32
    scf.if %2 {
      %cst_10 = arith.constant 0.000000e+00 : f32
      %12 = vector.broadcast %cst_10 : f32 to vector<32x128xf32>
      %c0_11 = arith.constant 0 : index
      %c0_12 = arith.constant 0 : index
      %13 = vector.load %arg7[%c0_11, %c0_12] : memref<32x128xf32, #tpu.memory_space<vmem>>, vector<32x128xf32>
      tpu.vector_store %arg7[%c0_11, %c0_12], %12 {strides = array<i32>} : memref<32x128xf32, #tpu.memory_space<vmem>>, vector<32x128xf32>,
    } else {
    }
    %c0 = arith.constant 0 : index
    %c0_1 = arith.constant 0 : index
    %3 = vector.load %arg7[%c0, %c0_1] : memref<32x128xf32, #tpu.memory_space<vmem>>, vector<32x128xf32>
    %c0_2 = arith.constant 0 : index
    %c0_3 = arith.constant 0 : index
    %4 = vector.load %arg3[%c0_2, %c0_3] : memref<32x256xbf16, #tpu.memory_space<vmem>>, vector<32x256xbf16>
    %c0_4 = arith.constant 0 : index
    %c0_5 = arith.constant 0 : index
    %5 = vector.load %arg4[%c0_4, %c0_5] : memref<256x128xbf16, #tpu.memory_space<vmem>>, vector<256x128xbf16>
    %cst = arith.constant dense<0.000000e+00> : vector<32x128xf32>
    %6 = tpu.matmul %4, %5, %cst {dimension_numbers = #tpu.dot_dimension_numbers<[1], [0], [0], [1], [0, 0, 1, 1], [], []>} : vector<32x256xbf16>, vector<256x128xbf16>, vector<32x128xf32> -> vector<32x128xf32>
    %7 = arith.addf %3, %6 : vector<32x128xf32>
    %c0_6 = arith.constant 0 : index
    %c0_7 = arith.constant 0 : index
    %8 = vector.load %arg7[%c0_6, %c0_7] : memref<32x128xf32, #tpu.memory_space<vmem>>, vector<32x128xf32>
    tpu.vector_store %arg7[%c0_6, %c0_7], %7 {strides = array<i32>} : memref<32x128xf32, #tpu.memory_space<vmem>>, vector<32x128xf32>,
    %c0_i32_8 = arith.constant 0 : i32
    %9 = arith.cmpi eq, %arg2, %c0_i32_8 : i32
    %10 = arith.extui %9 : i1 to i32
    %c0_i32_9 = arith.constant 0 : i32
    %11 = arith.cmpi ne, %10, %c0_i32_9 : i32
    scf.if %11 {
      %c0_10 = arith.constant 0 : index
      %c0_11 = arith.constant 0 : index
      %12 = vector.load %arg7[%c0_10, %c0_11] : memref<32x128xf32, #tpu.memory_space<vmem>>, vector<32x128xf32>
      %cst_12 = arith.constant 0.000000e+00 : f32
      %13 = vector.broadcast %cst_12 : f32 to vector<32x128xf32>
      %14 = arith.cmpf oge, %12, %13 : vector<32x128xf32>
      %cst_13 = arith.constant 2.000000e-01 : f32
      %15 = vector.broadcast %cst_13 : f32 to vector<32x128xf32>
      %16 = arith.mulf %15, %12 : vector<32x128xf32>
      %17 = arith.select %14, %12, %16 : vector<32x128xi1>, vector<32x128xf32>
      %18 = arith.truncf %17 : vector<32x128xf32> to vector<32x128xbf16>
      %c0_14 = arith.constant 0 : index
      %c0_15 = arith.constant 0 : index
      %19 = vector.load %arg6[%c0_14, %c0_15] : memref<32x128xbf16, #tpu.memory_space<vmem>>, vector<32x128xbf16>
      tpu.vector_store %arg6[%c0_14, %c0_15], %18 {strides = array<i32>} : memref<32x128xbf16, #tpu.memory_space<vmem>>, vector<32x128xbf16>,
    } else {
    }
    return
  }
  func.func @transform_0(%arg0: i32, %arg1: i32, %arg2: i32) -> (i32, i32) {
    %c0_i32 = arith.constant 0 : i32
    return %arg0, %arg2 : i32, i32
  }
  func.func @transform_1(%arg0: i32, %arg1: i32, %arg2: i32) -> (i32, i32) {
    %c0_i32 = arith.constant 0 : i32
    return %arg2, %arg1 : i32, i32
  }
  func.func @transform_2(%arg0: i32, %arg1: i32, %arg2: i32) -> (i32, i32) {
    %c0_i32 = arith.constant 0 : i32
    %c0_i32_0 = arith.constant 0 : i32
    return %c0_i32, %arg1 : i32, i32
  }
  func.func @transform_3(%arg0: i32, %arg1: i32, %arg2: i32) -> (i32, i32) {
    %c0_i32 = arith.constant 0 : i32
    return %arg0, %arg1 : i32, i32
  }
}

module attributes {stable_mosaic.version = 11 : i64} {
  func.func @_mm_bias_act_kernel(%arg0: i32, %arg1: i32, %arg2: i32, %arg3: memref<24x512xbf16, #tpu.memory_space<vmem>>, %arg4: memref<512x128xbf16, #tpu.memory_space<vmem>>, %arg5: memref<1x128xf32, #tpu.memory_space<vmem>>, %arg6: memref<24x128xbf16, #tpu.memory_space<vmem>>, %arg7: memref<24x128xf32, #tpu.memory_space<vmem>>) attributes {dimension_semantics = [#tpu.dimension_semantics<parallel>, #tpu.dimension_semantics<parallel>, #tpu.dimension_semantics<arbitrary>], iteration_bounds = array<i64: 1, 1, 1>, scalar_prefetch = 0 : i64, scratch_operands = 1 : i64, tpu.core_type = #tpu.core_type<tc>, window_params = [{transform_indices = @transform_0, window_bounds = array<i64: 24, 512>}, {transform_indices = @transform_1, window_bounds = array<i64: 512, 128>}, {transform_indices = @transform_2, window_bounds = array<i64: 1, 128>}, {transform_indices = @transform_3, window_bounds = array<i64: 24, 128>}]} {
    %c0_i32 = arith.constant 0 : i32
    %0 = arith.cmpi eq, %arg2, %c0_i32 : i32
    %1 = arith.extui %0 : i1 to i32
    %c0_i32_0 = arith.constant 0 : i32
    %2 = arith.cmpi ne, %1, %c0_i32_0 : i32
    scf.if %2 {
      %cst_10 = arith.constant 0.000000e+00 : f32
      %12 = vector.broadcast %cst_10 : f32 to vector<24x128xf32>
      %c0_11 = arith.constant 0 : index
      %c0_12 = arith.constant 0 : index
      %13 = vector.load %arg7[%c0_11, %c0_12] : memref<24x128xf32, #tpu.memory_space<vmem>>, vector<24x128xf32>
      tpu.vector_store %arg7[%c0_11, %c0_12], %12 {strides = array<i32>} : memref<24x128xf32, #tpu.memory_space<vmem>>, vector<24x128xf32>,
    } else {
    }
    %c0 = arith.constant 0 : index
    %c0_1 = arith.constant 0 : index
    %3 = vector.load %arg7[%c0, %c0_1] : memref<24x128xf32, #tpu.memory_space<vmem>>, vector<24x128xf32>
    %c0_2 = arith.constant 0 : index
    %c0_3 = arith.constant 0 : index
    %4 = vector.load %arg3[%c0_2, %c0_3] : memref<24x512xbf16, #tpu.memory_space<vmem>>, vector<24x512xbf16>
    %c0_4 = arith.constant 0 : index
    %c0_5 = arith.constant 0 : index
    %5 = vector.load %arg4[%c0_4, %c0_5] : memref<512x128xbf16, #tpu.memory_space<vmem>>, vector<512x128xbf16>
    %cst = arith.constant dense<0.000000e+00> : vector<24x128xf32>
    %6 = tpu.matmul %4, %5, %cst {dimension_numbers = #tpu.dot_dimension_numbers<[1], [0], [0], [1], [0, 0, 1, 1], [], []>} : vector<24x512xbf16>, vector<512x128xbf16>, vector<24x128xf32> -> vector<24x128xf32>
    %7 = arith.addf %3, %6 : vector<24x128xf32>
    %c0_6 = arith.constant 0 : index
    %c0_7 = arith.constant 0 : index
    %8 = vector.load %arg7[%c0_6, %c0_7] : memref<24x128xf32, #tpu.memory_space<vmem>>, vector<24x128xf32>
    tpu.vector_store %arg7[%c0_6, %c0_7], %7 {strides = array<i32>} : memref<24x128xf32, #tpu.memory_space<vmem>>, vector<24x128xf32>,
    %c0_i32_8 = arith.constant 0 : i32
    %9 = arith.cmpi eq, %arg2, %c0_i32_8 : i32
    %10 = arith.extui %9 : i1 to i32
    %c0_i32_9 = arith.constant 0 : i32
    %11 = arith.cmpi ne, %10, %c0_i32_9 : i32
    scf.if %11 {
      %c0_10 = arith.constant 0 : index
      %c0_11 = arith.constant 0 : index
      %12 = vector.load %arg7[%c0_10, %c0_11] : memref<24x128xf32, #tpu.memory_space<vmem>>, vector<24x128xf32>
      %cst_12 = arith.constant 0.000000e+00 : f32
      %13 = vector.broadcast %cst_12 : f32 to vector<24x128xf32>
      %14 = arith.cmpf oge, %12, %13 : vector<24x128xf32>
      %cst_13 = arith.constant 2.000000e-01 : f32
      %15 = vector.broadcast %cst_13 : f32 to vector<24x128xf32>
      %16 = arith.mulf %15, %12 : vector<24x128xf32>
      %17 = arith.select %14, %12, %16 : vector<24x128xi1>, vector<24x128xf32>
      %18 = arith.truncf %17 : vector<24x128xf32> to vector<24x128xbf16>
      %c0_14 = arith.constant 0 : index
      %c0_15 = arith.constant 0 : index
      %19 = vector.load %arg6[%c0_14, %c0_15] : memref<24x128xbf16, #tpu.memory_space<vmem>>, vector<24x128xbf16>
      tpu.vector_store %arg6[%c0_14, %c0_15], %18 {strides = array<i32>} : memref<24x128xbf16, #tpu.memory_space<vmem>>, vector<24x128xbf16>,
    } else {
    }
    return
  }
  func.func @transform_0(%arg0: i32, %arg1: i32, %arg2: i32) -> (i32, i32) {
    %c0_i32 = arith.constant 0 : i32
    return %arg0, %arg2 : i32, i32
  }
  func.func @transform_1(%arg0: i32, %arg1: i32, %arg2: i32) -> (i32, i32) {
    %c0_i32 = arith.constant 0 : i32
    return %arg2, %arg1 : i32, i32
  }
  func.func @transform_2(%arg0: i32, %arg1: i32, %arg2: i32) -> (i32, i32) {
    %c0_i32 = arith.constant 0 : i32
    %c0_i32_0 = arith.constant 0 : i32
    return %c0_i32, %arg1 : i32, i32
  }
  func.func @transform_3(%arg0: i32, %arg1: i32, %arg2: i32) -> (i32, i32) {
    %c0_i32 = arith.constant 0 : i32
    return %arg0, %arg1 : i32, i32
  }
}

module attributes {stable_mosaic.version = 11 : i64} {
  func.func @_mm_bias_act_kernel(%arg0: i32, %arg1: i32, %arg2: i32, %arg3: memref<8x512xbf16, #tpu.memory_space<vmem>>, %arg4: memref<512x128xbf16, #tpu.memory_space<vmem>>, %arg5: memref<1x128xf32, #tpu.memory_space<vmem>>, %arg6: memref<8x128xf32, #tpu.memory_space<vmem>>, %arg7: memref<8x128xf32, #tpu.memory_space<vmem>>) attributes {dimension_semantics = [#tpu.dimension_semantics<parallel>, #tpu.dimension_semantics<parallel>, #tpu.dimension_semantics<arbitrary>], iteration_bounds = array<i64: 1, 1, 2>, scalar_prefetch = 0 : i64, scratch_operands = 1 : i64, tpu.core_type = #tpu.core_type<tc>, window_params = [{transform_indices = @transform_0, window_bounds = array<i64: 8, 512>}, {transform_indices = @transform_1, window_bounds = array<i64: 512, 128>}, {transform_indices = @transform_2, window_bounds = array<i64: 1, 128>}, {transform_indices = @transform_3, window_bounds = array<i64: 8, 128>}]} {
    %c0_i32 = arith.constant 0 : i32
    %0 = arith.cmpi eq, %arg2, %c0_i32 : i32
    %1 = arith.extui %0 : i1 to i32
    %c0_i32_0 = arith.constant 0 : i32
    %2 = arith.cmpi ne, %1, %c0_i32_0 : i32
    scf.if %2 {
      %cst_9 = arith.constant 0.000000e+00 : f32
      %12 = vector.broadcast %cst_9 : f32 to vector<8x128xf32>
      %c0_10 = arith.constant 0 : index
      %c0_11 = arith.constant 0 : index
      %13 = vector.load %arg7[%c0_10, %c0_11] : memref<8x128xf32, #tpu.memory_space<vmem>>, vector<8x128xf32>
      tpu.vector_store %arg7[%c0_10, %c0_11], %12 {strides = array<i32>} : memref<8x128xf32, #tpu.memory_space<vmem>>, vector<8x128xf32>,
    } else {
    }
    %c0 = arith.constant 0 : index
    %c0_1 = arith.constant 0 : index
    %3 = vector.load %arg7[%c0, %c0_1] : memref<8x128xf32, #tpu.memory_space<vmem>>, vector<8x128xf32>
    %c0_2 = arith.constant 0 : index
    %c0_3 = arith.constant 0 : index
    %4 = vector.load %arg3[%c0_2, %c0_3] : memref<8x512xbf16, #tpu.memory_space<vmem>>, vector<8x512xbf16>
    %c0_4 = arith.constant 0 : index
    %c0_5 = arith.constant 0 : index
    %5 = vector.load %arg4[%c0_4, %c0_5] : memref<512x128xbf16, #tpu.memory_space<vmem>>, vector<512x128xbf16>
    %cst = arith.constant dense<0.000000e+00> : vector<8x128xf32>
    %6 = tpu.matmul %4, %5, %cst {dimension_numbers = #tpu.dot_dimension_numbers<[1], [0], [0], [1], [0, 0, 1, 1], [], []>} : vector<8x512xbf16>, vector<512x128xbf16>, vector<8x128xf32> -> vector<8x128xf32>
    %7 = arith.addf %3, %6 : vector<8x128xf32>
    %c0_6 = arith.constant 0 : index
    %c0_7 = arith.constant 0 : index
    %8 = vector.load %arg7[%c0_6, %c0_7] : memref<8x128xf32, #tpu.memory_space<vmem>>, vector<8x128xf32>
    tpu.vector_store %arg7[%c0_6, %c0_7], %7 {strides = array<i32>} : memref<8x128xf32, #tpu.memory_space<vmem>>, vector<8x128xf32>,
    %c1_i32 = arith.constant 1 : i32
    %9 = arith.cmpi eq, %arg2, %c1_i32 : i32
    %10 = arith.extui %9 : i1 to i32
    %c0_i32_8 = arith.constant 0 : i32
    %11 = arith.cmpi ne, %10, %c0_i32_8 : i32
    scf.if %11 {
      %c0_9 = arith.constant 0 : index
      %c0_10 = arith.constant 0 : index
      %12 = vector.load %arg7[%c0_9, %c0_10] : memref<8x128xf32, #tpu.memory_space<vmem>>, vector<8x128xf32>
      %c0_11 = arith.constant 0 : index
      %c0_12 = arith.constant 0 : index
      %13 = vector.load %arg5[%c0_11, %c0_12] : memref<1x128xf32, #tpu.memory_space<vmem>>, vector<1x128xf32>
      %14 = vector.broadcast %13 : vector<1x128xf32> to vector<8x128xf32>
      %15 = arith.addf %12, %14 : vector<8x128xf32>
      %c0_13 = arith.constant 0 : index
      %c0_14 = arith.constant 0 : index
      %16 = vector.load %arg6[%c0_13, %c0_14] : memref<8x128xf32, #tpu.memory_space<vmem>>, vector<8x128xf32>
      tpu.vector_store %arg6[%c0_13, %c0_14], %15 {strides = array<i32>} : memref<8x128xf32, #tpu.memory_space<vmem>>, vector<8x128xf32>,
    } else {
    }
    return
  }
  func.func @transform_0(%arg0: i32, %arg1: i32, %arg2: i32) -> (i32, i32) {
    %c0_i32 = arith.constant 0 : i32
    return %arg0, %arg2 : i32, i32
  }
  func.func @transform_1(%arg0: i32, %arg1: i32, %arg2: i32) -> (i32, i32) {
    %c0_i32 = arith.constant 0 : i32
    return %arg2, %arg1 : i32, i32
  }
  func.func @transform_2(%arg0: i32, %arg1: i32, %arg2: i32) -> (i32, i32) {
    %c0_i32 = arith.constant 0 : i32
    %c0_i32_0 = arith.constant 0 : i32
    return %c0_i32, %arg1 : i32, i32
  }
  func.func @transform_3(%arg0: i32, %arg1: i32, %arg2: i32) -> (i32, i32) {
    %c0_i32 = arith.constant 0 : i32
    return %arg0, %arg1 : i32, i32
  }
}

</mosaic_0001>

<llo_original>
// kernel: _lambda_.5
$region0: #{_lambda_.5}
  #allocation0 [shape = 'u32[]', space=smem, size = 0x4, offset = 0x4, fixed_abs, tag = 'smem constant byte address 0x4 - core index']
  #allocation1 [shape = 'u32[144,128]{1,0:T(1,128)}', space=vmem, size = 0x12000, scoped, tag = 'internal scratch']
  #allocation2 [shape = 'f32[256,128]{1,0:T(8,128)}', space=vmem, size = 0x20000, scoped, tag = 'scratch operand']
  %s0 = inlined_call_operand.vmem [shape: bf16[512,128], index: 0, kind: input, shape index: {}]
  %s1 = inlined_call_operand.vmem [shape: bf16[128,128], index: 1, kind: input, shape index: {}]
  %s2 = inlined_call_operand.vmem [shape: f32[1,128], index: 2, kind: input, shape index: {}]
  %s3 = inlined_call_operand.vmem [shape: bf16[512,128], index: 3, kind: output, shape index: {}]
  %s4 = sld [smem:[#allocation0]]
  $region53: #{_lambda_.5} parent=0
    _
  %s6 = ssub.s32 1, %s4
  %s7 = scalar_select 0, %s6, %s4
  loop: start=0, step=1, limit=4
  $region2: #{_lambda_.5} parent=0 // loop_pre_header
    _
  $region3: #{_lambda_.5} parent=0 // loop_header
    %s9 = sphi 0, %s13
    %p10 = scmp.ge.s32.totalorder %s9, 4
    %s16 = sphi 0, %s35
    %s17 = sphi 0, %s31
    %s18 = sphi 0, %s27
    %s19 = sphi 0, %s16
    %s20 = sphi 0, %s17
    %s21 = sphi 0, %s18
    %s22 = sphi 0, %s19
    %s23 = sphi 0, %s20
    %s24 = sphi 0, %s21
    %s40 = sphi 0, %s42
    %s43 = sphi 0, %s40
    %s44 = sphi 0, %s43
    %s60 = sphi 0, %s44
    %s68 = sphi 0, %s70
    %s71 = sphi 0, %s68
    %s72 = sphi 0, %s71
    %s88 = sphi 0, %s72
    %s94 = sphi 0, %s96
    %s97 = sphi 0, %s94
    %s98 = sphi 0, %s97
    %s114 = sphi 0, %s98
    %s122 = sphi 0, %s124
    %s125 = sphi 0, %s122
    %s126 = sphi 0, %s125
    %s142 = sphi 0, %s126
  $region4: #{_lambda_.5} parent=0 // loop_header_branch
    %12 = sbr.rel (%p10) target = $region8
  $region5: #{_lambda_.5} parent=0 // loop_body
    %s14 = ssub.s32 %s9, 1
    %s15 = ssub.s32 %s9, 2
    %s25 = sadd.s32 1, %s18
    %p26 = scmp.ge.s32.totalorder %s25, 1
    %s27 = scalar_select %p26, 0, %s25
    %s28 = sadd.s32 1, %s17
    %s29 = scalar_select %p26, %s28, %s17
    %p30 = scmp.ge.s32.totalorder %s29, 1
    %s31 = scalar_select %p30, 0, %s29
    %s32 = sadd.s32 1, %s16
    %s33 = scalar_select %p30, %s32, %s16
    %p34 = scmp.ge.s32.totalorder %s33, 2
    %s35 = scalar_select %p34, 0, %s33
    %s36 = ssub.s32 %s16, %s35
    %s37 = ssub.s32 %s18, %s27
    %s38 = sor.u32 %s36, %s37
    %p39 = scmp.eq.s32.totalorder %s38, 0
    %s41 = sadd.s32 %s40, 1
    %s42 = scalar_select %p39, %s40, %s41
    %p45 = pneg %p39
    %p46 = scmp.eq.s32.totalorder %s9, 1
    %p47 = por %p45, %p46
    %p48 = scmp.ne.s32.totalorder %s40, %s43
    %p49 = scmp.eq.s32.totalorder %s9, 0
    %p50 = por %p48, %p49
    %p51 = scmp.ne.s32.totalorder %s40, %s43
    %p52 = scmp.eq.s32.totalorder %s14, 1
    %p53 = por %p51, %p52
    %p54 = scmp.ne.s32.totalorder %s43, %s44
    %p55 = scmp.eq.s32.totalorder %s14, 0
    %p56 = por %p54, %p55
    %p57 = scmp.ne.s32.totalorder %s43, %s44
    %p58 = scmp.eq.s32.totalorder %s15, 1
    %p59 = por %p57, %p58
    %p61 = scmp.ne.s32.totalorder %s44, %s60
    %p62 = scmp.eq.s32.totalorder %s15, 0
    %p63 = por %p61, %p62
    %s64 = ssub.s32 %s18, %s27
    %s65 = ssub.s32 %s17, %s31
    %s66 = sor.u32 %s64, %s65
    %p67 = scmp.eq.s32.totalorder %s66, 0
    %s69 = sadd.s32 %s68, 1
    %s70 = scalar_select %p67, %s68, %s69
    %p73 = pneg %p67
    %p74 = scmp.eq.s32.totalorder %s9, 1
    %p75 = por %p73, %p74
    %p76 = scmp.ne.s32.totalorder %s68, %s71
    %p77 = scmp.eq.s32.totalorder %s9, 0
    %p78 = por %p76, %p77
    %p79 = scmp.ne.s32.totalorder %s68, %s71
    %p80 = scmp.eq.s32.totalorder %s14, 1
    %p81 = por %p79, %p80
    %p82 = scmp.ne.s32.totalorder %s71, %s72
    %p83 = scmp.eq.s32.totalorder %s14, 0
    %p84 = por %p82, %p83
    %p85 = scmp.ne.s32.totalorder %s71, %s72
    %p86 = scmp.eq.s32.totalorder %s15, 1
    %p87 = por %p85, %p86
    %p89 = scmp.ne.s32.totalorder %s72, %s88
    %p90 = scmp.eq.s32.totalorder %s15, 0
    %p91 = por %p89, %p90
    %s92 = ssub.s32 %s17, %s31
    %p93 = scmp.eq.s32.totalorder %s92, 0
    %s95 = sadd.s32 %s94, 1
    %s96 = scalar_select %p93, %s94, %s95
    %p99 = pneg %p93
    %p100 = scmp.eq.s32.totalorder %s9, 1
    %p101 = por %p99, %p100
    %p102 = scmp.ne.s32.totalorder %s94, %s97
    %p103 = scmp.eq.s32.totalorder %s9, 0
    %p104 = por %p102, %p103
    %p105 = scmp.ne.s32.totalorder %s94, %s97
    %p106 = scmp.eq.s32.totalorder %s14, 1
    %p107 = por %p105, %p106
    %p108 = scmp.ne.s32.totalorder %s97, %s98
    %p109 = scmp.eq.s32.totalorder %s14, 0
    %p110 = por %p108, %p109
    %p111 = scmp.ne.s32.totalorder %s97, %s98
    %p112 = scmp.eq.s32.totalorder %s15, 1
    %p113 = por %p111, %p112
    %p115 = scmp.ne.s32.totalorder %s98, %s114
    %p116 = scmp.eq.s32.totalorder %s15, 0
    %p117 = por %p115, %p116
    %s118 = ssub.s32 %s16, %s35
    %s119 = ssub.s32 %s17, %s31
    %s120 = sor.u32 %s118, %s119
    %p121 = scmp.eq.s32.totalorder %s120, 0
    %s123 = sadd.s32 %s122, 1
    %s124 = scalar_select %p121, %s122, %s123
    %p127 = pneg %p121
    %p128 = scmp.eq.s32.totalorder %s9, 1
    %p129 = por %p127, %p128
    %p130 = scmp.ne.s32.totalorder %s122, %s125
    %p131 = scmp.eq.s32.totalorder %s9, 0
    %p132 = por %p130, %p131
    %p133 = scmp.ne.s32.totalorder %s122, %s125
    %p134 = scmp.eq.s32.totalorder %s14, 1
    %p135 = por %p133, %p134
    %p136 = scmp.ne.s32.totalorder %s125, %s126
    %p137 = scmp.eq.s32.totalorder %s14, 0
    %p138 = por %p136, %p137
    %p139 = scmp.ne.s32.totalorder %s125, %s126
    %p140 = scmp.eq.s32.totalorder %s15, 1
    %p141 = por %p139, %p140
    %p143 = scmp.ne.s32.totalorder %s126, %s142
    %p144 = scmp.eq.s32.totalorder %s15, 0
    %p145 = por %p143, %p144
    %p146 = scmp.le.s32.totalorder 1, %s9
    %p147 = scmp.lt.s32.totalorder %s9, 3
    %p148 = pnand %p146, %p147
    %p149 = pneg %p148
    // Predicated region
    $region9: #{_lambda_.5} parent=5 // pred_check
      _
    $region10: #{_lambda_.5} parent=5 // pred_check_branch
      %151 = sbr.rel (%p148) target = $region12
    $region11: #{_lambda_.5} parent=5 // pred_region
      %s152 = ssub.s32 %s9, 1
      // Predicated region
      $region13: #{_lambda_.5} parent=11 // pred_check
        %p153 = pneg %p84
      $region14: #{_lambda_.5} parent=11 // pred_check_branch
        %155 = sbr.rel (%p153) target = $region16
      $region15: #{_lambda_.5} parent=11 // pred_region
        %s156 = smul.u32 16, %s21
        %p157 = scmp.lt.s32.totalorder %s156, 15
        %s158 = scalar_select %p157, %s156, 15
        %p159 = scmp.lt.s32.totalorder %s20, 0
        %s160 = scalar_select %p159, %s20, 0
        %s161 = sadd.s32 %s160, %s158
        %s162 = smul.addr %s161, 4
        %s163 = scalar_lea.vmem %s1, %s162
        %s164 = smul.u32 16, %s21
      $region16: #{_lambda_.5} parent=11 // pred_fallthru
        _
      // Predicated region
      $region17: #{_lambda_.5} parent=11 // pred_check
        %p165 = pneg %p110
      $region18: #{_lambda_.5} parent=11 // pred_check_branch
        %167 = sbr.rel (%p165) target = $region20
      $region19: #{_lambda_.5} parent=11 // pred_region
        %p168 = scmp.lt.s32.totalorder %s20, 0
        %s169 = scalar_select %p168, %s20, 0
        %s170 = scalar_lea.vmem %s2, %s169
      $region20: #{_lambda_.5} parent=11 // pred_fallthru
        _
    $region12: #{_lambda_.5} parent=5 // pred_fallthru
      _
    %p171 = scmp.lt.s32.totalorder %s9, 2
    // Predicated region
    $region21: #{_lambda_.5} parent=5 // pred_check
      %p172 = pneg %p171
    $region22: #{_lambda_.5} parent=5 // pred_check_branch
      %174 = sbr.rel (%p172) target = $region24
    $region23: #{_lambda_.5} parent=5 // pred_region
      // Predicated region
      $region25: #{_lambda_.5} parent=23 // pred_check
        %p175 = pneg %p50
      $region26: #{_lambda_.5} parent=23 // pred_check_branch
        %177 = sbr.rel (%p175) target = $region28
      $region27: #{_lambda_.5} parent=23 // pred_region
        %s178 = smul.u32 32, %s16
        %p179 = scmp.lt.s32.totalorder %s178, 63
        %s180 = scalar_select %p179, %s178, 63
        %p181 = scmp.lt.s32.totalorder %s18, 0
        %s182 = scalar_select %p181, %s18, 0
        %s183 = sadd.s32 %s182, %s180
        %s184 = smul.addr %s183, 4
        %s185 = scalar_lea.vmem %s0, %s184
        %s186 = smul.u32 32, %s16
      $region28: #{_lambda_.5} parent=23 // pred_fallthru
        _
    $region24: #{_lambda_.5} parent=5 // pred_fallthru
      _
    %p187 = scmp.le.s32.totalorder 1, %s9
    %p188 = scmp.lt.s32.totalorder %s9, 3
    %p189 = pnand %p187, %p188
    %p190 = pneg %p189
    // Predicated region
    $region29: #{_lambda_.5} parent=5 // pred_check
      _
    $region30: #{_lambda_.5} parent=5 // pred_check_branch
      %192 = sbr.rel (%p189) target = $region32
    $region31: #{_lambda_.5} parent=5 // pred_region
      %s193 = ssub.s32 %s9, 1
      %s194 = smul.u32 32, %s19
      %p195 = scmp.lt.s32.totalorder %s194, 63
      %s196 = scalar_select %p195, %s194, 63
      %p197 = scmp.lt.s32.totalorder %s21, 0
      %s198 = scalar_select %p197, %s21, 0
      %s199 = sadd.s32 %s198, %s196
      %s200 = smul.addr %s199, 4
      %s201 = scalar_lea.vmem %s0, %s200
      %p202 = pneg %p56
      %p203 = pneg %p53
      %s204 = smul.u32 16, %s21
      %p205 = scmp.lt.s32.totalorder %s204, 15
      %s206 = scalar_select %p205, %s204, 15
      %p207 = scmp.lt.s32.totalorder %s20, 0
      %s208 = scalar_select %p207, %s20, 0
      %s209 = sadd.s32 %s208, %s206
      %s210 = smul.addr %s209, 4
      %s211 = scalar_lea.vmem %s1, %s210
      %p212 = pneg %p84
      %p213 = pneg %p81
      %p214 = scmp.lt.s32.totalorder %s20, 0
      %s215 = scalar_select %p214, %s20, 0
      %s216 = scalar_lea.vmem %s2, %s215
      %p217 = pneg %p110
      %p218 = pneg %p107
      %p219 = pneg %p138
      %p220 = pneg %p135
      %s221 = smul.u32 32, %s19
      %p222 = scmp.lt.s32.totalorder %s221, 63
      %s223 = scalar_select %p222, %s221, 63
      %p224 = scmp.lt.s32.totalorder %s20, 0
      %s225 = scalar_select %p224, %s20, 0
      %s226 = sadd.s32 %s225, %s223
      %s227 = smul.addr %s226, 4
      %s228 = scalar_lea.vmem %s3, %s227
      %s229 = smul.u32 32, %s19
      %p230 = scmp.lt.s32.totalorder %s229, 63
      %s231 = scalar_select %p230, %s229, 63
      %p232 = scmp.lt.s32.totalorder %s21, 0
      %s233 = scalar_select %p232, %s21, 0
      %s234 = sadd.s32 %s233, %s231
      %s235 = smul.addr %s234, 4
      %s236 = scalar_lea.vmem %s0, %s235
      %s237 = smul.u32 32, %s19
      %s238 = smul.u32 16, %s21
      %p239 = scmp.lt.s32.totalorder %s238, 15
      %s240 = scalar_select %p239, %s238, 15
      %p241 = scmp.lt.s32.totalorder %s20, 0
      %s242 = scalar_select %p241, %s20, 0
      %s243 = sadd.s32 %s242, %s240
      %s244 = smul.addr %s243, 4
      %s245 = scalar_lea.vmem %s1, %s244
      %s246 = smul.u32 16, %s21
      %p247 = scmp.lt.s32.totalorder %s20, 0
      %s248 = scalar_select %p247, %s20, 0
      %s249 = scalar_lea.vmem %s2, %s248
      %s250 = smul.u32 32, %s19
      %p251 = scmp.lt.s32.totalorder %s250, 63
      %s252 = scalar_select %p251, %s250, 63
      %p253 = scmp.lt.s32.totalorder %s20, 0
      %s254 = scalar_select %p253, %s20, 0
      %s255 = sadd.s32 %s254, %s252
      %s256 = smul.addr %s255, 4
      %s257 = scalar_lea.vmem %s3, %s256
      %s258 = smul.u32 32, %s19
      %p260 = scmp.eq.s32.totalorder %s21, 0
      // Predicated region
      $region33: #{_lambda_.5} parent=31 // pred_check
        %p261 = pneg %p260
      $region34: #{_lambda_.5} parent=31 // pred_check_branch
        %263 = sbr.rel (%p261) target = $region36
      $region35: #{_lambda_.5} parent=31 // pred_region
        %264 = vst [vmem:[#allocation2] sm:$0xff] 0.0
        %265 = vst [vmem:[#allocation2 + $0x8] sm:$0xff] 0.0
        %266 = vst [vmem:[#allocation2 + $0x10] sm:$0xff] 0.0
        %267 = vst [vmem:[#allocation2 + $0x18] sm:$0xff] 0.0
        %268 = vst [vmem:[#allocation2 + $0x20] sm:$0xff] 0.0
        %269 = vst [vmem:[#allocation2 + $0x28] sm:$0xff] 0.0
        %270 = vst [vmem:[#allocation2 + $0x30] sm:$0xff] 0.0
        %271 = vst [vmem:[#allocation2 + $0x38] sm:$0xff] 0.0
        %272 = vst [vmem:[#allocation2 + $0x40] sm:$0xff] 0.0
        %273 = vst [vmem:[#allocation2 + $0x48] sm:$0xff] 0.0
        %274 = vst [vmem:[#allocation2 + $0x50] sm:$0xff] 0.0
        %275 = vst [vmem:[#allocation2 + $0x58] sm:$0xff] 0.0
        %276 = vst [vmem:[#allocation2 + $0x60] sm:$0xff] 0.0
        %277 = vst [vmem:[#allocation2 + $0x68] sm:$0xff] 0.0
        %278 = vst [vmem:[#allocation2 + $0x70] sm:$0xff] 0.0
        %279 = vst [vmem:[#allocation2 + $0x78] sm:$0xff] 0.0
        %280 = vst [vmem:[#allocation2 + $0x80] sm:$0xff] 0.0
        %281 = vst [vmem:[#allocation2 + $0x88] sm:$0xff] 0.0
        %282 = vst [vmem:[#allocation2 + $0x90] sm:$0xff] 0.0
        %283 = vst [vmem:[#allocation2 + $0x98] sm:$0xff] 0.0
        %284 = vst [vmem:[#allocation2 + $0xa0] sm:$0xff] 0.0
        %285 = vst [vmem:[#allocation2 + $0xa8] sm:$0xff] 0.0
        %286 = vst [vmem:[#allocation2 + $0xb0] sm:$0xff] 0.0
        %287 = vst [vmem:[#allocation2 + $0xb8] sm:$0xff] 0.0
        %288 = vst [vmem:[#allocation2 + $0xc0] sm:$0xff] 0.0
        %289 = vst [vmem:[#allocation2 + $0xc8] sm:$0xff] 0.0
        %290 = vst [vmem:[#allocation2 + $0xd0] sm:$0xff] 0.0
        %291 = vst [vmem:[#allocation2 + $0xd8] sm:$0xff] 0.0
        %292 = vst [vmem:[#allocation2 + $0xe0] sm:$0xff] 0.0
        %293 = vst [vmem:[#allocation2 + $0xe8] sm:$0xff] 0.0
        %294 = vst [vmem:[#allocation2 + $0xf0] sm:$0xff] 0.0
        %295 = vst [vmem:[#allocation2 + $0xf8] sm:$0xff] 0.0
      $region36: #{_lambda_.5} parent=31 // pred_fallthru
        _
      %v296 = vld [vmem:[#allocation2] sm:$0xff]
      %v297 = vld [vmem:[#allocation2 + $0x8] sm:$0xff]
      %v298 = vld [vmem:[#allocation2 + $0x10] sm:$0xff]
      %v299 = vld [vmem:[#allocation2 + $0x18] sm:$0xff]
      %v300 = vld [vmem:[#allocation2 + $0x20] sm:$0xff]
      %v301 = vld [vmem:[#allocation2 + $0x28] sm:$0xff]
      %v302 = vld [vmem:[#allocation2 + $0x30] sm:$0xff]
      %v303 = vld [vmem:[#allocation2 + $0x38] sm:$0xff]
      %v304 = vld [vmem:[#allocation2 + $0x40] sm:$0xff]
      %v305 = vld [vmem:[#allocation2 + $0x48] sm:$0xff]
      %v306 = vld [vmem:[#allocation2 + $0x50] sm:$0xff]
      %v307 = vld [vmem:[#allocation2 + $0x58] sm:$0xff]
      %v308 = vld [vmem:[#allocation2 + $0x60] sm:$0xff]
      %v309 = vld [vmem:[#allocation2 + $0x68] sm:$0xff]
      %v310 = vld [vmem:[#allocation2 + $0x70] sm:$0xff]
      %v311 = vld [vmem:[#allocation2 + $0x78] sm:$0xff]
      %v312 = vld [vmem:[#allocation2 + $0x80] sm:$0xff]
      %v313 = vld [vmem:[#allocation2 + $0x88] sm:$0xff]
      %v314 = vld [vmem:[#allocation2 + $0x90] sm:$0xff]
      %v315 = vld [vmem:[#allocation2 + $0x98] sm:$0xff]
      %v316 = vld [vmem:[#allocation2 + $0xa0] sm:$0xff]
      %v317 = vld [vmem:[#allocation2 + $0xa8] sm:$0xff]
      %v318 = vld [vmem:[#allocation2 + $0xb0] sm:$0xff]
      %v319 = vld [vmem:[#allocation2 + $0xb8] sm:$0xff]
      %v320 = vld [vmem:[#allocation2 + $0xc0] sm:$0xff]
      %v321 = vld [vmem:[#allocation2 + $0xc8] sm:$0xff]
      %v322 = vld [vmem:[#allocation2 + $0xd0] sm:$0xff]
      %v323 = vld [vmem:[#allocation2 + $0xd8] sm:$0xff]
      %v324 = vld [vmem:[#allocation2 + $0xe0] sm:$0xff]
      %v325 = vld [vmem:[#allocation2 + $0xe8] sm:$0xff]
      %v326 = vld [vmem:[#allocation2 + $0xf0] sm:$0xff]
      %v327 = vld [vmem:[#allocation2 + $0xf8] sm:$0xff]
      %v328 = vld [vmem:[%s236] sm:$0xf]
      %v329 = vld [vmem:[%s236 + $0x4] sm:$0xf]
      %v330 = vld [vmem:[%s236 + $0x8] sm:$0xf]
      %v331 = vld [vmem:[%s236 + $0xc] sm:$0xf]
      %v332 = vld [vmem:[%s236 + $0x10] sm:$0xf]
      %v333 = vld [vmem:[%s236 + $0x14] sm:$0xf]
      %v334 = vld [vmem:[%s236 + $0x18] sm:$0xf]
      %v335 = vld [vmem:[%s236 + $0x1c] sm:$0xf]
      %v336 = vld [vmem:[%s236 + $0x20] sm:$0xf]
      %v337 = vld [vmem:[%s236 + $0x24] sm:$0xf]
      %v338 = vld [vmem:[%s236 + $0x28] sm:$0xf]
      %v339 = vld [vmem:[%s236 + $0x2c] sm:$0xf]
      %v340 = vld [vmem:[%s236 + $0x30] sm:$0xf]
      %v341 = vld [vmem:[%s236 + $0x34] sm:$0xf]
      %v342 = vld [vmem:[%s236 + $0x38] sm:$0xf]
      %v343 = vld [vmem:[%s236 + $0x3c] sm:$0xf]
      %v344 = vld [vmem:[%s236 + $0x40] sm:$0xf]
      %v345 = vld [vmem:[%s236 + $0x44] sm:$0xf]
      %v346 = vld [vmem:[%s236 + $0x48] sm:$0xf]
      %v347 = vld [vmem:[%s236 + $0x4c] sm:$0xf]
      %v348 = vld [vmem:[%s236 + $0x50] sm:$0xf]
      %v349 = vld [vmem:[%s236 + $0x54] sm:$0xf]
      %v350 = vld [vmem:[%s236 + $0x58] sm:$0xf]
      %v351 = vld [vmem:[%s236 + $0x5c] sm:$0xf]
      %v352 = vld [vmem:[%s236 + $0x60] sm:$0xf]
      %v353 = vld [vmem:[%s236 + $0x64] sm:$0xf]
      %v354 = vld [vmem:[%s236 + $0x68] sm:$0xf]
      %v355 = vld [vmem:[%s236 + $0x6c] sm:$0xf]
      %v356 = vld [vmem:[%s236 + $0x70] sm:$0xf]
      %v357 = vld [vmem:[%s236 + $0x74] sm:$0xf]
      %v358 = vld [vmem:[%s236 + $0x78] sm:$0xf]
      %v359 = vld [vmem:[%s236 + $0x7c] sm:$0xf]
      %v360 = vld [vmem:[%s245] sm:$0xf]
      %v361 = vld [vmem:[%s245 + $0x4] sm:$0xf]
      %v362 = vld [vmem:[%s245 + $0x8] sm:$0xf]
      %v363 = vld [vmem:[%s245 + $0xc] sm:$0xf]
      %v364 = vld [vmem:[%s245 + $0x10] sm:$0xf]
      %v365 = vld [vmem:[%s245 + $0x14] sm:$0xf]
      %v366 = vld [vmem:[%s245 + $0x18] sm:$0xf]
      %v367 = vld [vmem:[%s245 + $0x1c] sm:$0xf]
      %v368 = vld [vmem:[%s245 + $0x20] sm:$0xf]
      %v369 = vld [vmem:[%s245 + $0x24] sm:$0xf]
      %v370 = vld [vmem:[%s245 + $0x28] sm:$0xf]
      %v371 = vld [vmem:[%s245 + $0x2c] sm:$0xf]
      %v372 = vld [vmem:[%s245 + $0x30] sm:$0xf]
      %v373 = vld [vmem:[%s245 + $0x34] sm:$0xf]
      %v374 = vld [vmem:[%s245 + $0x38] sm:$0xf]
      %v375 = vld [vmem:[%s245 + $0x3c] sm:$0xf]
      %v408 = vunpack.c.l.b16 %v328
      %v409 = vunpack.c.l.b16 %v329
      %v410 = vunpack.c.l.b16 %v330
      %v411 = vunpack.c.l.b16 %v331
      %v412 = vunpack.c.l.b16 %v332
      %v413 = vunpack.c.l.b16 %v333
      %v414 = vunpack.c.l.b16 %v334
      %v415 = vunpack.c.l.b16 %v335
      %v416 = vunpack.c.l.b16 %v336
      %v417 = vunpack.c.l.b16 %v337
      %v418 = vunpack.c.l.b16 %v338
      %v419 = vunpack.c.l.b16 %v339
      %v420 = vunpack.c.l.b16 %v340
      %v421 = vunpack.c.l.b16 %v341
      %v422 = vunpack.c.l.b16 %v342
      %v423 = vunpack.c.l.b16 %v343
      %v424 = vunpack.c.l.b16 %v344
      %v425 = vunpack.c.l.b16 %v345
      %v426 = vunpack.c.l.b16 %v346
      %v427 = vunpack.c.l.b16 %v347
      %v428 = vunpack.c.l.b16 %v348
      %v429 = vunpack.c.l.b16 %v349
      %v430 = vunpack.c.l.b16 %v350
      %v431 = vunpack.c.l.b16 %v351
      %v432 = vunpack.c.l.b16 %v352
      %v433 = vunpack.c.l.b16 %v353
      %v434 = vunpack.c.l.b16 %v354
      %v435 = vunpack.c.l.b16 %v355
      %v436 = vunpack.c.l.b16 %v356
      %v437 = vunpack.c.l.b16 %v357
      %v438 = vunpack.c.l.b16 %v358
      %v439 = vunpack.c.l.b16 %v359
      %v440 = vpack.c.b16 %v409, %v408
      %v441 = vpack.c.b16 %v411, %v410
      %v442 = vpack.c.b16 %v413, %v412
      %v443 = vpack.c.b16 %v415, %v414
      %v444 = vpack.c.b16 %v417, %v416
      %v445 = vpack.c.b16 %v419, %v418
      %v446 = vpack.c.b16 %v421, %v420
      %v447 = vpack.c.b16 %v423, %v422
      %v448 = vpack.c.b16 %v425, %v424
      %v449 = vpack.c.b16 %v427, %v426
      %v450 = vpack.c.b16 %v429, %v428
      %v451 = vpack.c.b16 %v431, %v430
      %v452 = vpack.c.b16 %v433, %v432
      %v453 = vpack.c.b16 %v435, %v434
      %v454 = vpack.c.b16 %v437, %v436
      %v455 = vpack.c.b16 %v439, %v438
      %v488 = vunpack.c.l.b16 %v360
      %v489 = vunpack.c.l.b16 %v361
      %v490 = vunpack.c.l.b16 %v362
      %v491 = vunpack.c.l.b16 %v363
      %v492 = vunpack.c.l.b16 %v364
      %v493 = vunpack.c.l.b16 %v365
      %v494 = vunpack.c.l.b16 %v366
      %v495 = vunpack.c.l.b16 %v367
      %v496 = vunpack.c.l.b16 %v368
      %v497 = vunpack.c.l.b16 %v369
      %v498 = vunpack.c.l.b16 %v370
      %v499 = vunpack.c.l.b16 %v371
      %v500 = vunpack.c.l.b16 %v372
      %v501 = vunpack.c.l.b16 %v373
      %v502 = vunpack.c.l.b16 %v374
      %v503 = vunpack.c.l.b16 %v375
      %v504 = vpack.c.b16 %v489, %v488
      %v505 = vpack.c.b16 %v491, %v490
      %v506 = vpack.c.b16 %v493, %v492
      %v507 = vpack.c.b16 %v495, %v494
      %v508 = vpack.c.b16 %v497, %v496
      %v509 = vpack.c.b16 %v499, %v498
      %v510 = vpack.c.b16 %v501, %v500
      %v511 = vpack.c.b16 %v503, %v502
      %520 = vmatprep.subr.bf16.mxu0 0
      %521 = vmatpush1.bf16.msra.mxu0 %v504
      %522 = vmatprep.subr.bf16.mxu0 0
      %523 = vmatpush1.bf16.msra.mxu0 %v505
      %524 = vmatprep.subr.bf16.mxu0 0
      %525 = vmatpush1.bf16.msra.mxu0 %v506
      %526 = vmatprep.subr.bf16.mxu0 0
      %527 = vmatpush1.bf16.msra.mxu0 %v507
      %528 = vmatprep.subr.bf16.mxu0 0
      %529 = vmatpush1.bf16.msra.mxu0 %v508
      %530 = vmatprep.subr.bf16.mxu0 0
      %531 = vmatpush1.bf16.msra.mxu0 %v509
      %532 = vmatprep.subr.bf16.mxu0 0
      %533 = vmatpush1.bf16.msra.mxu0 %v510
      %534 = vmatprep.subr.bf16.mxu0 0
      %535 = vmatpush1.bf16.msra.mxu0 %v511
      %536 = vmatprep.subr.bf16.mxu0 0
      %537 = vmatpush1.bf16.msra.mxu0 0
      %538 = vmatprep.subr.bf16.mxu0 0
      %539 = vmatpush1.bf16.msra.mxu0 0
      %540 = vmatprep.subr.bf16.mxu0 0
      %541 = vmatpush1.bf16.msra.mxu0 0
      %542 = vmatprep.subr.bf16.mxu0 0
      %543 = vmatpush1.bf16.msra.mxu0 0
      %544 = vmatprep.subr.bf16.mxu0 0
      %545 = vmatpush1.bf16.msra.mxu0 0
      %546 = vmatprep.subr.bf16.mxu0 0
      %547 = vmatpush1.bf16.msra.mxu0 0
      %548 = vmatprep.subr.bf16.mxu0 0
      %549 = vmatpush1.bf16.msra.mxu0 0
      %550 = vmatprep.subr.bf16.mxu0 0
      %551 = vmatpush1.bf16.msra.mxu0 0
      %552 = vmatprep.mubr.bf16.mxu0 0
      %553 = vmatmul.mubr.bf16.gmra.mrb[0].mxu0 %v440
      %v554 = vpop.f32.mrb[0].mxu0
      %v555 = vadd.f32 0.0, %v554
      %v556 = vpop.f32.mrb[0].mxu0
      %v557 = vpop.f32.mrb[0].mxu0
      %v558 = vadd.f32 0.0, %v557
      %v559 = vpop.f32.mrb[0].mxu0
      %560 = vmatprep.mubr.bf16.mxu0 0
      %561 = vmatmul.mubr.bf16.gmra.mrb[0].mxu0 %v441
      %v562 = vpop.f32.mrb[0].mxu0
      %v563 = vadd.f32 0.0, %v562
      %v564 = vpop.f32.mrb[0].mxu0
      %v565 = vpop.f32.mrb[0].mxu0
      %v566 = vadd.f32 0.0, %v565
      %v567 = vpop.f32.mrb[0].mxu0
      %568 = vmatprep.mubr.bf16.mxu0 0
      %569 = vmatmul.mubr.bf16.gmra.mrb[0].mxu0 %v442
      %v570 = vpop.f32.mrb[0].mxu0
      %v571 = vadd.f32 0.0, %v570
      %v572 = vpop.f32.mrb[0].mxu0
      %v573 = vpop.f32.mrb[0].mxu0
      %v574 = vadd.f32 0.0, %v573
      %v575 = vpop.f32.mrb[0].mxu0
      %576 = vmatprep.mubr.bf16.mxu0 0
      %577 = vmatmul.mubr.bf16.gmra.mrb[0].mxu0 %v443
      %v578 = vpop.f32.mrb[0].mxu0
      %v579 = vadd.f32 0.0, %v578
      %v580 = vpop.f32.mrb[0].mxu0
      %v581 = vpop.f32.mrb[0].mxu0
      %v582 = vadd.f32 0.0, %v581
      %v583 = vpop.f32.mrb[0].mxu0
      %584 = vmatprep.mubr.bf16.mxu0 0
      %585 = vmatmul.mubr.bf16.gmra.mrb[0].mxu0 %v444
      %v586 = vpop.f32.mrb[0].mxu0
      %v587 = vadd.f32 0.0, %v586
      %v588 = vpop.f32.mrb[0].mxu0
      %v589 = vpop.f32.mrb[0].mxu0
      %v590 = vadd.f32 0.0, %v589
      %v591 = vpop.f32.mrb[0].mxu0
      %592 = vmatprep.mubr.bf16.mxu0 0
      %593 = vmatmul.mubr.bf16.gmra.mrb[0].mxu0 %v445
      %v594 = vpop.f32.mrb[0].mxu0
      %v595 = vadd.f32 0.0, %v594
      %v596 = vpop.f32.mrb[0].mxu0
      %v597 = vpop.f32.mrb[0].mxu0
      %v598 = vadd.f32 0.0, %v597
      %v599 = vpop.f32.mrb[0].mxu0
      %600 = vmatprep.mubr.bf16.mxu0 0
      %601 = vmatmul.mubr.bf16.gmra.mrb[0].mxu0 %v446
      %v602 = vpop.f32.mrb[0].mxu0
      %v603 = vadd.f32 0.0, %v602
      %v604 = vpop.f32.mrb[0].mxu0
      %v605 = vpop.f32.mrb[0].mxu0
      %v606 = vadd.f32 0.0, %v605
      %v607 = vpop.f32.mrb[0].mxu0
      %608 = vmatprep.mubr.bf16.mxu0 0
      %609 = vmatmul.mubr.bf16.gmra.mrb[0].mxu0 %v447
      %v610 = vpop.f32.mrb[0].mxu0
      %v611 = vadd.f32 0.0, %v610
      %v612 = vpop.f32.mrb[0].mxu0
      %v613 = vpop.f32.mrb[0].mxu0
      %v614 = vadd.f32 0.0, %v613
      %v615 = vpop.f32.mrb[0].mxu0
      %616 = vmatprep.mubr.bf16.mxu0 0
      %617 = vmatmul.mubr.bf16.gmra.mrb[0].mxu0 %v448
      %v618 = vpop.f32.mrb[0].mxu0
      %v619 = vadd.f32 0.0, %v618
      %v620 = vpop.f32.mrb[0].mxu0
      %v621 = vpop.f32.mrb[0].mxu0
      %v622 = vadd.f32 0.0, %v621
      %v623 = vpop.f32.mrb[0].mxu0
      %624 = vmatprep.mubr.bf16.mxu0 0
      %625 = vmatmul.mubr.bf16.gmra.mrb[0].mxu0 %v449
      %v626 = vpop.f32.mrb[0].mxu0
      %v627 = vadd.f32 0.0, %v626
      %v628 = vpop.f32.mrb[0].mxu0
      %v629 = vpop.f32.mrb[0].mxu0
      %v630 = vadd.f32 0.0, %v629
      %v631 = vpop.f32.mrb[0].mxu0
      %632 = vmatprep.mubr.bf16.mxu0 0
      %633 = vmatmul.mubr.bf16.gmra.mrb[0].mxu0 %v450
      %v634 = vpop.f32.mrb[0].mxu0
      %v635 = vadd.f32 0.0, %v634
      %v636 = vpop.f32.mrb[0].mxu0
      %v637 = vpop.f32.mrb[0].mxu0
      %v638 = vadd.f32 0.0, %v637
      %v639 = vpop.f32.mrb[0].mxu0
      %640 = vmatprep.mubr.bf16.mxu0 0
      %641 = vmatmul.mubr.bf16.gmra.mrb[0].mxu0 %v451
      %v642 = vpop.f32.mrb[0].mxu0
      %v643 = vadd.f32 0.0, %v642
      %v644 = vpop.f32.mrb[0].mxu0
      %v645 = vpop.f32.mrb[0].mxu0
      %v646 = vadd.f32 0.0, %v645
      %v647 = vpop.f32.mrb[0].mxu0
      %648 = vmatprep.mubr.bf16.mxu0 0
      %649 = vmatmul.mubr.bf16.gmra.mrb[0].mxu0 %v452
      %v650 = vpop.f32.mrb[0].mxu0
      %v651 = vadd.f32 0.0, %v650
      %v652 = vpop.f32.mrb[0].mxu0
      %v653 = vpop.f32.mrb[0].mxu0
      %v654 = vadd.f32 0.0, %v653
      %v655 = vpop.f32.mrb[0].mxu0
      %656 = vmatprep.mubr.bf16.mxu0 0
      %657 = vmatmul.mubr.bf16.gmra.mrb[0].mxu0 %v453
      %v658 = vpop.f32.mrb[0].mxu0
      %v659 = vadd.f32 0.0, %v658
      %v660 = vpop.f32.mrb[0].mxu0
      %v661 = vpop.f32.mrb[0].mxu0
      %v662 = vadd.f32 0.0, %v661
      %v663 = vpop.f32.mrb[0].mxu0
      %664 = vmatprep.mubr.bf16.mxu0 0
      %665 = vmatmul.mubr.bf16.gmra.mrb[0].mxu0 %v454
      %v666 = vpop.f32.mrb[0].mxu0
      %v667 = vadd.f32 0.0, %v666
      %v668 = vpop.f32.mrb[0].mxu0
      %v669 = vpop.f32.mrb[0].mxu0
      %v670 = vadd.f32 0.0, %v669
      %v671 = vpop.f32.mrb[0].mxu0
      %672 = vmatprep.mubr.bf16.mxu0 0
      %673 = vmatmul.mubr.bf16.gmra.mrb[0].mxu0 %v455
      %v674 = vpop.f32.mrb[0].mxu0
      %v675 = vadd.f32 0.0, %v674
      %v676 = vpop.f32.mrb[0].mxu0
      %v677 = vpop.f32.mrb[0].mxu0
      %v678 = vadd.f32 0.0, %v677
      %v679 = vpop.f32.mrb[0].mxu0
      %680 = vdwg.mxu0
      %v681 = vadd.f32 %v296, %v555
      %v682 = vadd.f32 %v297, %v558
      %v683 = vadd.f32 %v298, %v563
      %v684 = vadd.f32 %v299, %v566
      %v685 = vadd.f32 %v300, %v571
      %v686 = vadd.f32 %v301, %v574
      %v687 = vadd.f32 %v302, %v579
      %v688 = vadd.f32 %v303, %v582
      %v689 = vadd.f32 %v304, %v587
      %v690 = vadd.f32 %v305, %v590
      %v691 = vadd.f32 %v306, %v595
      %v692 = vadd.f32 %v307, %v598
      %v693 = vadd.f32 %v308, %v603
      %v694 = vadd.f32 %v309, %v606
      %v695 = vadd.f32 %v310, %v611
      %v696 = vadd.f32 %v311, %v614
      %v697 = vadd.f32 %v312, %v619
      %v698 = vadd.f32 %v313, %v622
      %v699 = vadd.f32 %v314, %v627
      %v700 = vadd.f32 %v315, %v630
      %v701 = vadd.f32 %v316, %v635
      %v702 = vadd.f32 %v317, %v638
      %v703 = vadd.f32 %v318, %v643
      %v704 = vadd.f32 %v319, %v646
      %v705 = vadd.f32 %v320, %v651
      %v706 = vadd.f32 %v321, %v654
      %v707 = vadd.f32 %v322, %v659
      %v708 = vadd.f32 %v323, %v662
      %v709 = vadd.f32 %v324, %v667
      %v710 = vadd.f32 %v325, %v670
      %v711 = vadd.f32 %v326, %v675
      %v712 = vadd.f32 %v327, %v678
      %713 = vst [vmem:[#allocation2] sm:$0xff] %v681
      %714 = vst [vmem:[#allocation2 + $0x8] sm:$0xff] %v682
      %715 = vst [vmem:[#allocation2 + $0x10] sm:$0xff] %v683
      %716 = vst [vmem:[#allocation2 + $0x18] sm:$0xff] %v684
      %717 = vst [vmem:[#allocation2 + $0x20] sm:$0xff] %v685
      %718 = vst [vmem:[#allocation2 + $0x28] sm:$0xff] %v686
      %719 = vst [vmem:[#allocation2 + $0x30] sm:$0xff] %v687
      %720 = vst [vmem:[#allocation2 + $0x38] sm:$0xff] %v688
      %721 = vst [vmem:[#allocation2 + $0x40] sm:$0xff] %v689
      %722 = vst [vmem:[#allocation2 + $0x48] sm:$0xff] %v690
      %723 = vst [vmem:[#allocation2 + $0x50] sm:$0xff] %v691
      %724 = vst [vmem:[#allocation2 + $0x58] sm:$0xff] %v692
      %725 = vst [vmem:[#allocation2 + $0x60] sm:$0xff] %v693
      %726 = vst [vmem:[#allocation2 + $0x68] sm:$0xff] %v694
      %727 = vst [vmem:[#allocation2 + $0x70] sm:$0xff] %v695
      %728 = vst [vmem:[#allocation2 + $0x78] sm:$0xff] %v696
      %729 = vst [vmem:[#allocation2 + $0x80] sm:$0xff] %v697
      %730 = vst [vmem:[#allocation2 + $0x88] sm:$0xff] %v698
      %731 = vst [vmem:[#allocation2 + $0x90] sm:$0xff] %v699
      %732 = vst [vmem:[#allocation2 + $0x98] sm:$0xff] %v700
      %733 = vst [vmem:[#allocation2 + $0xa0] sm:$0xff] %v701
      %734 = vst [vmem:[#allocation2 + $0xa8] sm:$0xff] %v702
      %735 = vst [vmem:[#allocation2 + $0xb0] sm:$0xff] %v703
      %736 = vst [vmem:[#allocation2 + $0xb8] sm:$0xff] %v704
      %737 = vst [vmem:[#allocation2 + $0xc0] sm:$0xff] %v705
      %738 = vst [vmem:[#allocation2 + $0xc8] sm:$0xff] %v706
      %739 = vst [vmem:[#allocation2 + $0xd0] sm:$0xff] %v707
      %740 = vst [vmem:[#allocation2 + $0xd8] sm:$0xff] %v708
      %741 = vst [vmem:[#allocation2 + $0xe0] sm:$0xff] %v709
      %742 = vst [vmem:[#allocation2 + $0xe8] sm:$0xff] %v710
      %743 = vst [vmem:[#allocation2 + $0xf0] sm:$0xff] %v711
      %744 = vst [vmem:[#allocation2 + $0xf8] sm:$0xff] %v712
      // Predicated region
      $region37: #{_lambda_.5} parent=31 // pred_check
        %p745 = pneg %p260
      $region38: #{_lambda_.5} parent=31 // pred_check_branch
        %747 = sbr.rel (%p745) target = $region40
      $region39: #{_lambda_.5} parent=31 // pred_region
        %v748 = vld [vmem:[#allocation2] sm:$0xff]
        %v749 = vld [vmem:[#allocation2 + $0x8] sm:$0xff]
        %v750 = vld [vmem:[#allocation2 + $0x10] sm:$0xff]
        %v751 = vld [vmem:[#allocation2 + $0x18] sm:$0xff]
        %v752 = vld [vmem:[#allocation2 + $0x20] sm:$0xff]
        %v753 = vld [vmem:[#allocation2 + $0x28] sm:$0xff]
        %v754 = vld [vmem:[#allocation2 + $0x30] sm:$0xff]
        %v755 = vld [vmem:[#allocation2 + $0x38] sm:$0xff]
        %v756 = vld [vmem:[#allocation2 + $0x40] sm:$0xff]
        %v757 = vld [vmem:[#allocation2 + $0x48] sm:$0xff]
        %v758 = vld [vmem:[#allocation2 + $0x50] sm:$0xff]
        %v759 = vld [vmem:[#allocation2 + $0x58] sm:$0xff]
        %v760 = vld [vmem:[#allocation2 + $0x60] sm:$0xff]
        %v761 = vld [vmem:[#allocation2 + $0x68] sm:$0xff]
        %v762 = vld [vmem:[#allocation2 + $0x70] sm:$0xff]
        %v763 = vld [vmem:[#allocation2 + $0x78] sm:$0xff]
        %v764 = vld [vmem:[#allocation2 + $0x80] sm:$0xff]
        %v765 = vld [vmem:[#allocation2 + $0x88] sm:$0xff]
        %v766 = vld [vmem:[#allocation2 + $0x90] sm:$0xff]
        %v767 = vld [vmem:[#allocation2 + $0x98] sm:$0xff]
        %v768 = vld [vmem:[#allocation2 + $0xa0] sm:$0xff]
        %v769 = vld [vmem:[#allocation2 + $0xa8] sm:$0xff]
        %v770 = vld [vmem:[#allocation2 + $0xb0] sm:$0xff]
        %v771 = vld [vmem:[#allocation2 + $0xb8] sm:$0xff]
        %v772 = vld [vmem:[#allocation2 + $0xc0] sm:$0xff]
        %v773 = vld [vmem:[#allocation2 + $0xc8] sm:$0xff]
        %v774 = vld [vmem:[#allocation2 + $0xd0] sm:$0xff]
        %v775 = vld [vmem:[#allocation2 + $0xd8] sm:$0xff]
        %v776 = vld [vmem:[#allocation2 + $0xe0] sm:$0xff]
        %v777 = vld [vmem:[#allocation2 + $0xe8] sm:$0xff]
        %v778 = vld [vmem:[#allocation2 + $0xf0] sm:$0xff]
        %v779 = vld [vmem:[#allocation2 + $0xf8] sm:$0xff]
        %v780 = vld [vmem:[%s249] sm:$0x1]
        %v782 = vlaneseq
        %v783 = vshrl.u32 %v782, 7
        %v784 = vsub.s32 0, %v783
        %v785 = vrot.slane %v780, %v784
        %v787 = vadd.f32 %v748, %v785
        %v788 = vadd.f32 %v749, %v785
        %v789 = vadd.f32 %v750, %v785
        %v790 = vadd.f32 %v751, %v785
        %v791 = vadd.f32 %v752, %v785
        %v792 = vadd.f32 %v753, %v785
        %v793 = vadd.f32 %v754, %v785
        %v794 = vadd.f32 %v755, %v785
        %v795 = vadd.f32 %v756, %v785
        %v796 = vadd.f32 %v757, %v785
        %v797 = vadd.f32 %v758, %v785
        %v798 = vadd.f32 %v759, %v785
        %v799 = vadd.f32 %v760, %v785
        %v800 = vadd.f32 %v761, %v785
        %v801 = vadd.f32 %v762, %v785
        %v802 = vadd.f32 %v763, %v785
        %v803 = vadd.f32 %v764, %v785
        %v804 = vadd.f32 %v765, %v785
        %v805 = vadd.f32 %v766, %v785
        %v806 = vadd.f32 %v767, %v785
        %v807 = vadd.f32 %v768, %v785
        %v808 = vadd.f32 %v769, %v785
        %v809 = vadd.f32 %v770, %v785
        %v810 = vadd.f32 %v771, %v785
        %v811 = vadd.f32 %v772, %v785
        %v812 = vadd.f32 %v773, %v785
        %v813 = vadd.f32 %v774, %v785
        %v814 = vadd.f32 %v775, %v785
        %v815 = vadd.f32 %v776, %v785
        %v816 = vadd.f32 %v777, %v785
        %v817 = vadd.f32 %v778, %v785
        %v818 = vadd.f32 %v779, %v785
        %vm819 = vcmp.ge.f32.partialorder %v787, 0.0
        %vm820 = vcmp.ge.f32.partialorder %v788, 0.0
        %vm821 = vcmp.ge.f32.partialorder %v789, 0.0
        %vm822 = vcmp.ge.f32.partialorder %v790, 0.0
        %vm823 = vcmp.ge.f32.partialorder %v791, 0.0
        %vm824 = vcmp.ge.f32.partialorder %v792, 0.0
        %vm825 = vcmp.ge.f32.partialorder %v793, 0.0
        %vm826 = vcmp.ge.f32.partialorder %v794, 0.0
        %vm827 = vcmp.ge.f32.partialorder %v795, 0.0
        %vm828 = vcmp.ge.f32.partialorder %v796, 0.0
        %vm829 = vcmp.ge.f32.partialorder %v797, 0.0
        %vm830 = vcmp.ge.f32.partialorder %v798, 0.0
        %vm831 = vcmp.ge.f32.partialorder %v799, 0.0
        %vm832 = vcmp.ge.f32.partialorder %v800, 0.0
        %vm833 = vcmp.ge.f32.partialorder %v801, 0.0
        %vm834 = vcmp.ge.f32.partialorder %v802, 0.0
        %vm835 = vcmp.ge.f32.partialorder %v803, 0.0
        %vm836 = vcmp.ge.f32.partialorder %v804, 0.0
        %vm837 = vcmp.ge.f32.partialorder %v805, 0.0
        %vm838 = vcmp.ge.f32.partialorder %v806, 0.0
        %vm839 = vcmp.ge.f32.partialorder %v807, 0.0
        %vm840 = vcmp.ge.f32.partialorder %v808, 0.0
        %vm841 = vcmp.ge.f32.partialorder %v809, 0.0
        %vm842 = vcmp.ge.f32.partialorder %v810, 0.0
        %vm843 = vcmp.ge.f32.partialorder %v811, 0.0
        %vm844 = vcmp.ge.f32.partialorder %v812, 0.0
        %vm845 = vcmp.ge.f32.partialorder %v813, 0.0
        %vm846 = vcmp.ge.f32.partialorder %v814, 0.0
        %vm847 = vcmp.ge.f32.partialorder %v815, 0.0
        %vm848 = vcmp.ge.f32.partialorder %v816, 0.0
        %vm849 = vcmp.ge.f32.partialorder %v817, 0.0
        %vm850 = vcmp.ge.f32.partialorder %v818, 0.0
        %v851 = vmul.f32 %v787, 0.2
        %v852 = vmul.f32 %v788, 0.2
        %v853 = vmul.f32 %v789, 0.2
        %v854 = vmul.f32 %v790, 0.2
        %v855 = vmul.f32 %v791, 0.2
        %v856 = vmul.f32 %v792, 0.2
        %v857 = vmul.f32 %v793, 0.2
        %v858 = vmul.f32 %v794, 0.2
        %v859 = vmul.f32 %v795, 0.2
        %v860 = vmul.f32 %v796, 0.2
        %v861 = vmul.f32 %v797, 0.2
        %v862 = vmul.f32 %v798, 0.2
        %v863 = vmul.f32 %v799, 0.2
        %v864 = vmul.f32 %v800, 0.2
        %v865 = vmul.f32 %v801, 0.2
        %v866 = vmul.f32 %v802, 0.2
        %v867 = vmul.f32 %v803, 0.2
        %v868 = vmul.f32 %v804, 0.2
        %v869 = vmul.f32 %v805, 0.2
        %v870 = vmul.f32 %v806, 0.2
        %v871 = vmul.f32 %v807, 0.2
        %v872 = vmul.f32 %v808, 0.2
        %v873 = vmul.f32 %v809, 0.2
        %v874 = vmul.f32 %v810, 0.2
        %v875 = vmul.f32 %v811, 0.2
        %v876 = vmul.f32 %v812, 0.2
        %v877 = vmul.f32 %v813, 0.2
        %v878 = vmul.f32 %v814, 0.2
        %v879 = vmul.f32 %v815, 0.2
        %v880 = vmul.f32 %v816, 0.2
        %v881 = vmul.f32 %v817, 0.2
        %v882 = vmul.f32 %v818, 0.2
        %v883 = vsel %vm819, %v787, %v851
        %v884 = vsel %vm820, %v788, %v852
        %v885 = vsel %vm821, %v789, %v853
        %v886 = vsel %vm822, %v790, %v854
        %v887 = vsel %vm823, %v791, %v855
        %v888 = vsel %vm824, %v792, %v856
        %v889 = vsel %vm825, %v793, %v857
        %v890 = vsel %vm826, %v794, %v858
        %v891 = vsel %vm827, %v795, %v859
        %v892 = vsel %vm828, %v796, %v860
        %v893 = vsel %vm829, %v797, %v861
        %v894 = vsel %vm830, %v798, %v862
        %v895 = vsel %vm831, %v799, %v863
        %v896 = vsel %vm832, %v800, %v864
        %v897 = vsel %vm833, %v801, %v865
        %v898 = vsel %vm834, %v802, %v866
        %v899 = vsel %vm835, %v803, %v867
        %v900 = vsel %vm836, %v804, %v868
        %v901 = vsel %vm837, %v805, %v869
        %v902 = vsel %vm838, %v806, %v870
        %v903 = vsel %vm839, %v807, %v871
        %v904 = vsel %vm840, %v808, %v872
        %v905 = vsel %vm841, %v809, %v873
        %v906 = vsel %vm842, %v810, %v874
        %v907 = vsel %vm843, %v811, %v875
        %v908 = vsel %vm844, %v812, %v876
        %v909 = vsel %vm845, %v813, %v877
        %v910 = vsel %vm846, %v814, %v878
        %v911 = vsel %vm847, %v815, %v879
        %v912 = vsel %vm848, %v816, %v880
        %v913 = vsel %vm849, %v817, %v881
        %v914 = vsel %vm850, %v818, %v882
        %v915 = vpack.c.bf16 %v884, %v883
        %v916 = vpack.c.bf16 %v886, %v885
        %v917 = vpack.c.bf16 %v888, %v887
        %v918 = vpack.c.bf16 %v890, %v889
        %v919 = vpack.c.bf16 %v892, %v891
        %v920 = vpack.c.bf16 %v894, %v893
        %v921 = vpack.c.bf16 %v896, %v895
        %v922 = vpack.c.bf16 %v898, %v897
        %v923 = vpack.c.bf16 %v900, %v899
        %v924 = vpack.c.bf16 %v902, %v901
        %v925 = vpack.c.bf16 %v904, %v903
        %v926 = vpack.c.bf16 %v906, %v905
        %v927 = vpack.c.bf16 %v908, %v907
        %v928 = vpack.c.bf16 %v910, %v909
        %v929 = vpack.c.bf16 %v912, %v911
        %v930 = vpack.c.bf16 %v914, %v913
        %v947 = vunpack.c.l.b16 %v915
        %v948 = vunpack.c.h.b16 %v915
        %v949 = vunpack.c.l.b16 %v916
        %v950 = vunpack.c.h.b16 %v916
        %v951 = vunpack.c.l.b16 %v917
        %v952 = vunpack.c.h.b16 %v917
        %v953 = vunpack.c.l.b16 %v918
        %v954 = vunpack.c.h.b16 %v918
        %v955 = vunpack.c.l.b16 %v919
        %v956 = vunpack.c.h.b16 %v919
        %v957 = vunpack.c.l.b16 %v920
        %v958 = vunpack.c.h.b16 %v920
        %v959 = vunpack.c.l.b16 %v921
        %v960 = vunpack.c.h.b16 %v921
        %v961 = vunpack.c.l.b16 %v922
        %v962 = vunpack.c.h.b16 %v922
        %v963 = vunpack.c.l.b16 %v923
        %v964 = vunpack.c.h.b16 %v923
        %v965 = vunpack.c.l.b16 %v924
        %v966 = vunpack.c.h.b16 %v924
        %v967 = vunpack.c.l.b16 %v925
        %v968 = vunpack.c.h.b16 %v925
        %v969 = vunpack.c.l.b16 %v926
        %v970 = vunpack.c.h.b16 %v926
        %v971 = vunpack.c.l.b16 %v927
        %v972 = vunpack.c.h.b16 %v927
        %v973 = vunpack.c.l.b16 %v928
        %v974 = vunpack.c.h.b16 %v928
        %v975 = vunpack.c.l.b16 %v929
        %v976 = vunpack.c.h.b16 %v929
        %v977 = vunpack.c.l.b16 %v930
        %v978 = vunpack.c.h.b16 %v930
        %v979 = vpack.c.b16 %v947, %v947
        %v980 = vpack.c.b16 %v948, %v948
        %v981 = vpack.c.b16 %v949, %v949
        %v982 = vpack.c.b16 %v950, %v950
        %v983 = vpack.c.b16 %v951, %v951
        %v984 = vpack.c.b16 %v952, %v952
        %v985 = vpack.c.b16 %v953, %v953
        %v986 = vpack.c.b16 %v954, %v954
        %v987 = vpack.c.b16 %v955, %v955
        %v988 = vpack.c.b16 %v956, %v956
        %v989 = vpack.c.b16 %v957, %v957
        %v990 = vpack.c.b16 %v958, %v958
        %v991 = vpack.c.b16 %v959, %v959
        %v992 = vpack.c.b16 %v960, %v960
        %v993 = vpack.c.b16 %v961, %v961
        %v994 = vpack.c.b16 %v962, %v962
        %v995 = vpack.c.b16 %v963, %v963
        %v996 = vpack.c.b16 %v964, %v964
        %v997 = vpack.c.b16 %v965, %v965
        %v998 = vpack.c.b16 %v966, %v966
        %v999 = vpack.c.b16 %v967, %v967
        %v1000 = vpack.c.b16 %v968, %v968
        %v1001 = vpack.c.b16 %v969, %v969
        %v1002 = vpack.c.b16 %v970, %v970
        %v1003 = vpack.c.b16 %v971, %v971
        %v1004 = vpack.c.b16 %v972, %v972
        %v1005 = vpack.c.b16 %v973, %v973
        %v1006 = vpack.c.b16 %v974, %v974
        %v1007 = vpack.c.b16 %v975, %v975
        %v1008 = vpack.c.b16 %v976, %v976
        %v1009 = vpack.c.b16 %v977, %v977
        %v1010 = vpack.c.b16 %v978, %v978
        %1043 = vst [vmem:[%s257] sm:$0xf] %v979
        %1044 = vst [vmem:[%s257 + $0x4] sm:$0xf] %v980
        %1045 = vst [vmem:[%s257 + $0x8] sm:$0xf] %v981
        %1046 = vst [vmem:[%s257 + $0xc] sm:$0xf] %v982
        %1047 = vst [vmem:[%s257 + $0x10] sm:$0xf] %v983
        %1048 = vst [vmem:[%s257 + $0x14] sm:$0xf] %v984
        %1049 = vst [vmem:[%s257 + $0x18] sm:$0xf] %v985
        %1050 = vst [vmem:[%s257 + $0x1c] sm:$0xf] %v986
        %1051 = vst [vmem:[%s257 + $0x20] sm:$0xf] %v987
        %1052 = vst [vmem:[%s257 + $0x24] sm:$0xf] %v988
        %1053 = vst [vmem:[%s257 + $0x28] sm:$0xf] %v989
        %1054 = vst [vmem:[%s257 + $0x2c] sm:$0xf] %v990
        %1055 = vst [vmem:[%s257 + $0x30] sm:$0xf] %v991
        %1056 = vst [vmem:[%s257 + $0x34] sm:$0xf] %v992
        %1057 = vst [vmem:[%s257 + $0x38] sm:$0xf] %v993
        %1058 = vst [vmem:[%s257 + $0x3c] sm:$0xf] %v994
        %1059 = vst [vmem:[%s257 + $0x40] sm:$0xf] %v995
        %1060 = vst [vmem:[%s257 + $0x44] sm:$0xf] %v996
        %1061 = vst [vmem:[%s257 + $0x48] sm:$0xf] %v997
        %1062 = vst [vmem:[%s257 + $0x4c] sm:$0xf] %v998
        %1063 = vst [vmem:[%s257 + $0x50] sm:$0xf] %v999
        %1064 = vst [vmem:[%s257 + $0x54] sm:$0xf] %v1000
        %1065 = vst [vmem:[%s257 + $0x58] sm:$0xf] %v1001
        %1066 = vst [vmem:[%s257 + $0x5c] sm:$0xf] %v1002
        %1067 = vst [vmem:[%s257 + $0x60] sm:$0xf] %v1003
        %1068 = vst [vmem:[%s257 + $0x64] sm:$0xf] %v1004
        %1069 = vst [vmem:[%s257 + $0x68] sm:$0xf] %v1005
        %1070 = vst [vmem:[%s257 + $0x6c] sm:$0xf] %v1006
        %1071 = vst [vmem:[%s257 + $0x70] sm:$0xf] %v1007
        %1072 = vst [vmem:[%s257 + $0x74] sm:$0xf] %v1008
        %1073 = vst [vmem:[%s257 + $0x78] sm:$0xf] %v1009
        %1074 = vst [vmem:[%s257 + $0x7c] sm:$0xf] %v1010
      $region40: #{_lambda_.5} parent=31 // pred_fallthru
        _
      %s1075 = smul.u32 32, %s19
      %p1076 = scmp.lt.s32.totalorder %s1075, 63
      %s1077 = scalar_select %p1076, %s1075, 63
      %p1078 = scmp.lt.s32.totalorder %s20, 0
      %s1079 = scalar_select %p1078, %s20, 0
      %s1080 = sadd.s32 %s1079, %s1077
      %s1081 = smul.addr %s1080, 4
      %s1082 = scalar_lea.vmem %s3, %s1081
      // Predicated region
      $region41: #{_lambda_.5} parent=31 // pred_check
        %p1083 = pneg %p135
      $region42: #{_lambda_.5} parent=31 // pred_check_branch
        %1085 = sbr.rel (%p1083) target = $region44
      $region43: #{_lambda_.5} parent=31 // pred_region
        %s1086 = smul.u32 32, %s19
      $region44: #{_lambda_.5} parent=31 // pred_fallthru
        _
    $region32: #{_lambda_.5} parent=5 // pred_fallthru
      _
    %p1087 = scmp.le.s32.totalorder 2, %s9
    // Predicated region
    $region45: #{_lambda_.5} parent=5 // pred_check
      %p1088 = pneg %p1087
    $region46: #{_lambda_.5} parent=5 // pred_check_branch
      %1090 = sbr.rel (%p1088) target = $region48
    $region47: #{_lambda_.5} parent=5 // pred_region
      %s1091 = ssub.s32 %s9, 2
      // Predicated region
      $region49: #{_lambda_.5} parent=47 // pred_check
        %p1092 = pneg %p141
      $region50: #{_lambda_.5} parent=47 // pred_check_branch
        %1094 = sbr.rel (%p1092) target = $region52
      $region51: #{_lambda_.5} parent=47 // pred_region
        %s1095 = smul.u32 32, %s22
        %p1096 = scmp.lt.s32.totalorder %s1095, 63
        %s1097 = scalar_select %p1096, %s1095, 63
        %p1098 = scmp.lt.s32.totalorder %s23, 0
        %s1099 = scalar_select %p1098, %s23, 0
        %s1100 = sadd.s32 %s1099, %s1097
        %s1101 = smul.addr %s1100, 4
        %s1102 = scalar_lea.vmem %s3, %s1101
      $region52: #{_lambda_.5} parent=47 // pred_fallthru
        _
    $region48: #{_lambda_.5} parent=5 // pred_fallthru
      _
  $region6: #{_lambda_.5} parent=0 // loop_footer
    %s13 = sadd.s32 1, %s9
  $region7: #{_lambda_.5} parent=0 // loop_footer_branch
    %8 = sbr.rel target = $region3
  $region8: #{_lambda_.5} parent=0 // loop_exit
    _

// kernel: _lambda_.6
$region0: #{_lambda_.6}
  #allocation0 [shape = 'u32[]', space=smem, size = 0x4, offset = 0x4, fixed_abs, tag = 'smem constant byte address 0x4 - core index']
  #allocation1 [shape = 'u32[144,128]{1,0:T(1,128)}', space=vmem, size = 0x12000, scoped, tag = 'internal scratch']
  #allocation2 [shape = 'f32[128,128]{1,0:T(8,128)}', space=vmem, size = 0x10000, scoped, tag = 'scratch operand']
  %s0 = inlined_call_operand.vmem [shape: bf16[128,128], index: 0, kind: input, shape index: {}]
  %s1 = inlined_call_operand.vmem [shape: bf16[128,128], index: 1, kind: input, shape index: {}]
  %s2 = inlined_call_operand.vmem [shape: f32[1,128], index: 2, kind: input, shape index: {}]
  %s3 = inlined_call_operand.vmem [shape: bf16[128,128], index: 3, kind: output, shape index: {}]
  %s4 = sld [smem:[#allocation0]]
  $region30: #{_lambda_.6} parent=0
    _
  %s6 = ssub.s32 1, %s4
  %s7 = scalar_select 0, %s6, %s4
  // Predicated region
  $region2: #{_lambda_.6} parent=0 // pred_check
    _
  $region3: #{_lambda_.6} parent=0 // pred_check_branch
    %9 = sbr.rel (0) target = $region5
  $region4: #{_lambda_.6} parent=0 // pred_region
    _
  $region5: #{_lambda_.6} parent=0 // pred_fallthru
    _
  // Predicated region
  $region6: #{_lambda_.6} parent=0 // pred_check
    _
  $region7: #{_lambda_.6} parent=0 // pred_check_branch
    %11 = sbr.rel (0) target = $region9
  $region8: #{_lambda_.6} parent=0 // pred_region
    _
  $region9: #{_lambda_.6} parent=0 // pred_fallthru
    _
  // Predicated region
  $region10: #{_lambda_.6} parent=0 // pred_check
    _
  $region11: #{_lambda_.6} parent=0 // pred_check_branch
    %13 = sbr.rel (0) target = $region13
  $region12: #{_lambda_.6} parent=0 // pred_region
    _
  $region13: #{_lambda_.6} parent=0 // pred_fallthru
    _
  %p15 = scmp.eq.s32.totalorder 0, 0
  // Predicated region
  $region14: #{_lambda_.6} parent=0 // pred_check
    %p16 = pneg %p15
  $region15: #{_lambda_.6} parent=0 // pred_check_branch
    %18 = sbr.rel (%p16) target = $region17
  $region16: #{_lambda_.6} parent=0 // pred_region
    %19 = vst [vmem:[#allocation2] sm:$0xff] 0.0
    %20 = vst [vmem:[#allocation2 + $0x8] sm:$0xff] 0.0
    %21 = vst [vmem:[#allocation2 + $0x10] sm:$0xff] 0.0
    %22 = vst [vmem:[#allocation2 + $0x18] sm:$0xff] 0.0
    %23 = vst [vmem:[#allocation2 + $0x20] sm:$0xff] 0.0
    %24 = vst [vmem:[#allocation2 + $0x28] sm:$0xff] 0.0
    %25 = vst [vmem:[#allocation2 + $0x30] sm:$0xff] 0.0
    %26 = vst [vmem:[#allocation2 + $0x38] sm:$0xff] 0.0
    %27 = vst [vmem:[#allocation2 + $0x40] sm:$0xff] 0.0
    %28 = vst [vmem:[#allocation2 + $0x48] sm:$0xff] 0.0
    %29 = vst [vmem:[#allocation2 + $0x50] sm:$0xff] 0.0
    %30 = vst [vmem:[#allocation2 + $0x58] sm:$0xff] 0.0
    %31 = vst [vmem:[#allocation2 + $0x60] sm:$0xff] 0.0
    %32 = vst [vmem:[#allocation2 + $0x68] sm:$0xff] 0.0
    %33 = vst [vmem:[#allocation2 + $0x70] sm:$0xff] 0.0
    %34 = vst [vmem:[#allocation2 + $0x78] sm:$0xff] 0.0
  $region17: #{_lambda_.6} parent=0 // pred_fallthru
    _
  %v35 = vld [vmem:[#allocation2] sm:$0xff]
  %v36 = vld [vmem:[#allocation2 + $0x8] sm:$0xff]
  %v37 = vld [vmem:[#allocation2 + $0x10] sm:$0xff]
  %v38 = vld [vmem:[#allocation2 + $0x18] sm:$0xff]
  %v39 = vld [vmem:[#allocation2 + $0x20] sm:$0xff]
  %v40 = vld [vmem:[#allocation2 + $0x28] sm:$0xff]
  %v41 = vld [vmem:[#allocation2 + $0x30] sm:$0xff]
  %v42 = vld [vmem:[#allocation2 + $0x38] sm:$0xff]
  %v43 = vld [vmem:[#allocation2 + $0x40] sm:$0xff]
  %v44 = vld [vmem:[#allocation2 + $0x48] sm:$0xff]
  %v45 = vld [vmem:[#allocation2 + $0x50] sm:$0xff]
  %v46 = vld [vmem:[#allocation2 + $0x58] sm:$0xff]
  %v47 = vld [vmem:[#allocation2 + $0x60] sm:$0xff]
  %v48 = vld [vmem:[#allocation2 + $0x68] sm:$0xff]
  %v49 = vld [vmem:[#allocation2 + $0x70] sm:$0xff]
  %v50 = vld [vmem:[#allocation2 + $0x78] sm:$0xff]
  %v51 = vld [vmem:[%s0] sm:$0xf]
  %v52 = vld [vmem:[%s0 + $0x4] sm:$0xf]
  %v53 = vld [vmem:[%s0 + $0x8] sm:$0xf]
  %v54 = vld [vmem:[%s0 + $0xc] sm:$0xf]
  %v55 = vld [vmem:[%s0 + $0x10] sm:$0xf]
  %v56 = vld [vmem:[%s0 + $0x14] sm:$0xf]
  %v57 = vld [vmem:[%s0 + $0x18] sm:$0xf]
  %v58 = vld [vmem:[%s0 + $0x1c] sm:$0xf]
  %v59 = vld [vmem:[%s0 + $0x20] sm:$0xf]
  %v60 = vld [vmem:[%s0 + $0x24] sm:$0xf]
  %v61 = vld [vmem:[%s0 + $0x28] sm:$0xf]
  %v62 = vld [vmem:[%s0 + $0x2c] sm:$0xf]
  %v63 = vld [vmem:[%s0 + $0x30] sm:$0xf]
  %v64 = vld [vmem:[%s0 + $0x34] sm:$0xf]
  %v65 = vld [vmem:[%s0 + $0x38] sm:$0xf]
  %v66 = vld [vmem:[%s0 + $0x3c] sm:$0xf]
  %v67 = vld [vmem:[%s1] sm:$0xf]
  %v68 = vld [vmem:[%s1 + $0x4] sm:$0xf]
  %v69 = vld [vmem:[%s1 + $0x8] sm:$0xf]
  %v70 = vld [vmem:[%s1 + $0xc] sm:$0xf]
  %v71 = vld [vmem:[%s1 + $0x10] sm:$0xf]
  %v72 = vld [vmem:[%s1 + $0x14] sm:$0xf]
  %v73 = vld [vmem:[%s1 + $0x18] sm:$0xf]
  %v74 = vld [vmem:[%s1 + $0x1c] sm:$0xf]
  %v75 = vld [vmem:[%s1 + $0x20] sm:$0xf]
  %v76 = vld [vmem:[%s1 + $0x24] sm:$0xf]
  %v77 = vld [vmem:[%s1 + $0x28] sm:$0xf]
  %v78 = vld [vmem:[%s1 + $0x2c] sm:$0xf]
  %v79 = vld [vmem:[%s1 + $0x30] sm:$0xf]
  %v80 = vld [vmem:[%s1 + $0x34] sm:$0xf]
  %v81 = vld [vmem:[%s1 + $0x38] sm:$0xf]
  %v82 = vld [vmem:[%s1 + $0x3c] sm:$0xf]
  %v99 = vunpack.c.l.b16 %v51
  %v100 = vunpack.c.l.b16 %v52
  %v101 = vunpack.c.l.b16 %v53
  %v102 = vunpack.c.l.b16 %v54
  %v103 = vunpack.c.l.b16 %v55
  %v104 = vunpack.c.l.b16 %v56
  %v105 = vunpack.c.l.b16 %v57
  %v106 = vunpack.c.l.b16 %v58
  %v107 = vunpack.c.l.b16 %v59
  %v108 = vunpack.c.l.b16 %v60
  %v109 = vunpack.c.l.b16 %v61
  %v110 = vunpack.c.l.b16 %v62
  %v111 = vunpack.c.l.b16 %v63
  %v112 = vunpack.c.l.b16 %v64
  %v113 = vunpack.c.l.b16 %v65
  %v114 = vunpack.c.l.b16 %v66
  %v115 = vpack.c.b16 %v100, %v99
  %v116 = vpack.c.b16 %v102, %v101
  %v117 = vpack.c.b16 %v104, %v103
  %v118 = vpack.c.b16 %v106, %v105
  %v119 = vpack.c.b16 %v108, %v107
  %v120 = vpack.c.b16 %v110, %v109
  %v121 = vpack.c.b16 %v112, %v111
  %v122 = vpack.c.b16 %v114, %v113
  %v147 = vunpack.c.l.b16 %v67
  %v148 = vunpack.c.l.b16 %v68
  %v149 = vunpack.c.l.b16 %v69
  %v150 = vunpack.c.l.b16 %v70
  %v151 = vunpack.c.l.b16 %v71
  %v152 = vunpack.c.l.b16 %v72
  %v153 = vunpack.c.l.b16 %v73
  %v154 = vunpack.c.l.b16 %v74
  %v155 = vunpack.c.l.b16 %v75
  %v156 = vunpack.c.l.b16 %v76
  %v157 = vunpack.c.l.b16 %v77
  %v158 = vunpack.c.l.b16 %v78
  %v159 = vunpack.c.l.b16 %v79
  %v160 = vunpack.c.l.b16 %v80
  %v161 = vunpack.c.l.b16 %v81
  %v162 = vunpack.c.l.b16 %v82
  %v163 = vpack.c.b16 %v148, %v147
  %v164 = vpack.c.b16 %v150, %v149
  %v165 = vpack.c.b16 %v152, %v151
  %v166 = vpack.c.b16 %v154, %v153
  %v167 = vpack.c.b16 %v156, %v155
  %v168 = vpack.c.b16 %v158, %v157
  %v169 = vpack.c.b16 %v160, %v159
  %v170 = vpack.c.b16 %v162, %v161
  %179 = vmatprep.subr.bf16.mxu0 0
  %180 = vmatpush1.bf16.msra.mxu0 %v163
  %181 = vmatprep.subr.bf16.mxu0 0
  %182 = vmatpush1.bf16.msra.mxu0 %v164
  %183 = vmatprep.subr.bf16.mxu0 0
  %184 = vmatpush1.bf16.msra.mxu0 %v165
  %185 = vmatprep.subr.bf16.mxu0 0
  %186 = vmatpush1.bf16.msra.mxu0 %v166
  %187 = vmatprep.subr.bf16.mxu0 0
  %188 = vmatpush1.bf16.msra.mxu0 %v167
  %189 = vmatprep.subr.bf16.mxu0 0
  %190 = vmatpush1.bf16.msra.mxu0 %v168
  %191 = vmatprep.subr.bf16.mxu0 0
  %192 = vmatpush1.bf16.msra.mxu0 %v169
  %193 = vmatprep.subr.bf16.mxu0 0
  %194 = vmatpush1.bf16.msra.mxu0 %v170
  %195 = vmatprep.subr.bf16.mxu0 0
  %196 = vmatpush1.bf16.msra.mxu0 0
  %197 = vmatprep.subr.bf16.mxu0 0
  %198 = vmatpush1.bf16.msra.mxu0 0
  %199 = vmatprep.subr.bf16.mxu0 0
  %200 = vmatpush1.bf16.msra.mxu0 0
  %201 = vmatprep.subr.bf16.mxu0 0
  %202 = vmatpush1.bf16.msra.mxu0 0
  %203 = vmatprep.subr.bf16.mxu0 0
  %204 = vmatpush1.bf16.msra.mxu0 0
  %205 = vmatprep.subr.bf16.mxu0 0
  %206 = vmatpush1.bf16.msra.mxu0 0
  %207 = vmatprep.subr.bf16.mxu0 0
  %208 = vmatpush1.bf16.msra.mxu0 0
  %209 = vmatprep.subr.bf16.mxu0 0
  %210 = vmatpush1.bf16.msra.mxu0 0
  %211 = vmatprep.mubr.bf16.mxu0 0
  %212 = vmatmul.mubr.bf16.gmra.mrb[0].mxu0 %v115
  %v213 = vpop.f32.mrb[0].mxu0
  %v214 = vadd.f32 0.0, %v213
  %v215 = vpop.f32.mrb[0].mxu0
  %v216 = vpop.f32.mrb[0].mxu0
  %v217 = vadd.f32 0.0, %v216
  %v218 = vpop.f32.mrb[0].mxu0
  %219 = vmatprep.mubr.bf16.mxu0 0
  %220 = vmatmul.mubr.bf16.gmra.mrb[0].mxu0 %v116
  %v221 = vpop.f32.mrb[0].mxu0
  %v222 = vadd.f32 0.0, %v221
  %v223 = vpop.f32.mrb[0].mxu0
  %v224 = vpop.f32.mrb[0].mxu0
  %v225 = vadd.f32 0.0, %v224
  %v226 = vpop.f32.mrb[0].mxu0
  %227 = vmatprep.mubr.bf16.mxu0 0
  %228 = vmatmul.mubr.bf16.gmra.mrb[0].mxu0 %v117
  %v229 = vpop.f32.mrb[0].mxu0
  %v230 = vadd.f32 0.0, %v229
  %v231 = vpop.f32.mrb[0].mxu0
  %v232 = vpop.f32.mrb[0].mxu0
  %v233 = vadd.f32 0.0, %v232
  %v234 = vpop.f32.mrb[0].mxu0
  %235 = vmatprep.mubr.bf16.mxu0 0
  %236 = vmatmul.mubr.bf16.gmra.mrb[0].mxu0 %v118
  %v237 = vpop.f32.mrb[0].mxu0
  %v238 = vadd.f32 0.0, %v237
  %v239 = vpop.f32.mrb[0].mxu0
  %v240 = vpop.f32.mrb[0].mxu0
  %v241 = vadd.f32 0.0, %v240
  %v242 = vpop.f32.mrb[0].mxu0
  %243 = vmatprep.mubr.bf16.mxu0 0
  %244 = vmatmul.mubr.bf16.gmra.mrb[0].mxu0 %v119
  %v245 = vpop.f32.mrb[0].mxu0
  %v246 = vadd.f32 0.0, %v245
  %v247 = vpop.f32.mrb[0].mxu0
  %v248 = vpop.f32.mrb[0].mxu0
  %v249 = vadd.f32 0.0, %v248
  %v250 = vpop.f32.mrb[0].mxu0
  %251 = vmatprep.mubr.bf16.mxu0 0
  %252 = vmatmul.mubr.bf16.gmra.mrb[0].mxu0 %v120
  %v253 = vpop.f32.mrb[0].mxu0
  %v254 = vadd.f32 0.0, %v253
  %v255 = vpop.f32.mrb[0].mxu0
  %v256 = vpop.f32.mrb[0].mxu0
  %v257 = vadd.f32 0.0, %v256
  %v258 = vpop.f32.mrb[0].mxu0
  %259 = vmatprep.mubr.bf16.mxu0 0
  %260 = vmatmul.mubr.bf16.gmra.mrb[0].mxu0 %v121
  %v261 = vpop.f32.mrb[0].mxu0
  %v262 = vadd.f32 0.0, %v261
  %v263 = vpop.f32.mrb[0].mxu0
  %v264 = vpop.f32.mrb[0].mxu0
  %v265 = vadd.f32 0.0, %v264
  %v266 = vpop.f32.mrb[0].mxu0
  %267 = vmatprep.mubr.bf16.mxu0 0
  %268 = vmatmul.mubr.bf16.gmra.mrb[0].mxu0 %v122
  %v269 = vpop.f32.mrb[0].mxu0
  %v270 = vadd.f32 0.0, %v269
  %v271 = vpop.f32.mrb[0].mxu0
  %v272 = vpop.f32.mrb[0].mxu0
  %v273 = vadd.f32 0.0, %v272
  %v274 = vpop.f32.mrb[0].mxu0
  %275 = vdwg.mxu0
  %v276 = vadd.f32 %v35, %v214
  %v277 = vadd.f32 %v36, %v217
  %v278 = vadd.f32 %v37, %v222
  %v279 = vadd.f32 %v38, %v225
  %v280 = vadd.f32 %v39, %v230
  %v281 = vadd.f32 %v40, %v233
  %v282 = vadd.f32 %v41, %v238
  %v283 = vadd.f32 %v42, %v241
  %v284 = vadd.f32 %v43, %v246
  %v285 = vadd.f32 %v44, %v249
  %v286 = vadd.f32 %v45, %v254
  %v287 = vadd.f32 %v46, %v257
  %v288 = vadd.f32 %v47, %v262
  %v289 = vadd.f32 %v48, %v265
  %v290 = vadd.f32 %v49, %v270
  %v291 = vadd.f32 %v50, %v273
  %292 = vst [vmem:[#allocation2] sm:$0xff] %v276
  %293 = vst [vmem:[#allocation2 + $0x8] sm:$0xff] %v277
  %294 = vst [vmem:[#allocation2 + $0x10] sm:$0xff] %v278
  %295 = vst [vmem:[#allocation2 + $0x18] sm:$0xff] %v279
  %296 = vst [vmem:[#allocation2 + $0x20] sm:$0xff] %v280
  %297 = vst [vmem:[#allocation2 + $0x28] sm:$0xff] %v281
  %298 = vst [vmem:[#allocation2 + $0x30] sm:$0xff] %v282
  %299 = vst [vmem:[#allocation2 + $0x38] sm:$0xff] %v283
  %300 = vst [vmem:[#allocation2 + $0x40] sm:$0xff] %v284
  %301 = vst [vmem:[#allocation2 + $0x48] sm:$0xff] %v285
  %302 = vst [vmem:[#allocation2 + $0x50] sm:$0xff] %v286
  %303 = vst [vmem:[#allocation2 + $0x58] sm:$0xff] %v287
  %304 = vst [vmem:[#allocation2 + $0x60] sm:$0xff] %v288
  %305 = vst [vmem:[#allocation2 + $0x68] sm:$0xff] %v289
  %306 = vst [vmem:[#allocation2 + $0x70] sm:$0xff] %v290
  %307 = vst [vmem:[#allocation2 + $0x78] sm:$0xff] %v291
  // Predicated region
  $region18: #{_lambda_.6} parent=0 // pred_check
    %p308 = pneg %p15
  $region19: #{_lambda_.6} parent=0 // pred_check_branch
    %310 = sbr.rel (%p308) target = $region21
  $region20: #{_lambda_.6} parent=0 // pred_region
    %v311 = vld [vmem:[#allocation2] sm:$0xff]
    %v312 = vld [vmem:[#allocation2 + $0x8] sm:$0xff]
    %v313 = vld [vmem:[#allocation2 + $0x10] sm:$0xff]
    %v314 = vld [vmem:[#allocation2 + $0x18] sm:$0xff]
    %v315 = vld [vmem:[#allocation2 + $0x20] sm:$0xff]
    %v316 = vld [vmem:[#allocation2 + $0x28] sm:$0xff]
    %v317 = vld [vmem:[#allocation2 + $0x30] sm:$0xff]
    %v318 = vld [vmem:[#allocation2 + $0x38] sm:$0xff]
    %v319 = vld [vmem:[#allocation2 + $0x40] sm:$0xff]
    %v320 = vld [vmem:[#allocation2 + $0x48] sm:$0xff]
    %v321 = vld [vmem:[#allocation2 + $0x50] sm:$0xff]
    %v322 = vld [vmem:[#allocation2 + $0x58] sm:$0xff]
    %v323 = vld [vmem:[#allocation2 + $0x60] sm:$0xff]
    %v324 = vld [vmem:[#allocation2 + $0x68] sm:$0xff]
    %v325 = vld [vmem:[#allocation2 + $0x70] sm:$0xff]
    %v326 = vld [vmem:[#allocation2 + $0x78] sm:$0xff]
    %vm327 = vcmp.ge.f32.partialorder %v311, 0.0
    %vm328 = vcmp.ge.f32.partialorder %v312, 0.0
    %vm329 = vcmp.ge.f32.partialorder %v313, 0.0
    %vm330 = vcmp.ge.f32.partialorder %v314, 0.0
    %vm331 = vcmp.ge.f32.partialorder %v315, 0.0
    %vm332 = vcmp.ge.f32.partialorder %v316, 0.0
    %vm333 = vcmp.ge.f32.partialorder %v317, 0.0
    %vm334 = vcmp.ge.f32.partialorder %v318, 0.0
    %vm335 = vcmp.ge.f32.partialorder %v319, 0.0
    %vm336 = vcmp.ge.f32.partialorder %v320, 0.0
    %vm337 = vcmp.ge.f32.partialorder %v321, 0.0
    %vm338 = vcmp.ge.f32.partialorder %v322, 0.0
    %vm339 = vcmp.ge.f32.partialorder %v323, 0.0
    %vm340 = vcmp.ge.f32.partialorder %v324, 0.0
    %vm341 = vcmp.ge.f32.partialorder %v325, 0.0
    %vm342 = vcmp.ge.f32.partialorder %v326, 0.0
    %v343 = vmul.f32 %v311, 0.2
    %v344 = vmul.f32 %v312, 0.2
    %v345 = vmul.f32 %v313, 0.2
    %v346 = vmul.f32 %v314, 0.2
    %v347 = vmul.f32 %v315, 0.2
    %v348 = vmul.f32 %v316, 0.2
    %v349 = vmul.f32 %v317, 0.2
    %v350 = vmul.f32 %v318, 0.2
    %v351 = vmul.f32 %v319, 0.2
    %v352 = vmul.f32 %v320, 0.2
    %v353 = vmul.f32 %v321, 0.2
    %v354 = vmul.f32 %v322, 0.2
    %v355 = vmul.f32 %v323, 0.2
    %v356 = vmul.f32 %v324, 0.2
    %v357 = vmul.f32 %v325, 0.2
    %v358 = vmul.f32 %v326, 0.2
    %v359 = vsel %vm327, %v311, %v343
    %v360 = vsel %vm328, %v312, %v344
    %v361 = vsel %vm329, %v313, %v345
    %v362 = vsel %vm330, %v314, %v346
    %v363 = vsel %vm331, %v315, %v347
    %v364 = vsel %vm332, %v316, %v348
    %v365 = vsel %vm333, %v317, %v349
    %v366 = vsel %vm334, %v318, %v350
    %v367 = vsel %vm335, %v319, %v351
    %v368 = vsel %vm336, %v320, %v352
    %v369 = vsel %vm337, %v321, %v353
    %v370 = vsel %vm338, %v322, %v354
    %v371 = vsel %vm339, %v323, %v355
    %v372 = vsel %vm340, %v324, %v356
    %v373 = vsel %vm341, %v325, %v357
    %v374 = vsel %vm342, %v326, %v358
    %v375 = vpack.c.bf16 %v360, %v359
    %v376 = vpack.c.bf16 %v362, %v361
    %v377 = vpack.c.bf16 %v364, %v363
    %v378 = vpack.c.bf16 %v366, %v365
    %v379 = vpack.c.bf16 %v368, %v367
    %v380 = vpack.c.bf16 %v370, %v369
    %v381 = vpack.c.bf16 %v372, %v371
    %v382 = vpack.c.bf16 %v374, %v373
    %v391 = vunpack.c.l.b16 %v375
    %v392 = vunpack.c.h.b16 %v375
    %v393 = vunpack.c.l.b16 %v376
    %v394 = vunpack.c.h.b16 %v376
    %v395 = vunpack.c.l.b16 %v377
    %v396 = vunpack.c.h.b16 %v377
    %v397 = vunpack.c.l.b16 %v378
    %v398 = vunpack.c.h.b16 %v378
    %v399 = vunpack.c.l.b16 %v379
    %v400 = vunpack.c.h.b16 %v379
    %v401 = vunpack.c.l.b16 %v380
    %v402 = vunpack.c.h.b16 %v380
    %v403 = vunpack.c.l.b16 %v381
    %v404 = vunpack.c.h.b16 %v381
    %v405 = vunpack.c.l.b16 %v382
    %v406 = vunpack.c.h.b16 %v382
    %v407 = vpack.c.b16 %v391, %v391
    %v408 = vpack.c.b16 %v392, %v392
    %v409 = vpack.c.b16 %v393, %v393
    %v410 = vpack.c.b16 %v394, %v394
    %v411 = vpack.c.b16 %v395, %v395
    %v412 = vpack.c.b16 %v396, %v396
    %v413 = vpack.c.b16 %v397, %v397
    %v414 = vpack.c.b16 %v398, %v398
    %v415 = vpack.c.b16 %v399, %v399
    %v416 = vpack.c.b16 %v400, %v400
    %v417 = vpack.c.b16 %v401, %v401
    %v418 = vpack.c.b16 %v402, %v402
    %v419 = vpack.c.b16 %v403, %v403
    %v420 = vpack.c.b16 %v404, %v404
    %v421 = vpack.c.b16 %v405, %v405
    %v422 = vpack.c.b16 %v406, %v406
    %439 = vst [vmem:[%s3] sm:$0xf] %v407
    %440 = vst [vmem:[%s3 + $0x4] sm:$0xf] %v408
    %441 = vst [vmem:[%s3 + $0x8] sm:$0xf] %v409
    %442 = vst [vmem:[%s3 + $0xc] sm:$0xf] %v410
    %443 = vst [vmem:[%s3 + $0x10] sm:$0xf] %v411
    %444 = vst [vmem:[%s3 + $0x14] sm:$0xf] %v412
    %445 = vst [vmem:[%s3 + $0x18] sm:$0xf] %v413
    %446 = vst [vmem:[%s3 + $0x1c] sm:$0xf] %v414
    %447 = vst [vmem:[%s3 + $0x20] sm:$0xf] %v415
    %448 = vst [vmem:[%s3 + $0x24] sm:$0xf] %v416
    %449 = vst [vmem:[%s3 + $0x28] sm:$0xf] %v417
    %450 = vst [vmem:[%s3 + $0x2c] sm:$0xf] %v418
    %451 = vst [vmem:[%s3 + $0x30] sm:$0xf] %v419
    %452 = vst [vmem:[%s3 + $0x34] sm:$0xf] %v420
    %453 = vst [vmem:[%s3 + $0x38] sm:$0xf] %v421
    %454 = vst [vmem:[%s3 + $0x3c] sm:$0xf] %v422
  $region21: #{_lambda_.6} parent=0 // pred_fallthru
    _
  // Predicated region
  $region22: #{_lambda_.6} parent=0 // pred_check
    _
  $region23: #{_lambda_.6} parent=0 // pred_check_branch
    %456 = sbr.rel (0) target = $region25
  $region24: #{_lambda_.6} parent=0 // pred_region
    _
  $region25: #{_lambda_.6} parent=0 // pred_fallthru
    _
  // Predicated region
  $region26: #{_lambda_.6} parent=0 // pred_check
    _
  $region27: #{_lambda_.6} parent=0 // pred_check_branch
    %458 = sbr.rel (0) target = $region29
  $region28: #{_lambda_.6} parent=0 // pred_region
    _
  $region29: #{_lambda_.6} parent=0 // pred_fallthru
    _

// kernel: _lambda_.7
$region0: #{_lambda_.7}
  #allocation0 [shape = 'u32[]', space=smem, size = 0x4, offset = 0x4, fixed_abs, tag = 'smem constant byte address 0x4 - core index']
  #allocation1 [shape = 'u32[144,128]{1,0:T(1,128)}', space=vmem, size = 0x12000, scoped, tag = 'internal scratch']
  #allocation2 [shape = 'f32[32,128]{1,0:T(8,128)}', space=vmem, size = 0x4000, scoped, tag = 'scratch operand']
  %s0 = inlined_call_operand.vmem [shape: bf16[32,256], index: 0, kind: input, shape index: {}]
  %s1 = inlined_call_operand.vmem [shape: bf16[256,128], index: 1, kind: input, shape index: {}]
  %s2 = inlined_call_operand.vmem [shape: f32[1,128], index: 2, kind: input, shape index: {}]
  %s3 = inlined_call_operand.vmem [shape: bf16[32,128], index: 3, kind: output, shape index: {}]
  %s4 = sld [smem:[#allocation0]]
  $region30: #{_lambda_.7} parent=0
    _
  %s6 = ssub.s32 1, %s4
  %s7 = scalar_select 0, %s6, %s4
  // Predicated region
  $region2: #{_lambda_.7} parent=0 // pred_check
    _
  $region3: #{_lambda_.7} parent=0 // pred_check_branch
    %9 = sbr.rel (0) target = $region5
  $region4: #{_lambda_.7} parent=0 // pred_region
    _
  $region5: #{_lambda_.7} parent=0 // pred_fallthru
    _
  // Predicated region
  $region6: #{_lambda_.7} parent=0 // pred_check
    _
  $region7: #{_lambda_.7} parent=0 // pred_check_branch
    %11 = sbr.rel (0) target = $region9
  $region8: #{_lambda_.7} parent=0 // pred_region
    _
  $region9: #{_lambda_.7} parent=0 // pred_fallthru
    _
  // Predicated region
  $region10: #{_lambda_.7} parent=0 // pred_check
    _
  $region11: #{_lambda_.7} parent=0 // pred_check_branch
    %13 = sbr.rel (0) target = $region13
  $region12: #{_lambda_.7} parent=0 // pred_region
    _
  $region13: #{_lambda_.7} parent=0 // pred_fallthru
    _
  %p15 = scmp.eq.s32.totalorder 0, 0
  // Predicated region
  $region14: #{_lambda_.7} parent=0 // pred_check
    %p16 = pneg %p15
  $region15: #{_lambda_.7} parent=0 // pred_check_branch
    %18 = sbr.rel (%p16) target = $region17
  $region16: #{_lambda_.7} parent=0 // pred_region
    %19 = vst [vmem:[#allocation2] sm:$0xff] 0.0
    %20 = vst [vmem:[#allocation2 + $0x8] sm:$0xff] 0.0
    %21 = vst [vmem:[#allocation2 + $0x10] sm:$0xff] 0.0
    %22 = vst [vmem:[#allocation2 + $0x18] sm:$0xff] 0.0
  $region17: #{_lambda_.7} parent=0 // pred_fallthru
    _
  %v23 = vld [vmem:[#allocation2] sm:$0xff]
  %v24 = vld [vmem:[#allocation2 + $0x8] sm:$0xff]
  %v25 = vld [vmem:[#allocation2 + $0x10] sm:$0xff]
  %v26 = vld [vmem:[#allocation2 + $0x18] sm:$0xff]
  %v27 = vld [vmem:[%s0] sm:$0xff]
  %v28 = vld [vmem:[%s0 + $0x8] sm:$0xff]
  %v29 = vld [vmem:[%s0 + $0x10] sm:$0xff]
  %v30 = vld [vmem:[%s0 + $0x18] sm:$0xff]
  %v31 = vld [vmem:[%s1] sm:$0xf]
  %v32 = vld [vmem:[%s1 + $0x4] sm:$0xf]
  %v33 = vld [vmem:[%s1 + $0x8] sm:$0xf]
  %v34 = vld [vmem:[%s1 + $0xc] sm:$0xf]
  %v35 = vld [vmem:[%s1 + $0x10] sm:$0xf]
  %v36 = vld [vmem:[%s1 + $0x14] sm:$0xf]
  %v37 = vld [vmem:[%s1 + $0x18] sm:$0xf]
  %v38 = vld [vmem:[%s1 + $0x1c] sm:$0xf]
  %v39 = vld [vmem:[%s1 + $0x20] sm:$0xf]
  %v40 = vld [vmem:[%s1 + $0x24] sm:$0xf]
  %v41 = vld [vmem:[%s1 + $0x28] sm:$0xf]
  %v42 = vld [vmem:[%s1 + $0x2c] sm:$0xf]
  %v43 = vld [vmem:[%s1 + $0x30] sm:$0xf]
  %v44 = vld [vmem:[%s1 + $0x34] sm:$0xf]
  %v45 = vld [vmem:[%s1 + $0x38] sm:$0xf]
  %v46 = vld [vmem:[%s1 + $0x3c] sm:$0xf]
  %v47 = vld [vmem:[%s1 + $0x40] sm:$0xf]
  %v48 = vld [vmem:[%s1 + $0x44] sm:$0xf]
  %v49 = vld [vmem:[%s1 + $0x48] sm:$0xf]
  %v50 = vld [vmem:[%s1 + $0x4c] sm:$0xf]
  %v51 = vld [vmem:[%s1 + $0x50] sm:$0xf]
  %v52 = vld [vmem:[%s1 + $0x54] sm:$0xf]
  %v53 = vld [vmem:[%s1 + $0x58] sm:$0xf]
  %v54 = vld [vmem:[%s1 + $0x5c] sm:$0xf]
  %v55 = vld [vmem:[%s1 + $0x60] sm:$0xf]
  %v56 = vld [vmem:[%s1 + $0x64] sm:$0xf]
  %v57 = vld [vmem:[%s1 + $0x68] sm:$0xf]
  %v58 = vld [vmem:[%s1 + $0x6c] sm:$0xf]
  %v59 = vld [vmem:[%s1 + $0x70] sm:$0xf]
  %v60 = vld [vmem:[%s1 + $0x74] sm:$0xf]
  %v61 = vld [vmem:[%s1 + $0x78] sm:$0xf]
  %v62 = vld [vmem:[%s1 + $0x7c] sm:$0xf]
  %v67 = vunpack.c.l.b16 %v27
  %v68 = vunpack.c.h.b16 %v27
  %v69 = vunpack.c.l.b16 %v28
  %v70 = vunpack.c.h.b16 %v28
  %v71 = vunpack.c.l.b16 %v29
  %v72 = vunpack.c.h.b16 %v29
  %v73 = vunpack.c.l.b16 %v30
  %v74 = vunpack.c.h.b16 %v30
  %v75 = vpack.c.b16 %v69, %v67
  %v76 = vpack.c.b16 %v70, %v68
  %v77 = vpack.c.b16 %v73, %v71
  %v78 = vpack.c.b16 %v74, %v72
  %v115 = vunpack.c.l.b16 %v31
  %v116 = vunpack.c.l.b16 %v32
  %v117 = vunpack.c.l.b16 %v33
  %v118 = vunpack.c.l.b16 %v34
  %v119 = vunpack.c.l.b16 %v35
  %v120 = vunpack.c.l.b16 %v36
  %v121 = vunpack.c.l.b16 %v37
  %v122 = vunpack.c.l.b16 %v38
  %v123 = vunpack.c.l.b16 %v39
  %v124 = vunpack.c.l.b16 %v40
  %v125 = vunpack.c.l.b16 %v41
  %v126 = vunpack.c.l.b16 %v42
  %v127 = vunpack.c.l.b16 %v43
  %v128 = vunpack.c.l.b16 %v44
  %v129 = vunpack.c.l.b16 %v45
  %v130 = vunpack.c.l.b16 %v46
  %v131 = vunpack.c.l.b16 %v47
  %v132 = vunpack.c.l.b16 %v48
  %v133 = vunpack.c.l.b16 %v49
  %v134 = vunpack.c.l.b16 %v50
  %v135 = vunpack.c.l.b16 %v51
  %v136 = vunpack.c.l.b16 %v52
  %v137 = vunpack.c.l.b16 %v53
  %v138 = vunpack.c.l.b16 %v54
  %v139 = vunpack.c.l.b16 %v55
  %v140 = vunpack.c.l.b16 %v56
  %v141 = vunpack.c.l.b16 %v57
  %v142 = vunpack.c.l.b16 %v58
  %v143 = vunpack.c.l.b16 %v59
  %v144 = vunpack.c.l.b16 %v60
  %v145 = vunpack.c.l.b16 %v61
  %v146 = vunpack.c.l.b16 %v62
  %v147 = vpack.c.b16 %v116, %v115
  %v148 = vpack.c.b16 %v118, %v117
  %v149 = vpack.c.b16 %v120, %v119
  %v150 = vpack.c.b16 %v122, %v121
  %v151 = vpack.c.b16 %v124, %v123
  %v152 = vpack.c.b16 %v126, %v125
  %v153 = vpack.c.b16 %v128, %v127
  %v154 = vpack.c.b16 %v130, %v129
  %v155 = vpack.c.b16 %v132, %v131
  %v156 = vpack.c.b16 %v134, %v133
  %v157 = vpack.c.b16 %v136, %v135
  %v158 = vpack.c.b16 %v138, %v137
  %v159 = vpack.c.b16 %v140, %v139
  %v160 = vpack.c.b16 %v142, %v141
  %v161 = vpack.c.b16 %v144, %v143
  %v162 = vpack.c.b16 %v146, %v145
  %179 = vmatprep.subr.bf16.mxu0 0
  %180 = vmatpush1.bf16.msra.mxu0 %v147
  %181 = vmatprep.subr.bf16.mxu0 0
  %182 = vmatpush1.bf16.msra.mxu0 %v148
  %183 = vmatprep.subr.bf16.mxu0 0
  %184 = vmatpush1.bf16.msra.mxu0 %v149
  %185 = vmatprep.subr.bf16.mxu0 0
  %186 = vmatpush1.bf16.msra.mxu0 %v150
  %187 = vmatprep.subr.bf16.mxu0 0
  %188 = vmatpush1.bf16.msra.mxu0 %v151
  %189 = vmatprep.subr.bf16.mxu0 0
  %190 = vmatpush1.bf16.msra.mxu0 %v152
  %191 = vmatprep.subr.bf16.mxu0 0
  %192 = vmatpush1.bf16.msra.mxu0 %v153
  %193 = vmatprep.subr.bf16.mxu0 0
  %194 = vmatpush1.bf16.msra.mxu0 %v154
  %195 = vmatprep.subr.bf16.mxu0 0
  %196 = vmatpush1.bf16.msra.mxu0 %v155
  %197 = vmatprep.subr.bf16.mxu0 0
  %198 = vmatpush1.bf16.msra.mxu0 %v156
  %199 = vmatprep.subr.bf16.mxu0 0
  %200 = vmatpush1.bf16.msra.mxu0 %v157
  %201 = vmatprep.subr.bf16.mxu0 0
  %202 = vmatpush1.bf16.msra.mxu0 %v158
  %203 = vmatprep.subr.bf16.mxu0 0
  %204 = vmatpush1.bf16.msra.mxu0 %v159
  %205 = vmatprep.subr.bf16.mxu0 0
  %206 = vmatpush1.bf16.msra.mxu0 %v160
  %207 = vmatprep.subr.bf16.mxu0 0
  %208 = vmatpush1.bf16.msra.mxu0 %v161
  %209 = vmatprep.subr.bf16.mxu0 0
  %210 = vmatpush1.bf16.msra.mxu0 %v162
  %211 = vmatprep.mubr.bf16.mxu0 %v76
  %212 = vmatmul.mubr.bf16.gmra.mrb[0].mxu0 %v75
  %v213 = vpop.f32.mrb[0].mxu0
  %v214 = vadd.f32 0.0, %v213
  %v215 = vpop.f32.mrb[0].mxu0
  %v216 = vpop.f32.mrb[0].mxu0
  %v217 = vadd.f32 0.0, %v216
  %v218 = vpop.f32.mrb[0].mxu0
  %219 = vmatprep.mubr.bf16.mxu0 %v78
  %220 = vmatmul.mubr.bf16.gmra.mrb[0].mxu0 %v77
  %v221 = vpop.f32.mrb[0].mxu0
  %v222 = vadd.f32 0.0, %v221
  %v223 = vpop.f32.mrb[0].mxu0
  %v224 = vpop.f32.mrb[0].mxu0
  %v225 = vadd.f32 0.0, %v224
  %v226 = vpop.f32.mrb[0].mxu0
  %227 = vdwg.mxu0
  %v228 = vadd.f32 %v23, %v214
  %v229 = vadd.f32 %v24, %v217
  %v230 = vadd.f32 %v25, %v222
  %v231 = vadd.f32 %v26, %v225
  %232 = vst [vmem:[#allocation2] sm:$0xff] %v228
  %233 = vst [vmem:[#allocation2 + $0x8] sm:$0xff] %v229
  %234 = vst [vmem:[#allocation2 + $0x10] sm:$0xff] %v230
  %235 = vst [vmem:[#allocation2 + $0x18] sm:$0xff] %v231
  // Predicated region
  $region18: #{_lambda_.7} parent=0 // pred_check
    %p236 = pneg %p15
  $region19: #{_lambda_.7} parent=0 // pred_check_branch
    %238 = sbr.rel (%p236) target = $region21
  $region20: #{_lambda_.7} parent=0 // pred_region
    %v239 = vld [vmem:[#allocation2] sm:$0xff]
    %v240 = vld [vmem:[#allocation2 + $0x8] sm:$0xff]
    %v241 = vld [vmem:[#allocation2 + $0x10] sm:$0xff]
    %v242 = vld [vmem:[#allocation2 + $0x18] sm:$0xff]
    %vm243 = vcmp.ge.f32.partialorder %v239, 0.0
    %vm244 = vcmp.ge.f32.partialorder %v240, 0.0
    %vm245 = vcmp.ge.f32.partialorder %v241, 0.0
    %vm246 = vcmp.ge.f32.partialorder %v242, 0.0
    %v247 = vmul.f32 %v239, 0.2
    %v248 = vmul.f32 %v240, 0.2
    %v249 = vmul.f32 %v241, 0.2
    %v250 = vmul.f32 %v242, 0.2
    %v251 = vsel %vm243, %v239, %v247
    %v252 = vsel %vm244, %v240, %v248
    %v253 = vsel %vm245, %v241, %v249
    %v254 = vsel %vm246, %v242, %v250
    %v255 = vpack.c.bf16 %v252, %v251
    %v256 = vpack.c.bf16 %v254, %v253
    %v259 = vunpack.c.l.b16 %v255
    %v260 = vunpack.c.h.b16 %v255
    %v261 = vunpack.c.l.b16 %v256
    %v262 = vunpack.c.h.b16 %v256
    %v263 = vpack.c.b16 %v259, %v259
    %v264 = vpack.c.b16 %v260, %v260
    %v265 = vpack.c.b16 %v261, %v261
    %v266 = vpack.c.b16 %v262, %v262
    %271 = vst [vmem:[%s3] sm:$0xf] %v263
    %272 = vst [vmem:[%s3 + $0x4] sm:$0xf] %v264
    %273 = vst [vmem:[%s3 + $0x8] sm:$0xf] %v265
    %274 = vst [vmem:[%s3 + $0xc] sm:$0xf] %v266
  $region21: #{_lambda_.7} parent=0 // pred_fallthru
    _
  // Predicated region
  $region22: #{_lambda_.7} parent=0 // pred_check
    _
  $region23: #{_lambda_.7} parent=0 // pred_check_branch
    %276 = sbr.rel (0) target = $region25
  $region24: #{_lambda_.7} parent=0 // pred_region
    _
  $region25: #{_lambda_.7} parent=0 // pred_fallthru
    _
  // Predicated region
  $region26: #{_lambda_.7} parent=0 // pred_check
    _
  $region27: #{_lambda_.7} parent=0 // pred_check_branch
    %278 = sbr.rel (0) target = $region29
  $region28: #{_lambda_.7} parent=0 // pred_region
    _
  $region29: #{_lambda_.7} parent=0 // pred_fallthru
    _

// kernel: _lambda_.8
$region0: #{_lambda_.8}
  #allocation0 [shape = 'u32[]', space=smem, size = 0x4, offset = 0x4, fixed_abs, tag = 'smem constant byte address 0x4 - core index']
  #allocation1 [shape = 'u32[144,128]{1,0:T(1,128)}', space=vmem, size = 0x12000, scoped, tag = 'internal scratch']
  #allocation2 [shape = 'f32[24,128]{1,0:T(8,128)}', space=vmem, size = 0x3000, scoped, tag = 'scratch operand']
  %s0 = inlined_call_operand.vmem [shape: bf16[24,512], index: 0, kind: input, shape index: {}]
  %s1 = inlined_call_operand.vmem [shape: bf16[512,128], index: 1, kind: input, shape index: {}]
  %s2 = inlined_call_operand.vmem [shape: f32[1,128], index: 2, kind: input, shape index: {}]
  %s3 = inlined_call_operand.vmem [shape: bf16[24,128], index: 3, kind: output, shape index: {}]
  %s4 = sld [smem:[#allocation0]]
  $region30: #{_lambda_.8} parent=0
    _
  %s6 = ssub.s32 1, %s4
  %s7 = scalar_select 0, %s6, %s4
  // Predicated region
  $region2: #{_lambda_.8} parent=0 // pred_check
    _
  $region3: #{_lambda_.8} parent=0 // pred_check_branch
    %9 = sbr.rel (0) target = $region5
  $region4: #{_lambda_.8} parent=0 // pred_region
    _
  $region5: #{_lambda_.8} parent=0 // pred_fallthru
    _
  // Predicated region
  $region6: #{_lambda_.8} parent=0 // pred_check
    _
  $region7: #{_lambda_.8} parent=0 // pred_check_branch
    %11 = sbr.rel (0) target = $region9
  $region8: #{_lambda_.8} parent=0 // pred_region
    _
  $region9: #{_lambda_.8} parent=0 // pred_fallthru
    _
  // Predicated region
  $region10: #{_lambda_.8} parent=0 // pred_check
    _
  $region11: #{_lambda_.8} parent=0 // pred_check_branch
    %13 = sbr.rel (0) target = $region13
  $region12: #{_lambda_.8} parent=0 // pred_region
    _
  $region13: #{_lambda_.8} parent=0 // pred_fallthru
    _
  %p15 = scmp.eq.s32.totalorder 0, 0
  // Predicated region
  $region14: #{_lambda_.8} parent=0 // pred_check
    %p16 = pneg %p15
  $region15: #{_lambda_.8} parent=0 // pred_check_branch
    %18 = sbr.rel (%p16) target = $region17
  $region16: #{_lambda_.8} parent=0 // pred_region
    %19 = vst [vmem:[#allocation2] sm:$0xff] 0.0
    %20 = vst [vmem:[#allocation2 + $0x8] sm:$0xff] 0.0
    %21 = vst [vmem:[#allocation2 + $0x10] sm:$0xff] 0.0
  $region17: #{_lambda_.8} parent=0 // pred_fallthru
    _
  %v22 = vld [vmem:[#allocation2] sm:$0xff]
  %v23 = vld [vmem:[#allocation2 + $0x8] sm:$0xff]
  %v24 = vld [vmem:[#allocation2 + $0x10] sm:$0xff]
  %v25 = vld [vmem:[%s0] sm:$0xff]
  %v26 = vld [vmem:[%s0 + $0x8] sm:$0xff]
  %v27 = vld [vmem:[%s0 + $0x10] sm:$0xff]
  %v28 = vld [vmem:[%s0 + $0x18] sm:$0xff]
  %v29 = vld [vmem:[%s0 + $0x20] sm:$0xff]
  %v30 = vld [vmem:[%s0 + $0x28] sm:$0xff]
  %v31 = vld [vmem:[%s1] sm:$0xf]
  %v32 = vld [vmem:[%s1 + $0x4] sm:$0xf]
  %v33 = vld [vmem:[%s1 + $0x8] sm:$0xf]
  %v34 = vld [vmem:[%s1 + $0xc] sm:$0xf]
  %v35 = vld [vmem:[%s1 + $0x10] sm:$0xf]
  %v36 = vld [vmem:[%s1 + $0x14] sm:$0xf]
  %v37 = vld [vmem:[%s1 + $0x18] sm:$0xf]
  %v38 = vld [vmem:[%s1 + $0x1c] sm:$0xf]
  %v39 = vld [vmem:[%s1 + $0x20] sm:$0xf]
  %v40 = vld [vmem:[%s1 + $0x24] sm:$0xf]
  %v41 = vld [vmem:[%s1 + $0x28] sm:$0xf]
  %v42 = vld [vmem:[%s1 + $0x2c] sm:$0xf]
  %v43 = vld [vmem:[%s1 + $0x30] sm:$0xf]
  %v44 = vld [vmem:[%s1 + $0x34] sm:$0xf]
  %v45 = vld [vmem:[%s1 + $0x38] sm:$0xf]
  %v46 = vld [vmem:[%s1 + $0x3c] sm:$0xf]
  %v47 = vld [vmem:[%s1 + $0x40] sm:$0xf]
  %v48 = vld [vmem:[%s1 + $0x44] sm:$0xf]
  %v49 = vld [vmem:[%s1 + $0x48] sm:$0xf]
  %v50 = vld [vmem:[%s1 + $0x4c] sm:$0xf]
  %v51 = vld [vmem:[%s1 + $0x50] sm:$0xf]
  %v52 = vld [vmem:[%s1 + $0x54] sm:$0xf]
  %v53 = vld [vmem:[%s1 + $0x58] sm:$0xf]
  %v54 = vld [vmem:[%s1 + $0x5c] sm:$0xf]
  %v55 = vld [vmem:[%s1 + $0x60] sm:$0xf]
  %v56 = vld [vmem:[%s1 + $0x64] sm:$0xf]
  %v57 = vld [vmem:[%s1 + $0x68] sm:$0xf]
  %v58 = vld [vmem:[%s1 + $0x6c] sm:$0xf]
  %v59 = vld [vmem:[%s1 + $0x70] sm:$0xf]
  %v60 = vld [vmem:[%s1 + $0x74] sm:$0xf]
  %v61 = vld [vmem:[%s1 + $0x78] sm:$0xf]
  %v62 = vld [vmem:[%s1 + $0x7c] sm:$0xf]
  %v63 = vld [vmem:[%s1 + $0x80] sm:$0xf]
  %v64 = vld [vmem:[%s1 + $0x84] sm:$0xf]
  %v65 = vld [vmem:[%s1 + $0x88] sm:$0xf]
  %v66 = vld [vmem:[%s1 + $0x8c] sm:$0xf]
  %v67 = vld [vmem:[%s1 + $0x90] sm:$0xf]
  %v68 = vld [vmem:[%s1 + $0x94] sm:$0xf]
  %v69 = vld [vmem:[%s1 + $0x98] sm:$0xf]
  %v70 = vld [vmem:[%s1 + $0x9c] sm:$0xf]
  %v71 = vld [vmem:[%s1 + $0xa0] sm:$0xf]
  %v72 = vld [vmem:[%s1 + $0xa4] sm:$0xf]
  %v73 = vld [vmem:[%s1 + $0xa8] sm:$0xf]
  %v74 = vld [vmem:[%s1 + $0xac] sm:$0xf]
  %v75 = vld [vmem:[%s1 + $0xb0] sm:$0xf]
  %v76 = vld [vmem:[%s1 + $0xb4] sm:$0xf]
  %v77 = vld [vmem:[%s1 + $0xb8] sm:$0xf]
  %v78 = vld [vmem:[%s1 + $0xbc] sm:$0xf]
  %v79 = vld [vmem:[%s1 + $0xc0] sm:$0xf]
  %v80 = vld [vmem:[%s1 + $0xc4] sm:$0xf]
  %v81 = vld [vmem:[%s1 + $0xc8] sm:$0xf]
  %v82 = vld [vmem:[%s1 + $0xcc] sm:$0xf]
  %v83 = vld [vmem:[%s1 + $0xd0] sm:$0xf]
  %v84 = vld [vmem:[%s1 + $0xd4] sm:$0xf]
  %v85 = vld [vmem:[%s1 + $0xd8] sm:$0xf]
  %v86 = vld [vmem:[%s1 + $0xdc] sm:$0xf]
  %v87 = vld [vmem:[%s1 + $0xe0] sm:$0xf]
  %v88 = vld [vmem:[%s1 + $0xe4] sm:$0xf]
  %v89 = vld [vmem:[%s1 + $0xe8] sm:$0xf]
  %v90 = vld [vmem:[%s1 + $0xec] sm:$0xf]
  %v91 = vld [vmem:[%s1 + $0xf0] sm:$0xf]
  %v92 = vld [vmem:[%s1 + $0xf4] sm:$0xf]
  %v93 = vld [vmem:[%s1 + $0xf8] sm:$0xf]
  %v94 = vld [vmem:[%s1 + $0xfc] sm:$0xf]
  %v101 = vunpack.c.l.b16 %v25
  %v102 = vunpack.c.h.b16 %v25
  %v103 = vunpack.c.l.b16 %v26
  %v104 = vunpack.c.h.b16 %v26
  %v105 = vunpack.c.l.b16 %v27
  %v106 = vunpack.c.h.b16 %v27
  %v107 = vunpack.c.l.b16 %v28
  %v108 = vunpack.c.h.b16 %v28
  %v109 = vunpack.c.l.b16 %v29
  %v110 = vunpack.c.h.b16 %v29
  %v111 = vunpack.c.l.b16 %v30
  %v112 = vunpack.c.h.b16 %v30
  %v113 = vpack.c.b16 %v105, %v101
  %v114 = vpack.c.b16 %v106, %v102
  %v115 = vpack.c.b16 %v107, %v103
  %v116 = vpack.c.b16 %v108, %v104
  %v117 = vpack.c.b16 %v109, %v109
  %v118 = vpack.c.b16 %v110, %v110
  %v119 = vpack.c.b16 %v111, %v111
  %v120 = vpack.c.b16 %v112, %v112
  %v193 = vunpack.c.l.b16 %v31
  %v194 = vunpack.c.l.b16 %v32
  %v195 = vunpack.c.l.b16 %v33
  %v196 = vunpack.c.l.b16 %v34
  %v197 = vunpack.c.l.b16 %v35
  %v198 = vunpack.c.l.b16 %v36
  %v199 = vunpack.c.l.b16 %v37
  %v200 = vunpack.c.l.b16 %v38
  %v201 = vunpack.c.l.b16 %v39
  %v202 = vunpack.c.l.b16 %v40
  %v203 = vunpack.c.l.b16 %v41
  %v204 = vunpack.c.l.b16 %v42
  %v205 = vunpack.c.l.b16 %v43
  %v206 = vunpack.c.l.b16 %v44
  %v207 = vunpack.c.l.b16 %v45
  %v208 = vunpack.c.l.b16 %v46
  %v209 = vunpack.c.l.b16 %v47
  %v210 = vunpack.c.l.b16 %v48
  %v211 = vunpack.c.l.b16 %v49
  %v212 = vunpack.c.l.b16 %v50
  %v213 = vunpack.c.l.b16 %v51
  %v214 = vunpack.c.l.b16 %v52
  %v215 = vunpack.c.l.b16 %v53
  %v216 = vunpack.c.l.b16 %v54
  %v217 = vunpack.c.l.b16 %v55
  %v218 = vunpack.c.l.b16 %v56
  %v219 = vunpack.c.l.b16 %v57
  %v220 = vunpack.c.l.b16 %v58
  %v221 = vunpack.c.l.b16 %v59
  %v222 = vunpack.c.l.b16 %v60
  %v223 = vunpack.c.l.b16 %v61
  %v224 = vunpack.c.l.b16 %v62
  %v225 = vunpack.c.l.b16 %v63
  %v226 = vunpack.c.l.b16 %v64
  %v227 = vunpack.c.l.b16 %v65
  %v228 = vunpack.c.l.b16 %v66
  %v229 = vunpack.c.l.b16 %v67
  %v230 = vunpack.c.l.b16 %v68
  %v231 = vunpack.c.l.b16 %v69
  %v232 = vunpack.c.l.b16 %v70
  %v233 = vunpack.c.l.b16 %v71
  %v234 = vunpack.c.l.b16 %v72
  %v235 = vunpack.c.l.b16 %v73
  %v236 = vunpack.c.l.b16 %v74
  %v237 = vunpack.c.l.b16 %v75
  %v238 = vunpack.c.l.b16 %v76
  %v239 = vunpack.c.l.b16 %v77
  %v240 = vunpack.c.l.b16 %v78
  %v241 = vunpack.c.l.b16 %v79
  %v242 = vunpack.c.l.b16 %v80
  %v243 = vunpack.c.l.b16 %v81
  %v244 = vunpack.c.l.b16 %v82
  %v245 = vunpack.c.l.b16 %v83
  %v246 = vunpack.c.l.b16 %v84
  %v247 = vunpack.c.l.b16 %v85
  %v248 = vunpack.c.l.b16 %v86
  %v249 = vunpack.c.l.b16 %v87
  %v250 = vunpack.c.l.b16 %v88
  %v251 = vunpack.c.l.b16 %v89
  %v252 = vunpack.c.l.b16 %v90
  %v253 = vunpack.c.l.b16 %v91
  %v254 = vunpack.c.l.b16 %v92
  %v255 = vunpack.c.l.b16 %v93
  %v256 = vunpack.c.l.b16 %v94
  %v257 = vpack.c.b16 %v194, %v193
  %v258 = vpack.c.b16 %v196, %v195
  %v259 = vpack.c.b16 %v198, %v197
  %v260 = vpack.c.b16 %v200, %v199
  %v261 = vpack.c.b16 %v202, %v201
  %v262 = vpack.c.b16 %v204, %v203
  %v263 = vpack.c.b16 %v206, %v205
  %v264 = vpack.c.b16 %v208, %v207
  %v265 = vpack.c.b16 %v210, %v209
  %v266 = vpack.c.b16 %v212, %v211
  %v267 = vpack.c.b16 %v214, %v213
  %v268 = vpack.c.b16 %v216, %v215
  %v269 = vpack.c.b16 %v218, %v217
  %v270 = vpack.c.b16 %v220, %v219
  %v271 = vpack.c.b16 %v222, %v221
  %v272 = vpack.c.b16 %v224, %v223
  %v273 = vpack.c.b16 %v226, %v225
  %v274 = vpack.c.b16 %v228, %v227
  %v275 = vpack.c.b16 %v230, %v229
  %v276 = vpack.c.b16 %v232, %v231
  %v277 = vpack.c.b16 %v234, %v233
  %v278 = vpack.c.b16 %v236, %v235
  %v279 = vpack.c.b16 %v238, %v237
  %v280 = vpack.c.b16 %v240, %v239
  %v281 = vpack.c.b16 %v242, %v241
  %v282 = vpack.c.b16 %v244, %v243
  %v283 = vpack.c.b16 %v246, %v245
  %v284 = vpack.c.b16 %v248, %v247
  %v285 = vpack.c.b16 %v250, %v249
  %v286 = vpack.c.b16 %v252, %v251
  %v287 = vpack.c.b16 %v254, %v253
  %v288 = vpack.c.b16 %v256, %v255
  %321 = vmatprep.subr.bf16.mxu0 0
  %322 = vmatpush1.bf16.msra.mxu0 %v257
  %323 = vmatprep.subr.bf16.mxu0 0
  %324 = vmatpush1.bf16.msra.mxu0 %v258
  %325 = vmatprep.subr.bf16.mxu0 0
  %326 = vmatpush1.bf16.msra.mxu0 %v259
  %327 = vmatprep.subr.bf16.mxu0 0
  %328 = vmatpush1.bf16.msra.mxu0 %v260
  %329 = vmatprep.subr.bf16.mxu0 0
  %330 = vmatpush1.bf16.msra.mxu0 %v261
  %331 = vmatprep.subr.bf16.mxu0 0
  %332 = vmatpush1.bf16.msra.mxu0 %v262
  %333 = vmatprep.subr.bf16.mxu0 0
  %334 = vmatpush1.bf16.msra.mxu0 %v263
  %335 = vmatprep.subr.bf16.mxu0 0
  %336 = vmatpush1.bf16.msra.mxu0 %v264
  %337 = vmatprep.subr.bf16.mxu0 0
  %338 = vmatpush1.bf16.msra.mxu0 %v265
  %339 = vmatprep.subr.bf16.mxu0 0
  %340 = vmatpush1.bf16.msra.mxu0 %v266
  %341 = vmatprep.subr.bf16.mxu0 0
  %342 = vmatpush1.bf16.msra.mxu0 %v267
  %343 = vmatprep.subr.bf16.mxu0 0
  %344 = vmatpush1.bf16.msra.mxu0 %v268
  %345 = vmatprep.subr.bf16.mxu0 0
  %346 = vmatpush1.bf16.msra.mxu0 %v269
  %347 = vmatprep.subr.bf16.mxu0 0
  %348 = vmatpush1.bf16.msra.mxu0 %v270
  %349 = vmatprep.subr.bf16.mxu0 0
  %350 = vmatpush1.bf16.msra.mxu0 %v271
  %351 = vmatprep.subr.bf16.mxu0 0
  %352 = vmatpush1.bf16.msra.mxu0 %v272
  %353 = vmatprep.mubr.bf16.mxu0 %v114
  %354 = vmatmul.mubr.bf16.gmra.mrb[0].mxu0 %v113
  %v355 = vpop.f32.mrb[0].mxu0
  %v356 = vadd.f32 0.0, %v355
  %v357 = vpop.f32.mrb[0].mxu0
  %v358 = vpop.f32.mrb[0].mxu0
  %v359 = vadd.f32 0.0, %v358
  %v360 = vpop.f32.mrb[0].mxu0
  %361 = vmatprep.mubr.bf16.mxu0 %v118
  %362 = vmatmul.mubr.bf16.gmra.mrb[0].mxu0 %v117
  %v363 = vpop.f32.mrb[0].mxu0
  %v364 = vadd.f32 0.0, %v363
  %v365 = vpop.f32.mrb[0].mxu0
  %v366 = vpop.f32.mrb[0].mxu0
  %v367 = vpop.f32.mrb[0].mxu0
  %368 = vdwg.mxu0
  %369 = vmatprep.subr.bf16.mxu0 0
  %370 = vmatpush1.bf16.msra.mxu0 %v273
  %371 = vmatprep.subr.bf16.mxu0 0
  %372 = vmatpush1.bf16.msra.mxu0 %v274
  %373 = vmatprep.subr.bf16.mxu0 0
  %374 = vmatpush1.bf16.msra.mxu0 %v275
  %375 = vmatprep.subr.bf16.mxu0 0
  %376 = vmatpush1.bf16.msra.mxu0 %v276
  %377 = vmatprep.subr.bf16.mxu0 0
  %378 = vmatpush1.bf16.msra.mxu0 %v277
  %379 = vmatprep.subr.bf16.mxu0 0
  %380 = vmatpush1.bf16.msra.mxu0 %v278
  %381 = vmatprep.subr.bf16.mxu0 0
  %382 = vmatpush1.bf16.msra.mxu0 %v279
  %383 = vmatprep.subr.bf16.mxu0 0
  %384 = vmatpush1.bf16.msra.mxu0 %v280
  %385 = vmatprep.subr.bf16.mxu0 0
  %386 = vmatpush1.bf16.msra.mxu0 %v281
  %387 = vmatprep.subr.bf16.mxu0 0
  %388 = vmatpush1.bf16.msra.mxu0 %v282
  %389 = vmatprep.subr.bf16.mxu0 0
  %390 = vmatpush1.bf16.msra.mxu0 %v283
  %391 = vmatprep.subr.bf16.mxu0 0
  %392 = vmatpush1.bf16.msra.mxu0 %v284
  %393 = vmatprep.subr.bf16.mxu0 0
  %394 = vmatpush1.bf16.msra.mxu0 %v285
  %395 = vmatprep.subr.bf16.mxu0 0
  %396 = vmatpush1.bf16.msra.mxu0 %v286
  %397 = vmatprep.subr.bf16.mxu0 0
  %398 = vmatpush1.bf16.msra.mxu0 %v287
  %399 = vmatprep.subr.bf16.mxu0 0
  %400 = vmatpush1.bf16.msra.mxu0 %v288
  %401 = vmatprep.mubr.bf16.mxu0 %v116
  %402 = vmatmul.mubr.bf16.gmra.mrb[0].mxu0 %v115
  %v403 = vpop.f32.mrb[0].mxu0
  %v404 = vadd.f32 %v356, %v403
  %v405 = vpop.f32.mrb[0].mxu0
  %v406 = vpop.f32.mrb[0].mxu0
  %v407 = vadd.f32 %v359, %v406
  %v408 = vpop.f32.mrb[0].mxu0
  %409 = vmatprep.mubr.bf16.mxu0 %v120
  %410 = vmatmul.mubr.bf16.gmra.mrb[0].mxu0 %v119
  %v411 = vpop.f32.mrb[0].mxu0
  %v412 = vadd.f32 %v364, %v411
  %v413 = vpop.f32.mrb[0].mxu0
  %v414 = vpop.f32.mrb[0].mxu0
  %v415 = vpop.f32.mrb[0].mxu0
  %416 = vdwg.mxu0
  %v417 = vadd.f32 %v22, %v404
  %v418 = vadd.f32 %v23, %v407
  %v419 = vadd.f32 %v24, %v412
  %420 = vst [vmem:[#allocation2] sm:$0xff] %v417
  %421 = vst [vmem:[#allocation2 + $0x8] sm:$0xff] %v418
  %422 = vst [vmem:[#allocation2 + $0x10] sm:$0xff] %v419
  // Predicated region
  $region18: #{_lambda_.8} parent=0 // pred_check
    %p423 = pneg %p15
  $region19: #{_lambda_.8} parent=0 // pred_check_branch
    %425 = sbr.rel (%p423) target = $region21
  $region20: #{_lambda_.8} parent=0 // pred_region
    %v426 = vld [vmem:[#allocation2] sm:$0xff]
    %v427 = vld [vmem:[#allocation2 + $0x8] sm:$0xff]
    %v428 = vld [vmem:[#allocation2 + $0x10] sm:$0xff]
    %vm429 = vcmp.ge.f32.partialorder %v426, 0.0
    %vm430 = vcmp.ge.f32.partialorder %v427, 0.0
    %vm431 = vcmp.ge.f32.partialorder %v428, 0.0
    %v432 = vmul.f32 %v426, 0.2
    %v433 = vmul.f32 %v427, 0.2
    %v434 = vmul.f32 %v428, 0.2
    %v435 = vsel %vm429, %v426, %v432
    %v436 = vsel %vm430, %v427, %v433
    %v437 = vsel %vm431, %v428, %v434
    %v438 = vpack.c.bf16 %v436, %v435
    %v439 = vpack.c.bf16 %v437, %v437
    %v442 = vunpack.c.l.b16 %v438
    %v443 = vunpack.c.h.b16 %v438
    %v444 = vunpack.c.l.b16 %v439
    %v445 = vpack.c.b16 %v442, %v442
    %v446 = vpack.c.b16 %v443, %v443
    %v447 = vpack.c.b16 %v444, %v444
    %451 = vst [vmem:[%s3] sm:$0xf] %v445
    %452 = vst [vmem:[%s3 + $0x4] sm:$0xf] %v446
    %453 = vst [vmem:[%s3 + $0x8] sm:$0xf] %v447
  $region21: #{_lambda_.8} parent=0 // pred_fallthru
    _
  // Predicated region
  $region22: #{_lambda_.8} parent=0 // pred_check
    _
  $region23: #{_lambda_.8} parent=0 // pred_check_branch
    %455 = sbr.rel (0) target = $region25
  $region24: #{_lambda_.8} parent=0 // pred_region
    _
  $region25: #{_lambda_.8} parent=0 // pred_fallthru
    _
  // Predicated region
  $region26: #{_lambda_.8} parent=0 // pred_check
    _
  $region27: #{_lambda_.8} parent=0 // pred_check_branch
    %457 = sbr.rel (0) target = $region29
  $region28: #{_lambda_.8} parent=0 // pred_region
    _
  $region29: #{_lambda_.8} parent=0 // pred_fallthru
    _

// kernel: _lambda_.9
$region0: #{_lambda_.9}
  #allocation0 [shape = 'u32[]', space=smem, size = 0x4, offset = 0x4, fixed_abs, tag = 'smem constant byte address 0x4 - core index']
  #allocation1 [shape = 'u32[144,128]{1,0:T(1,128)}', space=vmem, size = 0x12000, scoped, tag = 'internal scratch']
  #allocation2 [shape = 'f32[8,128]{1,0:T(8,128)}', space=vmem, size = 0x1000, scoped, tag = 'scratch operand']
  %s0 = inlined_call_operand.vmem [shape: bf16[8,1024], index: 0, kind: input, shape index: {}]
  %s1 = inlined_call_operand.vmem [shape: bf16[1024,128], index: 1, kind: input, shape index: {}]
  %s2 = inlined_call_operand.vmem [shape: f32[1,128], index: 2, kind: input, shape index: {}]
  %s3 = inlined_call_operand.vmem [shape: f32[8,128], index: 3, kind: output, shape index: {}]
  %s4 = sld [smem:[#allocation0]]
  $region53: #{_lambda_.9} parent=0
    _
  %s6 = ssub.s32 1, %s4
  %s7 = scalar_select 0, %s6, %s4
  loop: start=0, step=1, limit=4
  $region2: #{_lambda_.9} parent=0 // loop_pre_header
    _
  $region3: #{_lambda_.9} parent=0 // loop_header
    %s9 = sphi 0, %s13
    %p10 = scmp.ge.s32.totalorder %s9, 4
    %s16 = sphi 0, %s35
    %s17 = sphi 0, %s31
    %s18 = sphi 0, %s27
    %s19 = sphi 0, %s16
    %s20 = sphi 0, %s17
    %s21 = sphi 0, %s18
    %s22 = sphi 0, %s19
    %s23 = sphi 0, %s20
    %s24 = sphi 0, %s21
    %s40 = sphi 0, %s42
    %s43 = sphi 0, %s40
    %s44 = sphi 0, %s43
    %s60 = sphi 0, %s44
    %s68 = sphi 0, %s70
    %s71 = sphi 0, %s68
    %s72 = sphi 0, %s71
    %s88 = sphi 0, %s72
    %s94 = sphi 0, %s96
    %s97 = sphi 0, %s94
    %s98 = sphi 0, %s97
    %s114 = sphi 0, %s98
    %s122 = sphi 0, %s124
    %s125 = sphi 0, %s122
    %s126 = sphi 0, %s125
    %s142 = sphi 0, %s126
  $region4: #{_lambda_.9} parent=0 // loop_header_branch
    %12 = sbr.rel (%p10) target = $region8
  $region5: #{_lambda_.9} parent=0 // loop_body
    %s14 = ssub.s32 %s9, 1
    %s15 = ssub.s32 %s9, 2
    %s25 = sadd.s32 1, %s18
    %p26 = scmp.ge.s32.totalorder %s25, 2
    %s27 = scalar_select %p26, 0, %s25
    %s28 = sadd.s32 1, %s17
    %s29 = scalar_select %p26, %s28, %s17
    %p30 = scmp.ge.s32.totalorder %s29, 1
    %s31 = scalar_select %p30, 0, %s29
    %s32 = sadd.s32 1, %s16
    %s33 = scalar_select %p30, %s32, %s16
    %p34 = scmp.ge.s32.totalorder %s33, 1
    %s35 = scalar_select %p34, 0, %s33
    %s36 = ssub.s32 %s16, %s35
    %s37 = ssub.s32 %s18, %s27
    %s38 = sor.u32 %s36, %s37
    %p39 = scmp.eq.s32.totalorder %s38, 0
    %s41 = sadd.s32 %s40, 1
    %s42 = scalar_select %p39, %s40, %s41
    %p45 = pneg %p39
    %p46 = scmp.eq.s32.totalorder %s9, 1
    %p47 = por %p45, %p46
    %p48 = scmp.ne.s32.totalorder %s40, %s43
    %p49 = scmp.eq.s32.totalorder %s9, 0
    %p50 = por %p48, %p49
    %p51 = scmp.ne.s32.totalorder %s40, %s43
    %p52 = scmp.eq.s32.totalorder %s14, 1
    %p53 = por %p51, %p52
    %p54 = scmp.ne.s32.totalorder %s43, %s44
    %p55 = scmp.eq.s32.totalorder %s14, 0
    %p56 = por %p54, %p55
    %p57 = scmp.ne.s32.totalorder %s43, %s44
    %p58 = scmp.eq.s32.totalorder %s15, 1
    %p59 = por %p57, %p58
    %p61 = scmp.ne.s32.totalorder %s44, %s60
    %p62 = scmp.eq.s32.totalorder %s15, 0
    %p63 = por %p61, %p62
    %s64 = ssub.s32 %s18, %s27
    %s65 = ssub.s32 %s17, %s31
    %s66 = sor.u32 %s64, %s65
    %p67 = scmp.eq.s32.totalorder %s66, 0
    %s69 = sadd.s32 %s68, 1
    %s70 = scalar_select %p67, %s68, %s69
    %p73 = pneg %p67
    %p74 = scmp.eq.s32.totalorder %s9, 1
    %p75 = por %p73, %p74
    %p76 = scmp.ne.s32.totalorder %s68, %s71
    %p77 = scmp.eq.s32.totalorder %s9, 0
    %p78 = por %p76, %p77
    %p79 = scmp.ne.s32.totalorder %s68, %s71
    %p80 = scmp.eq.s32.totalorder %s14, 1
    %p81 = por %p79, %p80
    %p82 = scmp.ne.s32.totalorder %s71, %s72
    %p83 = scmp.eq.s32.totalorder %s14, 0
    %p84 = por %p82, %p83
    %p85 = scmp.ne.s32.totalorder %s71, %s72
    %p86 = scmp.eq.s32.totalorder %s15, 1
    %p87 = por %p85, %p86
    %p89 = scmp.ne.s32.totalorder %s72, %s88
    %p90 = scmp.eq.s32.totalorder %s15, 0
    %p91 = por %p89, %p90
    %s92 = ssub.s32 %s17, %s31
    %p93 = scmp.eq.s32.totalorder %s92, 0
    %s95 = sadd.s32 %s94, 1
    %s96 = scalar_select %p93, %s94, %s95
    %p99 = pneg %p93
    %p100 = scmp.eq.s32.totalorder %s9, 1
    %p101 = por %p99, %p100
    %p102 = scmp.ne.s32.totalorder %s94, %s97
    %p103 = scmp.eq.s32.totalorder %s9, 0
    %p104 = por %p102, %p103
    %p105 = scmp.ne.s32.totalorder %s94, %s97
    %p106 = scmp.eq.s32.totalorder %s14, 1
    %p107 = por %p105, %p106
    %p108 = scmp.ne.s32.totalorder %s97, %s98
    %p109 = scmp.eq.s32.totalorder %s14, 0
    %p110 = por %p108, %p109
    %p111 = scmp.ne.s32.totalorder %s97, %s98
    %p112 = scmp.eq.s32.totalorder %s15, 1
    %p113 = por %p111, %p112
    %p115 = scmp.ne.s32.totalorder %s98, %s114
    %p116 = scmp.eq.s32.totalorder %s15, 0
    %p117 = por %p115, %p116
    %s118 = ssub.s32 %s16, %s35
    %s119 = ssub.s32 %s17, %s31
    %s120 = sor.u32 %s118, %s119
    %p121 = scmp.eq.s32.totalorder %s120, 0
    %s123 = sadd.s32 %s122, 1
    %s124 = scalar_select %p121, %s122, %s123
    %p127 = pneg %p121
    %p128 = scmp.eq.s32.totalorder %s9, 1
    %p129 = por %p127, %p128
    %p130 = scmp.ne.s32.totalorder %s122, %s125
    %p131 = scmp.eq.s32.totalorder %s9, 0
    %p132 = por %p130, %p131
    %p133 = scmp.ne.s32.totalorder %s122, %s125
    %p134 = scmp.eq.s32.totalorder %s14, 1
    %p135 = por %p133, %p134
    %p136 = scmp.ne.s32.totalorder %s125, %s126
    %p137 = scmp.eq.s32.totalorder %s14, 0
    %p138 = por %p136, %p137
    %p139 = scmp.ne.s32.totalorder %s125, %s126
    %p140 = scmp.eq.s32.totalorder %s15, 1
    %p141 = por %p139, %p140
    %p143 = scmp.ne.s32.totalorder %s126, %s142
    %p144 = scmp.eq.s32.totalorder %s15, 0
    %p145 = por %p143, %p144
    %p146 = scmp.le.s32.totalorder 1, %s9
    %p147 = scmp.lt.s32.totalorder %s9, 3
    %p148 = pnand %p146, %p147
    %p149 = pneg %p148
    // Predicated region
    $region9: #{_lambda_.9} parent=5 // pred_check
      _
    $region10: #{_lambda_.9} parent=5 // pred_check_branch
      %151 = sbr.rel (%p148) target = $region12
    $region11: #{_lambda_.9} parent=5 // pred_region
      %s152 = ssub.s32 %s9, 1
      // Predicated region
      $region13: #{_lambda_.9} parent=11 // pred_check
        %p153 = pneg %p110
      $region14: #{_lambda_.9} parent=11 // pred_check_branch
        %155 = sbr.rel (%p153) target = $region16
      $region15: #{_lambda_.9} parent=11 // pred_region
        %p156 = scmp.lt.s32.totalorder %s20, 0
        %s157 = scalar_select %p156, %s20, 0
        %s158 = scalar_lea.vmem %s2, %s157
      $region16: #{_lambda_.9} parent=11 // pred_fallthru
        _
    $region12: #{_lambda_.9} parent=5 // pred_fallthru
      _
    %p159 = scmp.lt.s32.totalorder %s9, 2
    // Predicated region
    $region17: #{_lambda_.9} parent=5 // pred_check
      %p160 = pneg %p159
    $region18: #{_lambda_.9} parent=5 // pred_check_branch
      %162 = sbr.rel (%p160) target = $region20
    $region19: #{_lambda_.9} parent=5 // pred_region
      // Predicated region
      $region21: #{_lambda_.9} parent=19 // pred_check
        %p163 = pneg %p50
      $region22: #{_lambda_.9} parent=19 // pred_check_branch
        %165 = sbr.rel (%p163) target = $region24
      $region23: #{_lambda_.9} parent=19 // pred_region
        %s166 = smul.u32 4, %s18
        %p167 = scmp.lt.s32.totalorder %s16, 0
        %s168 = scalar_select %p167, %s16, 0
        %p169 = scmp.lt.s32.totalorder %s166, 7
        %s170 = scalar_select %p169, %s166, 7
        %s171 = smul.addr %s168, 8
        %s172 = sadd.s32 %s170, %s171
        %s173 = smul.addr %s172, 4
        %s174 = scalar_lea.vmem %s0, %s173
        %s175 = smul.u32 4, %s18
      $region24: #{_lambda_.9} parent=19 // pred_fallthru
        _
      // Predicated region
      $region25: #{_lambda_.9} parent=19 // pred_check
        %p176 = pneg %p78
      $region26: #{_lambda_.9} parent=19 // pred_check_branch
        %178 = sbr.rel (%p176) target = $region28
      $region27: #{_lambda_.9} parent=19 // pred_region
        %s179 = smul.u32 64, %s18
        %p180 = scmp.lt.s32.totalorder %s179, 127
        %s181 = scalar_select %p180, %s179, 127
        %p182 = scmp.lt.s32.totalorder %s17, 0
        %s183 = scalar_select %p182, %s17, 0
        %s184 = sadd.s32 %s183, %s181
        %s185 = smul.addr %s184, 4
        %s186 = scalar_lea.vmem %s1, %s185
        %s187 = smul.u32 64, %s18
      $region28: #{_lambda_.9} parent=19 // pred_fallthru
        _
    $region20: #{_lambda_.9} parent=5 // pred_fallthru
      _
    %p188 = scmp.le.s32.totalorder 1, %s9
    %p189 = scmp.lt.s32.totalorder %s9, 3
    %p190 = pnand %p188, %p189
    %p191 = pneg %p190
    // Predicated region
    $region29: #{_lambda_.9} parent=5 // pred_check
      _
    $region30: #{_lambda_.9} parent=5 // pred_check_branch
      %193 = sbr.rel (%p190) target = $region32
    $region31: #{_lambda_.9} parent=5 // pred_region
      %s194 = ssub.s32 %s9, 1
      %s195 = smul.u32 4, %s21
      %p196 = scmp.lt.s32.totalorder %s19, 0
      %s197 = scalar_select %p196, %s19, 0
      %p198 = scmp.lt.s32.totalorder %s195, 7
      %s199 = scalar_select %p198, %s195, 7
      %s200 = smul.addr %s197, 8
      %s201 = sadd.s32 %s199, %s200
      %s202 = smul.addr %s201, 4
      %s203 = scalar_lea.vmem %s0, %s202
      %p204 = pneg %p56
      %p205 = pneg %p53
      %s206 = smul.u32 64, %s21
      %p207 = scmp.lt.s32.totalorder %s206, 127
      %s208 = scalar_select %p207, %s206, 127
      %p209 = scmp.lt.s32.totalorder %s20, 0
      %s210 = scalar_select %p209, %s20, 0
      %s211 = sadd.s32 %s210, %s208
      %s212 = smul.addr %s211, 4
      %s213 = scalar_lea.vmem %s1, %s212
      %p214 = pneg %p84
      %p215 = pneg %p81
      %p216 = scmp.lt.s32.totalorder %s20, 0
      %s217 = scalar_select %p216, %s20, 0
      %s218 = scalar_lea.vmem %s2, %s217
      %p219 = pneg %p110
      %p220 = pneg %p107
      %p221 = pneg %p138
      %p222 = pneg %p135
      %p223 = scmp.lt.s32.totalorder %s19, 0
      %s224 = scalar_select %p223, %s19, 0
      %p225 = scmp.lt.s32.totalorder %s20, 0
      %s226 = scalar_select %p225, %s20, 0
      %s227 = sadd.s32 %s226, %s224
      %s228 = smul.addr %s227, 8
      %s229 = scalar_lea.vmem %s3, %s228
      %s230 = smul.u32 4, %s21
      %p231 = scmp.lt.s32.totalorder %s19, 0
      %s232 = scalar_select %p231, %s19, 0
      %p233 = scmp.lt.s32.totalorder %s230, 7
      %s234 = scalar_select %p233, %s230, 7
      %s235 = smul.addr %s232, 8
      %s236 = sadd.s32 %s234, %s235
      %s237 = smul.addr %s236, 4
      %s238 = scalar_lea.vmem %s0, %s237
      %s239 = smul.u32 4, %s21
      %s240 = smul.u32 64, %s21
      %p241 = scmp.lt.s32.totalorder %s240, 127
      %s242 = scalar_select %p241, %s240, 127
      %p243 = scmp.lt.s32.totalorder %s20, 0
      %s244 = scalar_select %p243, %s20, 0
      %s245 = sadd.s32 %s244, %s242
      %s246 = smul.addr %s245, 4
      %s247 = scalar_lea.vmem %s1, %s246
      %s248 = smul.u32 64, %s21
      %p249 = scmp.lt.s32.totalorder %s20, 0
      %s250 = scalar_select %p249, %s20, 0
      %s251 = scalar_lea.vmem %s2, %s250
      %p252 = scmp.lt.s32.totalorder %s19, 0
      %s253 = scalar_select %p252, %s19, 0
      %p254 = scmp.lt.s32.totalorder %s20, 0
      %s255 = scalar_select %p254, %s20, 0
      %s256 = sadd.s32 %s255, %s253
      %s257 = smul.addr %s256, 8
      %s258 = scalar_lea.vmem %s3, %s257
      %p260 = scmp.eq.s32.totalorder %s21, 0
      // Predicated region
      $region33: #{_lambda_.9} parent=31 // pred_check
        %p261 = pneg %p260
      $region34: #{_lambda_.9} parent=31 // pred_check_branch
        %263 = sbr.rel (%p261) target = $region36
      $region35: #{_lambda_.9} parent=31 // pred_region
        %264 = vst [vmem:[#allocation2] sm:$0xff] 0.0
      $region36: #{_lambda_.9} parent=31 // pred_fallthru
        _
      %v265 = vld [vmem:[#allocation2] sm:$0xff]
      %v266 = vld [vmem:[%s238] sm:$0xff]
      %v267 = vld [vmem:[%s238 + $0x8] sm:$0xff]
      %v268 = vld [vmem:[%s247] sm:$0xf]
      %v269 = vld [vmem:[%s247 + $0x4] sm:$0xf]
      %v270 = vld [vmem:[%s247 + $0x8] sm:$0xf]
      %v271 = vld [vmem:[%s247 + $0xc] sm:$0xf]
      %v272 = vld [vmem:[%s247 + $0x10] sm:$0xf]
      %v273 = vld [vmem:[%s247 + $0x14] sm:$0xf]
      %v274 = vld [vmem:[%s247 + $0x18] sm:$0xf]
      %v275 = vld [vmem:[%s247 + $0x1c] sm:$0xf]
      %v276 = vld [vmem:[%s247 + $0x20] sm:$0xf]
      %v277 = vld [vmem:[%s247 + $0x24] sm:$0xf]
      %v278 = vld [vmem:[%s247 + $0x28] sm:$0xf]
      %v279 = vld [vmem:[%s247 + $0x2c] sm:$0xf]
      %v280 = vld [vmem:[%s247 + $0x30] sm:$0xf]
      %v281 = vld [vmem:[%s247 + $0x34] sm:$0xf]
      %v282 = vld [vmem:[%s247 + $0x38] sm:$0xf]
      %v283 = vld [vmem:[%s247 + $0x3c] sm:$0xf]
      %v284 = vld [vmem:[%s247 + $0x40] sm:$0xf]
      %v285 = vld [vmem:[%s247 + $0x44] sm:$0xf]
      %v286 = vld [vmem:[%s247 + $0x48] sm:$0xf]
      %v287 = vld [vmem:[%s247 + $0x4c] sm:$0xf]
      %v288 = vld [vmem:[%s247 + $0x50] sm:$0xf]
      %v289 = vld [vmem:[%s247 + $0x54] sm:$0xf]
      %v290 = vld [vmem:[%s247 + $0x58] sm:$0xf]
      %v291 = vld [vmem:[%s247 + $0x5c] sm:$0xf]
      %v292 = vld [vmem:[%s247 + $0x60] sm:$0xf]
      %v293 = vld [vmem:[%s247 + $0x64] sm:$0xf]
      %v294 = vld [vmem:[%s247 + $0x68] sm:$0xf]
      %v295 = vld [vmem:[%s247 + $0x6c] sm:$0xf]
      %v296 = vld [vmem:[%s247 + $0x70] sm:$0xf]
      %v297 = vld [vmem:[%s247 + $0x74] sm:$0xf]
      %v298 = vld [vmem:[%s247 + $0x78] sm:$0xf]
      %v299 = vld [vmem:[%s247 + $0x7c] sm:$0xf]
      %v300 = vld [vmem:[%s247 + $0x80] sm:$0xf]
      %v301 = vld [vmem:[%s247 + $0x84] sm:$0xf]
      %v302 = vld [vmem:[%s247 + $0x88] sm:$0xf]
      %v303 = vld [vmem:[%s247 + $0x8c] sm:$0xf]
      %v304 = vld [vmem:[%s247 + $0x90] sm:$0xf]
      %v305 = vld [vmem:[%s247 + $0x94] sm:$0xf]
      %v306 = vld [vmem:[%s247 + $0x98] sm:$0xf]
      %v307 = vld [vmem:[%s247 + $0x9c] sm:$0xf]
      %v308 = vld [vmem:[%s247 + $0xa0] sm:$0xf]
      %v309 = vld [vmem:[%s247 + $0xa4] sm:$0xf]
      %v310 = vld [vmem:[%s247 + $0xa8] sm:$0xf]
      %v311 = vld [vmem:[%s247 + $0xac] sm:$0xf]
      %v312 = vld [vmem:[%s247 + $0xb0] sm:$0xf]
      %v313 = vld [vmem:[%s247 + $0xb4] sm:$0xf]
      %v314 = vld [vmem:[%s247 + $0xb8] sm:$0xf]
      %v315 = vld [vmem:[%s247 + $0xbc] sm:$0xf]
      %v316 = vld [vmem:[%s247 + $0xc0] sm:$0xf]
      %v317 = vld [vmem:[%s247 + $0xc4] sm:$0xf]
      %v318 = vld [vmem:[%s247 + $0xc8] sm:$0xf]
      %v319 = vld [vmem:[%s247 + $0xcc] sm:$0xf]
      %v320 = vld [vmem:[%s247 + $0xd0] sm:$0xf]
      %v321 = vld [vmem:[%s247 + $0xd4] sm:$0xf]
      %v322 = vld [vmem:[%s247 + $0xd8] sm:$0xf]
      %v323 = vld [vmem:[%s247 + $0xdc] sm:$0xf]
      %v324 = vld [vmem:[%s247 + $0xe0] sm:$0xf]
      %v325 = vld [vmem:[%s247 + $0xe4] sm:$0xf]
      %v326 = vld [vmem:[%s247 + $0xe8] sm:$0xf]
      %v327 = vld [vmem:[%s247 + $0xec] sm:$0xf]
      %v328 = vld [vmem:[%s247 + $0xf0] sm:$0xf]
      %v329 = vld [vmem:[%s247 + $0xf4] sm:$0xf]
      %v330 = vld [vmem:[%s247 + $0xf8] sm:$0xf]
      %v331 = vld [vmem:[%s247 + $0xfc] sm:$0xf]
      %v334 = vunpack.c.l.b16 %v266
      %v335 = vunpack.c.h.b16 %v266
      %v336 = vunpack.c.l.b16 %v267
      %v337 = vunpack.c.h.b16 %v267
      %v338 = vpack.c.b16 %v334, %v334
      %v339 = vpack.c.b16 %v335, %v335
      %v340 = vpack.c.b16 %v336, %v336
      %v341 = vpack.c.b16 %v337, %v337
      %v410 = vunpack.c.l.b16 %v268
      %v411 = vunpack.c.l.b16 %v269
      %v412 = vunpack.c.l.b16 %v270
      %v413 = vunpack.c.l.b16 %v271
      %v414 = vunpack.c.l.b16 %v272
      %v415 = vunpack.c.l.b16 %v273
      %v416 = vunpack.c.l.b16 %v274
      %v417 = vunpack.c.l.b16 %v275
      %v418 = vunpack.c.l.b16 %v276
      %v419 = vunpack.c.l.b16 %v277
      %v420 = vunpack.c.l.b16 %v278
      %v421 = vunpack.c.l.b16 %v279
      %v422 = vunpack.c.l.b16 %v280
      %v423 = vunpack.c.l.b16 %v281
      %v424 = vunpack.c.l.b16 %v282
      %v425 = vunpack.c.l.b16 %v283
      %v426 = vunpack.c.l.b16 %v284
      %v427 = vunpack.c.l.b16 %v285
      %v428 = vunpack.c.l.b16 %v286
      %v429 = vunpack.c.l.b16 %v287
      %v430 = vunpack.c.l.b16 %v288
      %v431 = vunpack.c.l.b16 %v289
      %v432 = vunpack.c.l.b16 %v290
      %v433 = vunpack.c.l.b16 %v291
      %v434 = vunpack.c.l.b16 %v292
      %v435 = vunpack.c.l.b16 %v293
      %v436 = vunpack.c.l.b16 %v294
      %v437 = vunpack.c.l.b16 %v295
      %v438 = vunpack.c.l.b16 %v296
      %v439 = vunpack.c.l.b16 %v297
      %v440 = vunpack.c.l.b16 %v298
      %v441 = vunpack.c.l.b16 %v299
      %v442 = vunpack.c.l.b16 %v300
      %v443 = vunpack.c.l.b16 %v301
      %v444 = vunpack.c.l.b16 %v302
      %v445 = vunpack.c.l.b16 %v303
      %v446 = vunpack.c.l.b16 %v304
      %v447 = vunpack.c.l.b16 %v305
      %v448 = vunpack.c.l.b16 %v306
      %v449 = vunpack.c.l.b16 %v307
      %v450 = vunpack.c.l.b16 %v308
      %v451 = vunpack.c.l.b16 %v309
      %v452 = vunpack.c.l.b16 %v310
      %v453 = vunpack.c.l.b16 %v311
      %v454 = vunpack.c.l.b16 %v312
      %v455 = vunpack.c.l.b16 %v313
      %v456 = vunpack.c.l.b16 %v314
      %v457 = vunpack.c.l.b16 %v315
      %v458 = vunpack.c.l.b16 %v316
      %v459 = vunpack.c.l.b16 %v317
      %v460 = vunpack.c.l.b16 %v318
      %v461 = vunpack.c.l.b16 %v319
      %v462 = vunpack.c.l.b16 %v320
      %v463 = vunpack.c.l.b16 %v321
      %v464 = vunpack.c.l.b16 %v322
      %v465 = vunpack.c.l.b16 %v323
      %v466 = vunpack.c.l.b16 %v324
      %v467 = vunpack.c.l.b16 %v325
      %v468 = vunpack.c.l.b16 %v326
      %v469 = vunpack.c.l.b16 %v327
      %v470 = vunpack.c.l.b16 %v328
      %v471 = vunpack.c.l.b16 %v329
      %v472 = vunpack.c.l.b16 %v330
      %v473 = vunpack.c.l.b16 %v331
      %v474 = vpack.c.b16 %v411, %v410
      %v475 = vpack.c.b16 %v413, %v412
      %v476 = vpack.c.b16 %v415, %v414
      %v477 = vpack.c.b16 %v417, %v416
      %v478 = vpack.c.b16 %v419, %v418
      %v479 = vpack.c.b16 %v421, %v420
      %v480 = vpack.c.b16 %v423, %v422
      %v481 = vpack.c.b16 %v425, %v424
      %v482 = vpack.c.b16 %v427, %v426
      %v483 = vpack.c.b16 %v429, %v428
      %v484 = vpack.c.b16 %v431, %v430
      %v485 = vpack.c.b16 %v433, %v432
      %v486 = vpack.c.b16 %v435, %v434
      %v487 = vpack.c.b16 %v437, %v436
      %v488 = vpack.c.b16 %v439, %v438
      %v489 = vpack.c.b16 %v441, %v440
      %v490 = vpack.c.b16 %v443, %v442
      %v491 = vpack.c.b16 %v445, %v444
      %v492 = vpack.c.b16 %v447, %v446
      %v493 = vpack.c.b16 %v449, %v448
      %v494 = vpack.c.b16 %v451, %v450
      %v495 = vpack.c.b16 %v453, %v452
      %v496 = vpack.c.b16 %v455, %v454
      %v497 = vpack.c.b16 %v457, %v456
      %v498 = vpack.c.b16 %v459, %v458
      %v499 = vpack.c.b16 %v461, %v460
      %v500 = vpack.c.b16 %v463, %v462
      %v501 = vpack.c.b16 %v465, %v464
      %v502 = vpack.c.b16 %v467, %v466
      %v503 = vpack.c.b16 %v469, %v468
      %v504 = vpack.c.b16 %v471, %v470
      %v505 = vpack.c.b16 %v473, %v472
      %538 = vmatprep.subr.bf16.mxu0 0
      %539 = vmatpush1.bf16.msra.mxu0 %v474
      %540 = vmatprep.subr.bf16.mxu0 0
      %541 = vmatpush1.bf16.msra.mxu0 %v475
      %542 = vmatprep.subr.bf16.mxu0 0
      %543 = vmatpush1.bf16.msra.mxu0 %v476
      %544 = vmatprep.subr.bf16.mxu0 0
      %545 = vmatpush1.bf16.msra.mxu0 %v477
      %546 = vmatprep.subr.bf16.mxu0 0
      %547 = vmatpush1.bf16.msra.mxu0 %v478
      %548 = vmatprep.subr.bf16.mxu0 0
      %549 = vmatpush1.bf16.msra.mxu0 %v479
      %550 = vmatprep.subr.bf16.mxu0 0
      %551 = vmatpush1.bf16.msra.mxu0 %v480
      %552 = vmatprep.subr.bf16.mxu0 0
      %553 = vmatpush1.bf16.msra.mxu0 %v481
      %554 = vmatprep.subr.bf16.mxu0 0
      %555 = vmatpush1.bf16.msra.mxu0 %v482
      %556 = vmatprep.subr.bf16.mxu0 0
      %557 = vmatpush1.bf16.msra.mxu0 %v483
      %558 = vmatprep.subr.bf16.mxu0 0
      %559 = vmatpush1.bf16.msra.mxu0 %v484
      %560 = vmatprep.subr.bf16.mxu0 0
      %561 = vmatpush1.bf16.msra.mxu0 %v485
      %562 = vmatprep.subr.bf16.mxu0 0
      %563 = vmatpush1.bf16.msra.mxu0 %v486
      %564 = vmatprep.subr.bf16.mxu0 0
      %565 = vmatpush1.bf16.msra.mxu0 %v487
      %566 = vmatprep.subr.bf16.mxu0 0
      %567 = vmatpush1.bf16.msra.mxu0 %v488
      %568 = vmatprep.subr.bf16.mxu0 0
      %569 = vmatpush1.bf16.msra.mxu0 %v489
      %570 = vmatprep.mubr.bf16.mxu0 %v339
      %571 = vmatmul.mubr.bf16.gmra.mrb[0].mxu0 %v338
      %v572 = vpop.f32.mrb[0].mxu0
      %v573 = vadd.f32 0.0, %v572
      %v574 = vpop.f32.mrb[0].mxu0
      %v575 = vpop.f32.mrb[0].mxu0
      %v576 = vpop.f32.mrb[0].mxu0
      %577 = vdwg.mxu0
      %578 = vmatprep.subr.bf16.mxu0 0
      %579 = vmatpush1.bf16.msra.mxu0 %v490
      %580 = vmatprep.subr.bf16.mxu0 0
      %581 = vmatpush1.bf16.msra.mxu0 %v491
      %582 = vmatprep.subr.bf16.mxu0 0
      %583 = vmatpush1.bf16.msra.mxu0 %v492
      %584 = vmatprep.subr.bf16.mxu0 0
      %585 = vmatpush1.bf16.msra.mxu0 %v493
      %586 = vmatprep.subr.bf16.mxu0 0
      %587 = vmatpush1.bf16.msra.mxu0 %v494
      %588 = vmatprep.subr.bf16.mxu0 0
      %589 = vmatpush1.bf16.msra.mxu0 %v495
      %590 = vmatprep.subr.bf16.mxu0 0
      %591 = vmatpush1.bf16.msra.mxu0 %v496
      %592 = vmatprep.subr.bf16.mxu0 0
      %593 = vmatpush1.bf16.msra.mxu0 %v497
      %594 = vmatprep.subr.bf16.mxu0 0
      %595 = vmatpush1.bf16.msra.mxu0 %v498
      %596 = vmatprep.subr.bf16.mxu0 0
      %597 = vmatpush1.bf16.msra.mxu0 %v499
      %598 = vmatprep.subr.bf16.mxu0 0
      %599 = vmatpush1.bf16.msra.mxu0 %v500
      %600 = vmatprep.subr.bf16.mxu0 0
      %601 = vmatpush1.bf16.msra.mxu0 %v501
      %602 = vmatprep.subr.bf16.mxu0 0
      %603 = vmatpush1.bf16.msra.mxu0 %v502
      %604 = vmatprep.subr.bf16.mxu0 0
      %605 = vmatpush1.bf16.msra.mxu0 %v503
      %606 = vmatprep.subr.bf16.mxu0 0
      %607 = vmatpush1.bf16.msra.mxu0 %v504
      %608 = vmatprep.subr.bf16.mxu0 0
      %609 = vmatpush1.bf16.msra.mxu0 %v505
      %610 = vmatprep.mubr.bf16.mxu0 %v341
      %611 = vmatmul.mubr.bf16.gmra.mrb[0].mxu0 %v340
      %v612 = vpop.f32.mrb[0].mxu0
      %v613 = vadd.f32 %v573, %v612
      %v614 = vpop.f32.mrb[0].mxu0
      %v615 = vpop.f32.mrb[0].mxu0
      %v616 = vpop.f32.mrb[0].mxu0
      %617 = vdwg.mxu0
      %v618 = vadd.f32 %v265, %v613
      %619 = vst [vmem:[#allocation2] sm:$0xff] %v618
      %p620 = scmp.eq.s32.totalorder %s21, 1
      // Predicated region
      $region37: #{_lambda_.9} parent=31 // pred_check
        %p621 = pneg %p620
      $region38: #{_lambda_.9} parent=31 // pred_check_branch
        %623 = sbr.rel (%p621) target = $region40
      $region39: #{_lambda_.9} parent=31 // pred_region
        %v624 = vld [vmem:[#allocation2] sm:$0xff]
        %v625 = vld [vmem:[%s251] sm:$0x1]
        %v627 = vlaneseq
        %v628 = vshrl.u32 %v627, 7
        %v629 = vsub.s32 0, %v628
        %v630 = vrot.slane %v625, %v629
        %v632 = vadd.f32 %v624, %v630
        %633 = vst [vmem:[%s258] sm:$0xff] %v632
      $region40: #{_lambda_.9} parent=31 // pred_fallthru
        _
      %p634 = scmp.lt.s32.totalorder %s19, 0
      %s635 = scalar_select %p634, %s19, 0
      %p636 = scmp.lt.s32.totalorder %s20, 0
      %s637 = scalar_select %p636, %s20, 0
      %s638 = sadd.s32 %s637, %s635
      %s639 = smul.addr %s638, 8
      %s640 = scalar_lea.vmem %s3, %s639
      // Predicated region
      $region41: #{_lambda_.9} parent=31 // pred_check
        %p641 = pneg %p135
      $region42: #{_lambda_.9} parent=31 // pred_check_branch
        %643 = sbr.rel (%p641) target = $region44
      $region43: #{_lambda_.9} parent=31 // pred_region
        _
      $region44: #{_lambda_.9} parent=31 // pred_fallthru
        _
      // Predicated region
      $region45: #{_lambda_.9} parent=31 // pred_check
        %p644 = pneg %p135
      $region46: #{_lambda_.9} parent=31 // pred_check_branch
        %646 = sbr.rel (%p644) target = $region48
      $region47: #{_lambda_.9} parent=31 // pred_region
        %p647 = scmp.lt.s32.totalorder %s19, 0
        %s648 = scalar_select %p647, %s19, 0
        %p649 = scmp.lt.s32.totalorder %s20, 0
        %s650 = scalar_select %p649, %s20, 0
        %s651 = sadd.s32 %s650, %s648
        %s652 = smul.addr %s651, 8
        %s653 = scalar_lea.vmem %s3, %s652
      $region48: #{_lambda_.9} parent=31 // pred_fallthru
        _
    $region32: #{_lambda_.9} parent=5 // pred_fallthru
      _
    %p654 = scmp.le.s32.totalorder 2, %s9
    // Predicated region
    $region49: #{_lambda_.9} parent=5 // pred_check
      %p655 = pneg %p654
    $region50: #{_lambda_.9} parent=5 // pred_check_branch
      %657 = sbr.rel (%p655) target = $region52
    $region51: #{_lambda_.9} parent=5 // pred_region
      %s658 = ssub.s32 %s9, 2
    $region52: #{_lambda_.9} parent=5 // pred_fallthru
      _
  $region6: #{_lambda_.9} parent=0 // loop_footer
    %s13 = sadd.s32 1, %s9
  $region7: #{_lambda_.9} parent=0 // loop_footer_branch
    %8 = sbr.rel target = $region3
  $region8: #{_lambda_.9} parent=0 // loop_exit
    _

</llo_original>
